<compile_context>
chip_gen: v5e
topology: v5e:2x2
jax: 0.10.0
libtpu: 0.0.40
codegen_flags: <defaults>
</compile_context>

<pallas_src>
import jax
import jax.numpy as jnp
import numpy as np
from jax import lax
from jax.experimental import pallas as pl
from jax.experimental.pallas import tpu as pltpu  # noqa: F401  (TPU backend)

# ---- small shapes consistent with the module's forward() ----
B = 2            # batch
P = 4            # prompts per sample (text.shape[1] in the reference loop)
L = 8            # tokens per prompt
V = 128          # vocab size (stand-in)
D_TOK = 256      # token embedding width (stand-in for CLIP width)
D_TXT = 512      # text embedding dim (stand-in for open_clip embed dim)
N_PTS = 128      # points per cloud (stand-in for 8192)
C_XYZ = 3        # raw point channels (no lane padding any more)
H1 = 256         # point-MLP hidden width
PC_FEAT = 768    # pc_feat_dims (matches module __init__)
PC_EMB = 512     # pc_projection output dim (matches module __init__)
EPS = 1e-12      # normalization guard (matches F.normalize robustness)


# --------------------------- fused Pallas kernel -----------------------------

def _fused_kernel(ids_ref, emb_ref, wt_ref, pc_ref, w1_ref, b1_ref,
                  w2_ref, b2_ref, proj_ref, txt_out_ref, pc_out_ref):
    # ---------------- text branch ----------------
    # TODO(synk): the open_clip ViT-bigG-14 text transformer is replaced by a
    # compact token-embedding-mean + linear stand-in; the per-prompt
    # normalize -> mean-over-prompts -> renormalize matches the reference
    # forward() exactly.  The one-hot-sum trick is exact because the mean over
    # tokens commutes with the linear embedding (and V=128 is tiny); a real
    # vocab would switch to an SMEM-id-driven gather instead.
    ids = ids_ref[...]                                            # (B*P, L) int32
    iota = lax.broadcasted_iota(jnp.int32, (B * P, L, V), 2)
    counts = jnp.sum((ids[:, :, None] == iota).astype(jnp.float32), axis=1)  # (B*P, V)
    prompt = jnp.dot(counts.astype(jnp.bfloat16), emb_ref[...],
                     preferred_element_type=jnp.float32) * (1.0 / L)          # (B*P, D_TOK)
    feat = jnp.dot(prompt.astype(jnp.bfloat16), wt_ref[...],
                   preferred_element_type=jnp.float32)                        # (B*P, D_TXT)
    # per-prompt L2 normalize (rsqrt -> EUP; eps guards zero vectors)
    feat = feat * lax.rsqrt(jnp.sum(feat * feat, axis=-1, keepdims=True) + EPS)
    # mean over prompts per sample, renormalize
    m = jnp.mean(feat.reshape(B, P, D_TXT), axis=1)                # (B, D_TXT)
    m = m * lax.rsqrt(jnp.sum(m * m, axis=-1, keepdims=True) + EPS)
    txt_out_ref[...] = m

    # ---------------- point-cloud branch ----------------
    # TODO(synk): the PointTransformer backbone is replaced by a PointNet-style
    # shared MLP + global max-pool stand-in producing the 768-d pc_feat; the
    # pc_feat @ pc_projection matmul matches the reference exactly.
    x = pc_ref[...]                                               # (B*N_PTS, 3) f32
    w1 = w1_ref[...]                                              # (3, H1) f32
    # K=3 contraction as VPU broadcast FMAs (no padded MXU matmul).
    h = (x[:, 0:1] * w1[0:1, :]
         + x[:, 1:2] * w1[1:2, :]
         + x[:, 2:3] * w1[2:3, :]
         + b1_ref[...])
    h = jnp.maximum(h, 0.0)                                       # (B*N_PTS, H1) f32
    f = jnp.dot(h.astype(jnp.bfloat16), w2_ref[...],
                preferred_element_type=jnp.float32) + b2_ref[...]  # (B*N_PTS, PC_FEAT)
    pc_feat = jnp.max(f.reshape(B, N_PTS, PC_FEAT), axis=1)        # (B, PC_FEAT)
    pc_out_ref[...] = jnp.dot(pc_feat.astype(jnp.bfloat16), proj_ref[...],
                              preferred_element_type=jnp.float32)  # (B, PC_EMB)


# --------------------------- wrapper ------------------------------------------

def ulip2_forward(params, pc, text):
    """Mirrors ULIP2WithOpenCLIP.forward(pc, text) with image=None."""
    ids2d = text.reshape(B * P, L).astype(jnp.int32)               # glue: stack B into rows
    pc2d = pc.reshape(B * N_PTS, C_XYZ).astype(jnp.float32)        # glue: stack B into rows
    text_embed, pc_embed = pl.pallas_call(
        _fused_kernel,
        out_shape=(jax.ShapeDtypeStruct((B, D_TXT), jnp.float32),
                   jax.ShapeDtypeStruct((B, PC_EMB), jnp.float32)),
        # No grid: single invocation, every (tiny) operand fully resident in VMEM.
    )(ids2d,
      params["token_emb"].astype(jnp.bfloat16),
      params["w_text"].astype(jnp.bfloat16),
      pc2d,
      params["w1"],
      params["b1"],
      params["w2"].astype(jnp.bfloat16),
      params["b2"],
      params["pc_projection"].astype(jnp.bfloat16))
    return {
        "text_embed": text_embed,
        "pc_embed": pc_embed,
        "logit_scale": jnp.exp(params["logit_scale"]),
    }


# --------------------------- reference (plain JAX) ----------------------------

def reference_forward(params, pc, text):
    emb = params["token_emb"].astype(jnp.bfloat16)
    wt = params["w_text"].astype(jnp.bfloat16)
    w2 = params["w2"].astype(jnp.bfloat16)
    proj = params["pc_projection"].astype(jnp.bfloat16)

    onehot = jax.nn.one_hot(text, V, dtype=jnp.float32)            # (B, P, L, V)
    counts = onehot.sum(axis=2)                                    # (B, P, V)
    prompt = jnp.einsum("bpv,vd->bpd", counts.astype(jnp.bfloat16), emb,
                        preferred_element_type=jnp.float32) * (1.0 / L)
    feat = jnp.einsum("bpd,de->bpe", prompt.astype(jnp.bfloat16), wt,
                      preferred_element_type=jnp.float32)
    feat = feat * jax.lax.rsqrt((feat * feat).sum(-1, keepdims=True) + EPS)
    m = feat.mean(axis=1)
    m = m * jax.lax.rsqrt((m * m).sum(-1, keepdims=True) + EPS)

    h = jnp.maximum(jnp.einsum("bnc,ch->bnh", pc.astype(jnp.float32),
                               params["w1"]) + params["b1"], 0.0)
    f = jnp.einsum("bnh,hf->bnf", h.astype(jnp.bfloat16), w2,
                   preferred_element_type=jnp.float32) + params["b2"]
    pc_feat = f.max(axis=1)                                        # (B, PC_FEAT)
    pc_embed = jnp.dot(pc_feat.astype(jnp.bfloat16), proj,
                       preferred_element_type=jnp.float32)
    return m, pc_embed, jnp.exp(params["logit_scale"])


# --------------------------- params & main -------------------------------------

def init_params(key):
    ks = jax.random.split(key, 6)
    params = {
        "token_emb": jax.random.normal(ks[0], (V, D_TOK), jnp.float32) * 0.02,
        "w_text": jax.random.normal(ks[1], (D_TOK, D_TXT), jnp.float32) * D_TOK ** -0.5,
        "w1": jax.random.normal(ks[2], (C_XYZ, H1), jnp.float32) * 0.1,
        "b1": jax.random.normal(ks[3], (1, H1), jnp.float32) * 0.01,
        "w2": jax.random.normal(ks[4], (H1, PC_FEAT), jnp.float32) * H1 ** -0.5,
        "b2": jnp.zeros((1, PC_FEAT), jnp.float32),
        # nn.init.normal_(self.pc_projection, std=512 ** (-0.5))
        "pc_projection": jax.random.normal(ks[5], (PC_FEAT, PC_EMB), jnp.float32)
                         * PC_EMB ** -0.5,
        # self.logit_scale = nn.Parameter(torch.ones([]) * np.log(1 / 0.07))
        "logit_scale": jnp.asarray(np.log(1.0 / 0.07), jnp.float32),
    }
    return params


if __name__ == "__main__":
    key = jax.random.PRNGKey(0)
    kp, kt, kw = jax.random.split(key, 3)
    params = init_params(kw)

    pc = jax.random.normal(kp, (B, N_PTS, C_XYZ), jnp.float32)      # point clouds
    text = jax.random.randint(kt, (B, P, L), 0, V, jnp.int32)       # tokenized prompts

    fwd = jax.jit(ulip2_forward)
    out = jax.block_until_ready(fwd(params, pc, text))

    ref_txt, ref_pc, ref_ls = reference_forward(params, pc, text)
    np.testing.assert_allclose(np.asarray(out["text_embed"]), np.asarray(ref_txt),
                               rtol=2e-2, atol=5e-3)
    np.testing.assert_allclose(np.asarray(out["pc_embed"]), np.asarray(ref_pc),
                               rtol=2e-2, atol=2e-2)
    np.testing.assert_allclose(np.asarray(out["logit_scale"]), np.asarray(ref_ls),
                               rtol=1e-5)

    assert out["text_embed"].shape == (B, D_TXT)
    assert out["pc_embed"].shape == (B, PC_EMB)
    print("KERNEL_OK")
</pallas_src>

<mosaic_0001>
module attributes {stable_mosaic.version = 11 : i64} {
  func.func @_fused_kernel(%arg0: memref<8x8xi32, #tpu.memory_space<vmem>>, %arg1: memref<128x256xbf16, #tpu.memory_space<vmem>>, %arg2: memref<256x512xbf16, #tpu.memory_space<vmem>>, %arg3: memref<256x3xf32, #tpu.memory_space<vmem>>, %arg4: memref<3x256xf32, #tpu.memory_space<vmem>>, %arg5: memref<1x256xf32, #tpu.memory_space<vmem>>, %arg6: memref<256x768xbf16, #tpu.memory_space<vmem>>, %arg7: memref<1x768xf32, #tpu.memory_space<vmem>>, %arg8: memref<768x512xbf16, #tpu.memory_space<vmem>>, %arg9: memref<2x512xf32, #tpu.memory_space<vmem>>, %arg10: memref<2x512xf32, #tpu.memory_space<vmem>>) attributes {dimension_semantics = [], scalar_prefetch = 0 : i64, scratch_operands = 0 : i64, tpu.core_type = #tpu.core_type<tc>} {
    %c0 = arith.constant 0 : index
    %c0_0 = arith.constant 0 : index
    %0 = vector.load %arg0[%c0, %c0_0] : memref<8x8xi32, #tpu.memory_space<vmem>>, vector<8x8xi32>
    %1 = tpu.iota {dimensions = array<i32: 2>} : vector<8x8x128xi32>
    %2 = vector.shape_cast %0 : vector<8x8xi32> to vector<8x8x1xi32>
    %3 = vector.broadcast %2 : vector<8x8x1xi32> to vector<8x8x128xi32>
    %4 = arith.cmpi eq, %3, %1 : vector<8x8x128xi32>
    %5 = arith.extui %4 : vector<8x8x128xi1> to vector<8x8x128xi32>
    %6 = arith.sitofp %5 : vector<8x8x128xi32> to vector<8x8x128xf32>
    %cst = arith.constant dense<0.000000e+00> : vector<8x128xf32>
    %7 = vector.multi_reduction <add>, %6, %cst [1] : vector<8x8x128xf32> to vector<8x128xf32>
    %8 = arith.truncf %7 : vector<8x128xf32> to vector<8x128xbf16>
    %c0_1 = arith.constant 0 : index
    %c0_2 = arith.constant 0 : index
    %9 = vector.load %arg1[%c0_1, %c0_2] : memref<128x256xbf16, #tpu.memory_space<vmem>>, vector<128x256xbf16>
    %cst_3 = arith.constant dense<0.000000e+00> : vector<8x256xf32>
    %10 = tpu.matmul %8, %9, %cst_3 {dimension_numbers = #tpu.dot_dimension_numbers<[1], [0], [0], [1], [0, 0, 1, 1], [], []>} : vector<8x128xbf16>, vector<128x256xbf16>, vector<8x256xf32> -> vector<8x256xf32>
    %cst_4 = arith.constant 1.250000e-01 : f32
    %11 = vector.broadcast %cst_4 : f32 to vector<8x256xf32>
    %12 = arith.mulf %10, %11 : vector<8x256xf32>
    %13 = arith.truncf %12 : vector<8x256xf32> to vector<8x256xbf16>
    %c0_5 = arith.constant 0 : index
    %c0_6 = arith.constant 0 : index
    %14 = vector.load %arg2[%c0_5, %c0_6] : memref<256x512xbf16, #tpu.memory_space<vmem>>, vector<256x512xbf16>
    %cst_7 = arith.constant dense<0.000000e+00> : vector<8x512xf32>
    %15 = tpu.matmul %13, %14, %cst_7 {dimension_numbers = #tpu.dot_dimension_numbers<[1], [0], [0], [1], [0, 0, 1, 1], [], []>} : vector<8x256xbf16>, vector<256x512xbf16>, vector<8x512xf32> -> vector<8x512xf32>
    %16 = arith.mulf %15, %15 : vector<8x512xf32>
    %cst_8 = arith.constant dense<0.000000e+00> : vector<8xf32>
    %17 = vector.multi_reduction <add>, %16, %cst_8 [1] : vector<8x512xf32> to vector<8xf32>
    %18 = vector.shape_cast %17 : vector<8xf32> to vector<8x1xf32>
    %cst_9 = arith.constant 9.99999996E-13 : f32
    %19 = vector.broadcast %cst_9 : f32 to vector<8x1xf32>
    %20 = arith.addf %18, %19 : vector<8x1xf32>
    %21 = math.rsqrt %20 : vector<8x1xf32>
    %22 = vector.broadcast %21 : vector<8x1xf32> to vector<8x512xf32>
    %23 = arith.mulf %15, %22 : vector<8x512xf32>
    %24 = vector.shape_cast %23 : vector<8x512xf32> to vector<2x4x512xf32>
    %cst_10 = arith.constant dense<0.000000e+00> : vector<2x512xf32>
    %25 = vector.multi_reduction <add>, %24, %cst_10 [1] : vector<2x4x512xf32> to vector<2x512xf32>
    %cst_11 = arith.constant 4.000000e+00 : f32
    %26 = vector.broadcast %cst_11 : f32 to vector<2x512xf32>
    %27 = arith.divf %25, %26 : vector<2x512xf32>
    %28 = arith.mulf %27, %27 : vector<2x512xf32>
    %cst_12 = arith.constant dense<0.000000e+00> : vector<2xf32>
    %29 = vector.multi_reduction <add>, %28, %cst_12 [1] : vector<2x512xf32> to vector<2xf32>
    %30 = vector.shape_cast %29 : vector<2xf32> to vector<2x1xf32>
    %cst_13 = arith.constant 9.99999996E-13 : f32
    %31 = vector.broadcast %cst_13 : f32 to vector<2x1xf32>
    %32 = arith.addf %30, %31 : vector<2x1xf32>
    %33 = math.rsqrt %32 : vector<2x1xf32>
    %34 = vector.broadcast %33 : vector<2x1xf32> to vector<2x512xf32>
    %35 = arith.mulf %27, %34 : vector<2x512xf32>
    %c0_14 = arith.constant 0 : index
    %c0_15 = arith.constant 0 : index
    %36 = vector.load %arg9[%c0_14, %c0_15] : memref<2x512xf32, #tpu.memory_space<vmem>>, vector<2x512xf32>
    tpu.vector_store %arg9[%c0_14, %c0_15], %35 {strides = array<i32>} : memref<2x512xf32, #tpu.memory_space<vmem>>, vector<2x512xf32>,
    %c0_16 = arith.constant 0 : index
    %c0_17 = arith.constant 0 : index
    %37 = vector.load %arg3[%c0_16, %c0_17] : memref<256x3xf32, #tpu.memory_space<vmem>>, vector<256x3xf32>
    %c0_18 = arith.constant 0 : index
    %c0_19 = arith.constant 0 : index
    %38 = vector.load %arg4[%c0_18, %c0_19] : memref<3x256xf32, #tpu.memory_space<vmem>>, vector<3x256xf32>
    %39 = vector.extract_strided_slice %37 {offsets = [0, 0], sizes = [256, 1], strides = [1, 1]} : vector<256x3xf32> to vector<256x1xf32>
    %40 = vector.extract_strided_slice %38 {offsets = [0, 0], sizes = [1, 256], strides = [1, 1]} : vector<3x256xf32> to vector<1x256xf32>
    %41 = vector.broadcast %39 : vector<256x1xf32> to vector<256x256xf32>
    %42 = vector.broadcast %40 : vector<1x256xf32> to vector<256x256xf32>
    %43 = arith.mulf %41, %42 : vector<256x256xf32>
    %44 = vector.extract_strided_slice %37 {offsets = [0, 1], sizes = [256, 1], strides = [1, 1]} : vector<256x3xf32> to vector<256x1xf32>
    %45 = vector.extract_strided_slice %38 {offsets = [1, 0], sizes = [1, 256], strides = [1, 1]} : vector<3x256xf32> to vector<1x256xf32>
    %46 = vector.broadcast %44 : vector<256x1xf32> to vector<256x256xf32>
    %47 = vector.broadcast %45 : vector<1x256xf32> to vector<256x256xf32>
    %48 = arith.mulf %46, %47 : vector<256x256xf32>
    %49 = arith.addf %43, %48 : vector<256x256xf32>
    %50 = vector.extract_strided_slice %37 {offsets = [0, 2], sizes = [256, 1], strides = [1, 1]} : vector<256x3xf32> to vector<256x1xf32>
    %51 = vector.extract_strided_slice %38 {offsets = [2, 0], sizes = [1, 256], strides = [1, 1]} : vector<3x256xf32> to vector<1x256xf32>
    %52 = vector.broadcast %50 : vector<256x1xf32> to vector<256x256xf32>
    %53 = vector.broadcast %51 : vector<1x256xf32> to vector<256x256xf32>
    %54 = arith.mulf %52, %53 : vector<256x256xf32>
    %55 = arith.addf %49, %54 : vector<256x256xf32>
    %c0_20 = arith.constant 0 : index
    %c0_21 = arith.constant 0 : index
    %56 = vector.load %arg5[%c0_20, %c0_21] : memref<1x256xf32, #tpu.memory_space<vmem>>, vector<1x256xf32>
    %57 = vector.broadcast %56 : vector<1x256xf32> to vector<256x256xf32>
    %58 = arith.addf %55, %57 : vector<256x256xf32>
    %cst_22 = arith.constant 0.000000e+00 : f32
    %59 = vector.broadcast %cst_22 : f32 to vector<256x256xf32>
    %60 = arith.maximumf %58, %59 : vector<256x256xf32>
    %61 = arith.truncf %60 : vector<256x256xf32> to vector<256x256xbf16>
    %c0_23 = arith.constant 0 : index
    %c0_24 = arith.constant 0 : index
    %62 = vector.load %arg6[%c0_23, %c0_24] : memref<256x768xbf16, #tpu.memory_space<vmem>>, vector<256x768xbf16>
    %cst_25 = arith.constant dense<0.000000e+00> : vector<256x768xf32>
    %63 = tpu.matmul %61, %62, %cst_25 {dimension_numbers = #tpu.dot_dimension_numbers<[1], [0], [0], [1], [0, 0, 1, 1], [], []>} : vector<256x256xbf16>, vector<256x768xbf16>, vector<256x768xf32> -> vector<256x768xf32>
    %c0_26 = arith.constant 0 : index
    %c0_27 = arith.constant 0 : index
    %64 = vector.load %arg7[%c0_26, %c0_27] : memref<1x768xf32, #tpu.memory_space<vmem>>, vector<1x768xf32>
    %65 = vector.broadcast %64 : vector<1x768xf32> to vector<256x768xf32>
    %66 = arith.addf %63, %65 : vector<256x768xf32>
    %67 = vector.shape_cast %66 : vector<256x768xf32> to vector<2x128x768xf32>
    %cst_28 = arith.constant dense<0xFF800000> : vector<2x768xf32>
    %68 = vector.multi_reduction <maximumf>, %67, %cst_28 [1] : vector<2x128x768xf32> to vector<2x768xf32>
    %69 = arith.truncf %68 : vector<2x768xf32> to vector<2x768xbf16>
    %c0_29 = arith.constant 0 : index
    %c0_30 = arith.constant 0 : index
    %70 = vector.load %arg8[%c0_29, %c0_30] : memref<768x512xbf16, #tpu.memory_space<vmem>>, vector<768x512xbf16>
    %cst_31 = arith.constant dense<0.000000e+00> : vector<2x512xf32>
    %71 = tpu.matmul %69, %70, %cst_31 {dimension_numbers = #tpu.dot_dimension_numbers<[1], [0], [0], [1], [0, 0, 1, 1], [], []>} : vector<2x768xbf16>, vector<768x512xbf16>, vector<2x512xf32> -> vector<2x512xf32>
    %c0_32 = arith.constant 0 : index
    %c0_33 = arith.constant 0 : index
    %72 = vector.load %arg10[%c0_32, %c0_33] : memref<2x512xf32, #tpu.memory_space<vmem>>, vector<2x512xf32>
    tpu.vector_store %arg10[%c0_32, %c0_33], %71 {strides = array<i32>} : memref<2x512xf32, #tpu.memory_space<vmem>>, vector<2x512xf32>,
    return
  }
}

</mosaic_0001>

<llo_original>
// kernel: ulip2_forward.1
$region0: #{ulip2_forward.1}
  #allocation0 [shape = 'u32[]', space=smem, size = 0x4, offset = 0x4, fixed_abs, tag = 'smem constant byte address 0x4 - core index']
  #allocation1 [shape = 'u32[72,128]{1,0:T(1,128)}', space=vmem, size = 0x9000, scoped, tag = 'internal scratch']
  %s0 = inlined_call_operand.vmem [shape: s32[8,8], index: 0, kind: input, shape index: {}]
  %s1 = inlined_call_operand.vmem [shape: bf16[128,256], index: 1, kind: input, shape index: {}]
  %s2 = inlined_call_operand.vmem [shape: bf16[256,512], index: 2, kind: input, shape index: {}]
  %s3 = inlined_call_operand.vmem [shape: f32[256,3], index: 3, kind: input, shape index: {}]
  %s4 = inlined_call_operand.vmem [shape: f32[3,256], index: 4, kind: input, shape index: {}]
  %s5 = inlined_call_operand.vmem [shape: f32[1,256], index: 5, kind: input, shape index: {}]
  %s6 = inlined_call_operand.vmem [shape: bf16[256,768], index: 6, kind: input, shape index: {}]
  %s7 = inlined_call_operand.vmem [shape: f32[1,768], index: 7, kind: input, shape index: {}]
  %s8 = inlined_call_operand.vmem [shape: bf16[768,512], index: 8, kind: input, shape index: {}]
  %s9 = inlined_call_operand.hbm [shape: f32[2,512], index: 9, kind: output, shape index: {0}]
  %s10 = inlined_call_operand.hbm [shape: f32[2,512], index: 10, kind: output, shape index: {1}]
  %11 = xla_tuple %s9, %s10
  %s12 = sld [smem:[#allocation0]]
  $region54: #{ulip2_forward.1} parent=0
    _
  %s14 = ssub.s32 1, %s12
  %s15 = scalar_select 0, %s14, %s12
  $region1: #{ulip2_forward.1} parent=0
    #allocation2 [shape = 'u8[4096]{0}', space=vmem, size = 0x1000, scoped, tag = 'output window, operand 0, single buffered']
    #allocation3 [shape = 's32[1]{0}', space=sflag, size = 0x4, scoped, tag = 'scoped memory for ulip2_forward.1']
    #allocation4 [shape = 'u8[4096]{0}', space=vmem, size = 0x1000, scoped, tag = 'output window, operand 1, single buffered']
    #allocation5 [shape = 's32[1]{0}', space=sflag, size = 0x4, scoped, tag = 'scoped memory for ulip2_forward.1']
    %16 = vsyncpa [#allocation3], 0
    %17 = vsyncpa [#allocation5], 0
    // Predicated region
    $region2: #{ulip2_forward.1} parent=1 // pred_check
      _
    $region3: #{ulip2_forward.1} parent=1 // pred_check_branch
      %19 = sbr.rel (0) target = $region5
    $region4: #{ulip2_forward.1} parent=1 // pred_region
      _
    $region5: #{ulip2_forward.1} parent=1 // pred_fallthru
      _
    // Predicated region
    $region6: #{ulip2_forward.1} parent=1 // pred_check
      _
    $region7: #{ulip2_forward.1} parent=1 // pred_check_branch
      %21 = sbr.rel (0) target = $region9
    $region8: #{ulip2_forward.1} parent=1 // pred_region
      _
    $region9: #{ulip2_forward.1} parent=1 // pred_fallthru
      _
    // Predicated region
    $region10: #{ulip2_forward.1} parent=1 // pred_check
      _
    $region11: #{ulip2_forward.1} parent=1 // pred_check_branch
      %23 = sbr.rel (0) target = $region13
    $region12: #{ulip2_forward.1} parent=1 // pred_region
      _
    $region13: #{ulip2_forward.1} parent=1 // pred_fallthru
      _
    // Predicated region
    $region14: #{ulip2_forward.1} parent=1 // pred_check
      _
    $region15: #{ulip2_forward.1} parent=1 // pred_check_branch
      %25 = sbr.rel (0) target = $region17
    $region16: #{ulip2_forward.1} parent=1 // pred_region
      _
    $region17: #{ulip2_forward.1} parent=1 // pred_fallthru
      _
    // Predicated region
    $region18: #{ulip2_forward.1} parent=1 // pred_check
      _
    $region19: #{ulip2_forward.1} parent=1 // pred_check_branch
      %27 = sbr.rel (0) target = $region21
    $region20: #{ulip2_forward.1} parent=1 // pred_region
      _
    $region21: #{ulip2_forward.1} parent=1 // pred_fallthru
      _
    // Predicated region
    $region22: #{ulip2_forward.1} parent=1 // pred_check
      _
    $region23: #{ulip2_forward.1} parent=1 // pred_check_branch
      %29 = sbr.rel (0) target = $region25
    $region24: #{ulip2_forward.1} parent=1 // pred_region
      _
    $region25: #{ulip2_forward.1} parent=1 // pred_fallthru
      _
    // Predicated region
    $region26: #{ulip2_forward.1} parent=1 // pred_check
      _
    $region27: #{ulip2_forward.1} parent=1 // pred_check_branch
      %31 = sbr.rel (0) target = $region29
    $region28: #{ulip2_forward.1} parent=1 // pred_region
      _
    $region29: #{ulip2_forward.1} parent=1 // pred_fallthru
      _
    // Predicated region
    $region30: #{ulip2_forward.1} parent=1 // pred_check
      _
    $region31: #{ulip2_forward.1} parent=1 // pred_check_branch
      %33 = sbr.rel (0) target = $region33
    $region32: #{ulip2_forward.1} parent=1 // pred_region
      _
    $region33: #{ulip2_forward.1} parent=1 // pred_fallthru
      _
    // Predicated region
    $region34: #{ulip2_forward.1} parent=1 // pred_check
      _
    $region35: #{ulip2_forward.1} parent=1 // pred_check_branch
      %35 = sbr.rel (0) target = $region37
    $region36: #{ulip2_forward.1} parent=1 // pred_region
      _
    $region37: #{ulip2_forward.1} parent=1 // pred_fallthru
      _
    %v36 = vld [vmem:[%s0] sm:$0xff]
    %v37 = vlaneseq
    %v38 = vand.u32 %v37, 127
    %v39 = vperm.slane %v36, 0
    %v40 = vlaneseq
    %v41 = vshrl.u32 %v40, 7
    %43 = vset.pattern.permute.xlu0 %v41
    %44 = vperm.xlu0 %43, %v39
    %v45 = vpop.permute.xlu0 %44
    %v46 = vperm.slane %v36, 1
    %v47 = vlaneseq
    %v48 = vshrl.u32 %v47, 7
    %50 = vset.pattern.permute.xlu0 %v48
    %51 = vperm.xlu0 %50, %v46
    %v52 = vpop.permute.xlu0 %51
    %v53 = vperm.slane %v36, 2
    %v54 = vlaneseq
    %v55 = vshrl.u32 %v54, 7
    %57 = vset.pattern.permute.xlu0 %v55
    %58 = vperm.xlu0 %57, %v53
    %v59 = vpop.permute.xlu0 %58
    %v60 = vperm.slane %v36, 3
    %v61 = vlaneseq
    %v62 = vshrl.u32 %v61, 7
    %64 = vset.pattern.permute.xlu0 %v62
    %65 = vperm.xlu0 %64, %v60
    %v66 = vpop.permute.xlu0 %65
    %v67 = vperm.slane %v36, 4
    %v68 = vlaneseq
    %v69 = vshrl.u32 %v68, 7
    %71 = vset.pattern.permute.xlu0 %v69
    %72 = vperm.xlu0 %71, %v67
    %v73 = vpop.permute.xlu0 %72
    %v74 = vperm.slane %v36, 5
    %v75 = vlaneseq
    %v76 = vshrl.u32 %v75, 7
    %78 = vset.pattern.permute.xlu0 %v76
    %79 = vperm.xlu0 %78, %v74
    %v80 = vpop.permute.xlu0 %79
    %v81 = vperm.slane %v36, 6
    %v82 = vlaneseq
    %v83 = vshrl.u32 %v82, 7
    %85 = vset.pattern.permute.xlu0 %v83
    %86 = vperm.xlu0 %85, %v81
    %v87 = vpop.permute.xlu0 %86
    %v88 = vperm.slane %v36, 7
    %v89 = vlaneseq
    %v90 = vshrl.u32 %v89, 7
    %92 = vset.pattern.permute.xlu0 %v90
    %93 = vperm.xlu0 %92, %v88
    %v94 = vpop.permute.xlu0 %93
    %vm95 = vcmp.eq.s32.totalorder %v45, %v38
    %vm96 = vcmp.eq.s32.totalorder %v52, %v38
    %vm97 = vcmp.eq.s32.totalorder %v59, %v38
    %vm98 = vcmp.eq.s32.totalorder %v66, %v38
    %vm99 = vcmp.eq.s32.totalorder %v73, %v38
    %vm100 = vcmp.eq.s32.totalorder %v80, %v38
    %vm101 = vcmp.eq.s32.totalorder %v87, %v38
    %vm102 = vcmp.eq.s32.totalorder %v94, %v38
    %v103 = vsel %vm95, 1, 0
    %v104 = vsel %vm96, 1, 0
    %v105 = vsel %vm97, 1, 0
    %v106 = vsel %vm98, 1, 0
    %v107 = vsel %vm99, 1, 0
    %v108 = vsel %vm100, 1, 0
    %v109 = vsel %vm101, 1, 0
    %v110 = vsel %vm102, 1, 0
    %v111 = vcvt.s32.f32 %v103
    %v112 = vcvt.s32.f32 %v104
    %v113 = vcvt.s32.f32 %v105
    %v114 = vcvt.s32.f32 %v106
    %v115 = vcvt.s32.f32 %v107
    %v116 = vcvt.s32.f32 %v108
    %v117 = vcvt.s32.f32 %v109
    %v118 = vcvt.s32.f32 %v110
    %v119 = vrot.slane %v111, 4
    %v120 = vadd.f32 %v111, %v119
    %v121 = vrot.slane %v120, 2
    %v122 = vadd.f32 %v120, %v121
    %v123 = vrot.slane %v122, 1
    %v124 = vadd.f32 %v122, %v123
    %v125 = vrot.slane %v112, 4
    %v126 = vadd.f32 %v112, %v125
    %v127 = vrot.slane %v126, 2
    %v128 = vadd.f32 %v126, %v127
    %v129 = vrot.slane %v128, 1
    %v130 = vadd.f32 %v128, %v129
    %v131 = vrot.slane %v113, 4
    %v132 = vadd.f32 %v113, %v131
    %v133 = vrot.slane %v132, 2
    %v134 = vadd.f32 %v132, %v133
    %v135 = vrot.slane %v134, 1
    %v136 = vadd.f32 %v134, %v135
    %v137 = vrot.slane %v114, 4
    %v138 = vadd.f32 %v114, %v137
    %v139 = vrot.slane %v138, 2
    %v140 = vadd.f32 %v138, %v139
    %v141 = vrot.slane %v140, 1
    %v142 = vadd.f32 %v140, %v141
    %v143 = vrot.slane %v115, 4
    %v144 = vadd.f32 %v115, %v143
    %v145 = vrot.slane %v144, 2
    %v146 = vadd.f32 %v144, %v145
    %v147 = vrot.slane %v146, 1
    %v148 = vadd.f32 %v146, %v147
    %v149 = vrot.slane %v116, 4
    %v150 = vadd.f32 %v116, %v149
    %v151 = vrot.slane %v150, 2
    %v152 = vadd.f32 %v150, %v151
    %v153 = vrot.slane %v152, 1
    %v154 = vadd.f32 %v152, %v153
    %v155 = vrot.slane %v117, 4
    %v156 = vadd.f32 %v117, %v155
    %v157 = vrot.slane %v156, 2
    %v158 = vadd.f32 %v156, %v157
    %v159 = vrot.slane %v158, 1
    %v160 = vadd.f32 %v158, %v159
    %v161 = vrot.slane %v118, 4
    %v162 = vadd.f32 %v118, %v161
    %v163 = vrot.slane %v162, 2
    %v164 = vadd.f32 %v162, %v163
    %v165 = vrot.slane %v164, 1
    %v166 = vadd.f32 %v164, %v165
    %v167 = vpack.c.bf16 %v124, %v124
    %v168 = vpack.c.bf16 %v130, %v130
    %v169 = vpack.c.bf16 %v136, %v136
    %v170 = vpack.c.bf16 %v142, %v142
    %v171 = vpack.c.bf16 %v148, %v148
    %v172 = vpack.c.bf16 %v154, %v154
    %v173 = vpack.c.bf16 %v160, %v160
    %v174 = vpack.c.bf16 %v166, %v166
    %v175 = vld [vmem:[%s1] sm:$0xff]
    %v176 = vld [vmem:[%s1 + $0x8] sm:$0xff]
    %v177 = vld [vmem:[%s1 + $0x10] sm:$0xff]
    %v178 = vld [vmem:[%s1 + $0x18] sm:$0xff]
    %v179 = vld [vmem:[%s1 + $0x20] sm:$0xff]
    %v180 = vld [vmem:[%s1 + $0x28] sm:$0xff]
    %v181 = vld [vmem:[%s1 + $0x30] sm:$0xff]
    %v182 = vld [vmem:[%s1 + $0x38] sm:$0xff]
    %v183 = vld [vmem:[%s1 + $0x40] sm:$0xff]
    %v184 = vld [vmem:[%s1 + $0x48] sm:$0xff]
    %v185 = vld [vmem:[%s1 + $0x50] sm:$0xff]
    %v186 = vld [vmem:[%s1 + $0x58] sm:$0xff]
    %v187 = vld [vmem:[%s1 + $0x60] sm:$0xff]
    %v188 = vld [vmem:[%s1 + $0x68] sm:$0xff]
    %v189 = vld [vmem:[%s1 + $0x70] sm:$0xff]
    %v190 = vld [vmem:[%s1 + $0x78] sm:$0xff]
    %v199 = vunpack.c.l.b16 %v167
    %v200 = vunpack.c.l.b16 %v168
    %v201 = vunpack.c.l.b16 %v169
    %v202 = vunpack.c.l.b16 %v170
    %v203 = vunpack.c.l.b16 %v171
    %v204 = vunpack.c.l.b16 %v172
    %v205 = vunpack.c.l.b16 %v173
    %v206 = vunpack.c.l.b16 %v174
    %vm207 = vcmask 1041409
    %v208 = vsel %vm207, %v200, %v199
    %vm209 = vcmask 1042434
    %v210 = vsel %vm209, %v201, %v208
    %vm211 = vcmask 1043459
    %v212 = vsel %vm211, %v202, %v210
    %vm213 = vcmask 1044484
    %v214 = vsel %vm213, %v203, %v212
    %vm215 = vcmask 1045509
    %v216 = vsel %vm215, %v204, %v214
    %vm217 = vcmask 1046534
    %v218 = vsel %vm217, %v205, %v216
    %vm219 = vcmask 1047559
    %v220 = vsel %vm219, %v206, %v218
    %v221 = vpack.c.b16 %v220, %v220
    %v239 = vunpack.c.l.b16 %v175
    %v240 = vunpack.c.h.b16 %v175
    %v241 = vunpack.c.l.b16 %v176
    %v242 = vunpack.c.h.b16 %v176
    %v243 = vunpack.c.l.b16 %v177
    %v244 = vunpack.c.h.b16 %v177
    %v245 = vunpack.c.l.b16 %v178
    %v246 = vunpack.c.h.b16 %v178
    %v247 = vunpack.c.l.b16 %v179
    %v248 = vunpack.c.h.b16 %v179
    %v249 = vunpack.c.l.b16 %v180
    %v250 = vunpack.c.h.b16 %v180
    %v251 = vunpack.c.l.b16 %v181
    %v252 = vunpack.c.h.b16 %v181
    %v253 = vunpack.c.l.b16 %v182
    %v254 = vunpack.c.h.b16 %v182
    %v255 = vunpack.c.l.b16 %v183
    %v256 = vunpack.c.h.b16 %v183
    %v257 = vunpack.c.l.b16 %v184
    %v258 = vunpack.c.h.b16 %v184
    %v259 = vunpack.c.l.b16 %v185
    %v260 = vunpack.c.h.b16 %v185
    %v261 = vunpack.c.l.b16 %v186
    %v262 = vunpack.c.h.b16 %v186
    %v263 = vunpack.c.l.b16 %v187
    %v264 = vunpack.c.h.b16 %v187
    %v265 = vunpack.c.l.b16 %v188
    %v266 = vunpack.c.h.b16 %v188
    %v267 = vunpack.c.l.b16 %v189
    %v268 = vunpack.c.h.b16 %v189
    %v269 = vunpack.c.l.b16 %v190
    %v270 = vunpack.c.h.b16 %v190
    %v271 = vpack.c.b16 %v241, %v239
    %v272 = vpack.c.b16 %v242, %v240
    %v273 = vpack.c.b16 %v245, %v243
    %v274 = vpack.c.b16 %v246, %v244
    %v275 = vpack.c.b16 %v249, %v247
    %v276 = vpack.c.b16 %v250, %v248
    %v277 = vpack.c.b16 %v253, %v251
    %v278 = vpack.c.b16 %v254, %v252
    %v279 = vpack.c.b16 %v257, %v255
    %v280 = vpack.c.b16 %v258, %v256
    %v281 = vpack.c.b16 %v261, %v259
    %v282 = vpack.c.b16 %v262, %v260
    %v283 = vpack.c.b16 %v265, %v263
    %v284 = vpack.c.b16 %v266, %v264
    %v285 = vpack.c.b16 %v269, %v267
    %v286 = vpack.c.b16 %v270, %v268
    %303 = vmatpush.bf16.msra.mxu0 %v285
    %304 = vmatpush.bf16.msra.mxu0 %v283
    %305 = vmatpush.bf16.msra.mxu0 %v281
    %306 = vmatpush.bf16.msra.mxu0 %v279
    %307 = vmatpush.bf16.msra.mxu0 %v277
    %308 = vmatpush.bf16.msra.mxu0 %v275
    %309 = vmatpush.bf16.msra.mxu0 %v273
    %310 = vmatpush.bf16.msra.mxu0 %v271
    %311 = vmatmul.bf16.gmra.mxu0 %v221
    %v312 = vpop.f32.mrf.mxu0
    %v313 = vadd.f32 0.0, %v312
    %v314 = vpop.f32.mrf.mxu0
    %315 = vdwg.mxu0
    %316 = vmatpush.bf16.msra.mxu0 %v286
    %317 = vmatpush.bf16.msra.mxu0 %v284
    %318 = vmatpush.bf16.msra.mxu0 %v282
    %319 = vmatpush.bf16.msra.mxu0 %v280
    %320 = vmatpush.bf16.msra.mxu0 %v278
    %321 = vmatpush.bf16.msra.mxu0 %v276
    %322 = vmatpush.bf16.msra.mxu0 %v274
    %323 = vmatpush.bf16.msra.mxu0 %v272
    %324 = vmatmul.bf16.gmra.mxu0 %v221
    %v325 = vpop.f32.mrf.mxu0
    %v326 = vadd.f32 0.0, %v325
    %v327 = vpop.f32.mrf.mxu0
    %328 = vdwg.mxu0
    %v329 = vmul.f32 %v313, 0.125
    %v330 = vmul.f32 %v326, 0.125
    %v331 = vpack.c.bf16 %v329, %v329
    %v332 = vpack.c.bf16 %v330, %v330
    %v333 = vld [vmem:[%s2] sm:$0xff]
    %v334 = vld [vmem:[%s2 + $0x8] sm:$0xff]
    %v335 = vld [vmem:[%s2 + $0x10] sm:$0xff]
    %v336 = vld [vmem:[%s2 + $0x18] sm:$0xff]
    %v337 = vld [vmem:[%s2 + $0x20] sm:$0xff]
    %v338 = vld [vmem:[%s2 + $0x28] sm:$0xff]
    %v339 = vld [vmem:[%s2 + $0x30] sm:$0xff]
    %v340 = vld [vmem:[%s2 + $0x38] sm:$0xff]
    %v341 = vld [vmem:[%s2 + $0x40] sm:$0xff]
    %v342 = vld [vmem:[%s2 + $0x48] sm:$0xff]
    %v343 = vld [vmem:[%s2 + $0x50] sm:$0xff]
    %v344 = vld [vmem:[%s2 + $0x58] sm:$0xff]
    %v345 = vld [vmem:[%s2 + $0x60] sm:$0xff]
    %v346 = vld [vmem:[%s2 + $0x68] sm:$0xff]
    %v347 = vld [vmem:[%s2 + $0x70] sm:$0xff]
    %v348 = vld [vmem:[%s2 + $0x78] sm:$0xff]
    %v349 = vld [vmem:[%s2 + $0x80] sm:$0xff]
    %v350 = vld [vmem:[%s2 + $0x88] sm:$0xff]
    %v351 = vld [vmem:[%s2 + $0x90] sm:$0xff]
    %v352 = vld [vmem:[%s2 + $0x98] sm:$0xff]
    %v353 = vld [vmem:[%s2 + $0xa0] sm:$0xff]
    %v354 = vld [vmem:[%s2 + $0xa8] sm:$0xff]
    %v355 = vld [vmem:[%s2 + $0xb0] sm:$0xff]
    %v356 = vld [vmem:[%s2 + $0xb8] sm:$0xff]
    %v357 = vld [vmem:[%s2 + $0xc0] sm:$0xff]
    %v358 = vld [vmem:[%s2 + $0xc8] sm:$0xff]
    %v359 = vld [vmem:[%s2 + $0xd0] sm:$0xff]
    %v360 = vld [vmem:[%s2 + $0xd8] sm:$0xff]
    %v361 = vld [vmem:[%s2 + $0xe0] sm:$0xff]
    %v362 = vld [vmem:[%s2 + $0xe8] sm:$0xff]
    %v363 = vld [vmem:[%s2 + $0xf0] sm:$0xff]
    %v364 = vld [vmem:[%s2 + $0xf8] sm:$0xff]
    %v365 = vld [vmem:[%s2 + $0x100] sm:$0xff]
    %v366 = vld [vmem:[%s2 + $0x108] sm:$0xff]
    %v367 = vld [vmem:[%s2 + $0x110] sm:$0xff]
    %v368 = vld [vmem:[%s2 + $0x118] sm:$0xff]
    %v369 = vld [vmem:[%s2 + $0x120] sm:$0xff]
    %v370 = vld [vmem:[%s2 + $0x128] sm:$0xff]
    %v371 = vld [vmem:[%s2 + $0x130] sm:$0xff]
    %v372 = vld [vmem:[%s2 + $0x138] sm:$0xff]
    %v373 = vld [vmem:[%s2 + $0x140] sm:$0xff]
    %v374 = vld [vmem:[%s2 + $0x148] sm:$0xff]
    %v375 = vld [vmem:[%s2 + $0x150] sm:$0xff]
    %v376 = vld [vmem:[%s2 + $0x158] sm:$0xff]
    %v377 = vld [vmem:[%s2 + $0x160] sm:$0xff]
    %v378 = vld [vmem:[%s2 + $0x168] sm:$0xff]
    %v379 = vld [vmem:[%s2 + $0x170] sm:$0xff]
    %v380 = vld [vmem:[%s2 + $0x178] sm:$0xff]
    %v381 = vld [vmem:[%s2 + $0x180] sm:$0xff]
    %v382 = vld [vmem:[%s2 + $0x188] sm:$0xff]
    %v383 = vld [vmem:[%s2 + $0x190] sm:$0xff]
    %v384 = vld [vmem:[%s2 + $0x198] sm:$0xff]
    %v385 = vld [vmem:[%s2 + $0x1a0] sm:$0xff]
    %v386 = vld [vmem:[%s2 + $0x1a8] sm:$0xff]
    %v387 = vld [vmem:[%s2 + $0x1b0] sm:$0xff]
    %v388 = vld [vmem:[%s2 + $0x1b8] sm:$0xff]
    %v389 = vld [vmem:[%s2 + $0x1c0] sm:$0xff]
    %v390 = vld [vmem:[%s2 + $0x1c8] sm:$0xff]
    %v391 = vld [vmem:[%s2 + $0x1d0] sm:$0xff]
    %v392 = vld [vmem:[%s2 + $0x1d8] sm:$0xff]
    %v393 = vld [vmem:[%s2 + $0x1e0] sm:$0xff]
    %v394 = vld [vmem:[%s2 + $0x1e8] sm:$0xff]
    %v395 = vld [vmem:[%s2 + $0x1f0] sm:$0xff]
    %v396 = vld [vmem:[%s2 + $0x1f8] sm:$0xff]
    %v461 = vunpack.c.l.b16 %v333
    %v462 = vunpack.c.h.b16 %v333
    %v463 = vunpack.c.l.b16 %v334
    %v464 = vunpack.c.h.b16 %v334
    %v465 = vunpack.c.l.b16 %v335
    %v466 = vunpack.c.h.b16 %v335
    %v467 = vunpack.c.l.b16 %v336
    %v468 = vunpack.c.h.b16 %v336
    %v469 = vunpack.c.l.b16 %v337
    %v470 = vunpack.c.h.b16 %v337
    %v471 = vunpack.c.l.b16 %v338
    %v472 = vunpack.c.h.b16 %v338
    %v473 = vunpack.c.l.b16 %v339
    %v474 = vunpack.c.h.b16 %v339
    %v475 = vunpack.c.l.b16 %v340
    %v476 = vunpack.c.h.b16 %v340
    %v477 = vunpack.c.l.b16 %v341
    %v478 = vunpack.c.h.b16 %v341
    %v479 = vunpack.c.l.b16 %v342
    %v480 = vunpack.c.h.b16 %v342
    %v481 = vunpack.c.l.b16 %v343
    %v482 = vunpack.c.h.b16 %v343
    %v483 = vunpack.c.l.b16 %v344
    %v484 = vunpack.c.h.b16 %v344
    %v485 = vunpack.c.l.b16 %v345
    %v486 = vunpack.c.h.b16 %v345
    %v487 = vunpack.c.l.b16 %v346
    %v488 = vunpack.c.h.b16 %v346
    %v489 = vunpack.c.l.b16 %v347
    %v490 = vunpack.c.h.b16 %v347
    %v491 = vunpack.c.l.b16 %v348
    %v492 = vunpack.c.h.b16 %v348
    %v493 = vunpack.c.l.b16 %v349
    %v494 = vunpack.c.h.b16 %v349
    %v495 = vunpack.c.l.b16 %v350
    %v496 = vunpack.c.h.b16 %v350
    %v497 = vunpack.c.l.b16 %v351
    %v498 = vunpack.c.h.b16 %v351
    %v499 = vunpack.c.l.b16 %v352
    %v500 = vunpack.c.h.b16 %v352
    %v501 = vunpack.c.l.b16 %v353
    %v502 = vunpack.c.h.b16 %v353
    %v503 = vunpack.c.l.b16 %v354
    %v504 = vunpack.c.h.b16 %v354
    %v505 = vunpack.c.l.b16 %v355
    %v506 = vunpack.c.h.b16 %v355
    %v507 = vunpack.c.l.b16 %v356
    %v508 = vunpack.c.h.b16 %v356
    %v509 = vunpack.c.l.b16 %v357
    %v510 = vunpack.c.h.b16 %v357
    %v511 = vunpack.c.l.b16 %v358
    %v512 = vunpack.c.h.b16 %v358
    %v513 = vunpack.c.l.b16 %v359
    %v514 = vunpack.c.h.b16 %v359
    %v515 = vunpack.c.l.b16 %v360
    %v516 = vunpack.c.h.b16 %v360
    %v517 = vunpack.c.l.b16 %v361
    %v518 = vunpack.c.h.b16 %v361
    %v519 = vunpack.c.l.b16 %v362
    %v520 = vunpack.c.h.b16 %v362
    %v521 = vunpack.c.l.b16 %v363
    %v522 = vunpack.c.h.b16 %v363
    %v523 = vunpack.c.l.b16 %v364
    %v524 = vunpack.c.h.b16 %v364
    %v525 = vunpack.c.l.b16 %v365
    %v526 = vunpack.c.h.b16 %v365
    %v527 = vunpack.c.l.b16 %v366
    %v528 = vunpack.c.h.b16 %v366
    %v529 = vunpack.c.l.b16 %v367
    %v530 = vunpack.c.h.b16 %v367
    %v531 = vunpack.c.l.b16 %v368
    %v532 = vunpack.c.h.b16 %v368
    %v533 = vunpack.c.l.b16 %v369
    %v534 = vunpack.c.h.b16 %v369
    %v535 = vunpack.c.l.b16 %v370
    %v536 = vunpack.c.h.b16 %v370
    %v537 = vunpack.c.l.b16 %v371
    %v538 = vunpack.c.h.b16 %v371
    %v539 = vunpack.c.l.b16 %v372
    %v540 = vunpack.c.h.b16 %v372
    %v541 = vunpack.c.l.b16 %v373
    %v542 = vunpack.c.h.b16 %v373
    %v543 = vunpack.c.l.b16 %v374
    %v544 = vunpack.c.h.b16 %v374
    %v545 = vunpack.c.l.b16 %v375
    %v546 = vunpack.c.h.b16 %v375
    %v547 = vunpack.c.l.b16 %v376
    %v548 = vunpack.c.h.b16 %v376
    %v549 = vunpack.c.l.b16 %v377
    %v550 = vunpack.c.h.b16 %v377
    %v551 = vunpack.c.l.b16 %v378
    %v552 = vunpack.c.h.b16 %v378
    %v553 = vunpack.c.l.b16 %v379
    %v554 = vunpack.c.h.b16 %v379
    %v555 = vunpack.c.l.b16 %v380
    %v556 = vunpack.c.h.b16 %v380
    %v557 = vunpack.c.l.b16 %v381
    %v558 = vunpack.c.h.b16 %v381
    %v559 = vunpack.c.l.b16 %v382
    %v560 = vunpack.c.h.b16 %v382
    %v561 = vunpack.c.l.b16 %v383
    %v562 = vunpack.c.h.b16 %v383
    %v563 = vunpack.c.l.b16 %v384
    %v564 = vunpack.c.h.b16 %v384
    %v565 = vunpack.c.l.b16 %v385
    %v566 = vunpack.c.h.b16 %v385
    %v567 = vunpack.c.l.b16 %v386
    %v568 = vunpack.c.h.b16 %v386
    %v569 = vunpack.c.l.b16 %v387
    %v570 = vunpack.c.h.b16 %v387
    %v571 = vunpack.c.l.b16 %v388
    %v572 = vunpack.c.h.b16 %v388
    %v573 = vunpack.c.l.b16 %v389
    %v574 = vunpack.c.h.b16 %v389
    %v575 = vunpack.c.l.b16 %v390
    %v576 = vunpack.c.h.b16 %v390
    %v577 = vunpack.c.l.b16 %v391
    %v578 = vunpack.c.h.b16 %v391
    %v579 = vunpack.c.l.b16 %v392
    %v580 = vunpack.c.h.b16 %v392
    %v581 = vunpack.c.l.b16 %v393
    %v582 = vunpack.c.h.b16 %v393
    %v583 = vunpack.c.l.b16 %v394
    %v584 = vunpack.c.h.b16 %v394
    %v585 = vunpack.c.l.b16 %v395
    %v586 = vunpack.c.h.b16 %v395
    %v587 = vunpack.c.l.b16 %v396
    %v588 = vunpack.c.h.b16 %v396
    %v589 = vpack.c.b16 %v465, %v461
    %v590 = vpack.c.b16 %v466, %v462
    %v591 = vpack.c.b16 %v467, %v463
    %v592 = vpack.c.b16 %v468, %v464
    %v593 = vpack.c.b16 %v473, %v469
    %v594 = vpack.c.b16 %v474, %v470
    %v595 = vpack.c.b16 %v475, %v471
    %v596 = vpack.c.b16 %v476, %v472
    %v597 = vpack.c.b16 %v481, %v477
    %v598 = vpack.c.b16 %v482, %v478
    %v599 = vpack.c.b16 %v483, %v479
    %v600 = vpack.c.b16 %v484, %v480
    %v601 = vpack.c.b16 %v489, %v485
    %v602 = vpack.c.b16 %v490, %v486
    %v603 = vpack.c.b16 %v491, %v487
    %v604 = vpack.c.b16 %v492, %v488
    %v605 = vpack.c.b16 %v497, %v493
    %v606 = vpack.c.b16 %v498, %v494
    %v607 = vpack.c.b16 %v499, %v495
    %v608 = vpack.c.b16 %v500, %v496
    %v609 = vpack.c.b16 %v505, %v501
    %v610 = vpack.c.b16 %v506, %v502
    %v611 = vpack.c.b16 %v507, %v503
    %v612 = vpack.c.b16 %v508, %v504
    %v613 = vpack.c.b16 %v513, %v509
    %v614 = vpack.c.b16 %v514, %v510
    %v615 = vpack.c.b16 %v515, %v511
    %v616 = vpack.c.b16 %v516, %v512
    %v617 = vpack.c.b16 %v521, %v517
    %v618 = vpack.c.b16 %v522, %v518
    %v619 = vpack.c.b16 %v523, %v519
    %v620 = vpack.c.b16 %v524, %v520
    %v621 = vpack.c.b16 %v529, %v525
    %v622 = vpack.c.b16 %v530, %v526
    %v623 = vpack.c.b16 %v531, %v527
    %v624 = vpack.c.b16 %v532, %v528
    %v625 = vpack.c.b16 %v537, %v533
    %v626 = vpack.c.b16 %v538, %v534
    %v627 = vpack.c.b16 %v539, %v535
    %v628 = vpack.c.b16 %v540, %v536
    %v629 = vpack.c.b16 %v545, %v541
    %v630 = vpack.c.b16 %v546, %v542
    %v631 = vpack.c.b16 %v547, %v543
    %v632 = vpack.c.b16 %v548, %v544
    %v633 = vpack.c.b16 %v553, %v549
    %v634 = vpack.c.b16 %v554, %v550
    %v635 = vpack.c.b16 %v555, %v551
    %v636 = vpack.c.b16 %v556, %v552
    %v637 = vpack.c.b16 %v561, %v557
    %v638 = vpack.c.b16 %v562, %v558
    %v639 = vpack.c.b16 %v563, %v559
    %v640 = vpack.c.b16 %v564, %v560
    %v641 = vpack.c.b16 %v569, %v565
    %v642 = vpack.c.b16 %v570, %v566
    %v643 = vpack.c.b16 %v571, %v567
    %v644 = vpack.c.b16 %v572, %v568
    %v645 = vpack.c.b16 %v577, %v573
    %v646 = vpack.c.b16 %v578, %v574
    %v647 = vpack.c.b16 %v579, %v575
    %v648 = vpack.c.b16 %v580, %v576
    %v649 = vpack.c.b16 %v585, %v581
    %v650 = vpack.c.b16 %v586, %v582
    %v651 = vpack.c.b16 %v587, %v583
    %v652 = vpack.c.b16 %v588, %v584
    %717 = vmatpush.bf16.msra.mxu0 %v617
    %718 = vmatpush.bf16.msra.mxu0 %v613
    %719 = vmatpush.bf16.msra.mxu0 %v609
    %720 = vmatpush.bf16.msra.mxu0 %v605
    %721 = vmatpush.bf16.msra.mxu0 %v601
    %722 = vmatpush.bf16.msra.mxu0 %v597
    %723 = vmatpush.bf16.msra.mxu0 %v593
    %724 = vmatpush.bf16.msra.mxu0 %v589
    %725 = vmatmul.bf16.gmra.mxu0 %v331
    %v726 = vpop.f32.mrf.mxu0
    %v727 = vadd.f32 0.0, %v726
    %v728 = vpop.f32.mrf.mxu0
    %729 = vdwg.mxu0
    %730 = vmatpush.bf16.msra.mxu0 %v649
    %731 = vmatpush.bf16.msra.mxu0 %v645
    %732 = vmatpush.bf16.msra.mxu0 %v641
    %733 = vmatpush.bf16.msra.mxu0 %v637
    %734 = vmatpush.bf16.msra.mxu0 %v633
    %735 = vmatpush.bf16.msra.mxu0 %v629
    %736 = vmatpush.bf16.msra.mxu0 %v625
    %737 = vmatpush.bf16.msra.mxu0 %v621
    %738 = vmatmul.bf16.gmra.mxu0 %v332
    %v739 = vpop.f32.mrf.mxu0
    %v740 = vadd.f32 %v727, %v739
    %v741 = vpop.f32.mrf.mxu0
    %742 = vdwg.mxu0
    %743 = vmatpush.bf16.msra.mxu0 %v618
    %744 = vmatpush.bf16.msra.mxu0 %v614
    %745 = vmatpush.bf16.msra.mxu0 %v610
    %746 = vmatpush.bf16.msra.mxu0 %v606
    %747 = vmatpush.bf16.msra.mxu0 %v602
    %748 = vmatpush.bf16.msra.mxu0 %v598
    %749 = vmatpush.bf16.msra.mxu0 %v594
    %750 = vmatpush.bf16.msra.mxu0 %v590
    %751 = vmatmul.bf16.gmra.mxu0 %v331
    %v752 = vpop.f32.mrf.mxu0
    %v753 = vadd.f32 0.0, %v752
    %v754 = vpop.f32.mrf.mxu0
    %755 = vdwg.mxu0
    %756 = vmatpush.bf16.msra.mxu0 %v650
    %757 = vmatpush.bf16.msra.mxu0 %v646
    %758 = vmatpush.bf16.msra.mxu0 %v642
    %759 = vmatpush.bf16.msra.mxu0 %v638
    %760 = vmatpush.bf16.msra.mxu0 %v634
    %761 = vmatpush.bf16.msra.mxu0 %v630
    %762 = vmatpush.bf16.msra.mxu0 %v626
    %763 = vmatpush.bf16.msra.mxu0 %v622
    %764 = vmatmul.bf16.gmra.mxu0 %v332
    %v765 = vpop.f32.mrf.mxu0
    %v766 = vadd.f32 %v753, %v765
    %v767 = vpop.f32.mrf.mxu0
    %768 = vdwg.mxu0
    %769 = vmatpush.bf16.msra.mxu0 %v619
    %770 = vmatpush.bf16.msra.mxu0 %v615
    %771 = vmatpush.bf16.msra.mxu0 %v611
    %772 = vmatpush.bf16.msra.mxu0 %v607
    %773 = vmatpush.bf16.msra.mxu0 %v603
    %774 = vmatpush.bf16.msra.mxu0 %v599
    %775 = vmatpush.bf16.msra.mxu0 %v595
    %776 = vmatpush.bf16.msra.mxu0 %v591
    %777 = vmatmul.bf16.gmra.mxu0 %v331
    %v778 = vpop.f32.mrf.mxu0
    %v779 = vadd.f32 0.0, %v778
    %v780 = vpop.f32.mrf.mxu0
    %781 = vdwg.mxu0
    %782 = vmatpush.bf16.msra.mxu0 %v651
    %783 = vmatpush.bf16.msra.mxu0 %v647
    %784 = vmatpush.bf16.msra.mxu0 %v643
    %785 = vmatpush.bf16.msra.mxu0 %v639
    %786 = vmatpush.bf16.msra.mxu0 %v635
    %787 = vmatpush.bf16.msra.mxu0 %v631
    %788 = vmatpush.bf16.msra.mxu0 %v627
    %789 = vmatpush.bf16.msra.mxu0 %v623
    %790 = vmatmul.bf16.gmra.mxu0 %v332
    %v791 = vpop.f32.mrf.mxu0
    %v792 = vadd.f32 %v779, %v791
    %v793 = vpop.f32.mrf.mxu0
    %794 = vdwg.mxu0
    %795 = vmatpush.bf16.msra.mxu0 %v620
    %796 = vmatpush.bf16.msra.mxu0 %v616
    %797 = vmatpush.bf16.msra.mxu0 %v612
    %798 = vmatpush.bf16.msra.mxu0 %v608
    %799 = vmatpush.bf16.msra.mxu0 %v604
    %800 = vmatpush.bf16.msra.mxu0 %v600
    %801 = vmatpush.bf16.msra.mxu0 %v596
    %802 = vmatpush.bf16.msra.mxu0 %v592
    %803 = vmatmul.bf16.gmra.mxu0 %v331
    %v804 = vpop.f32.mrf.mxu0
    %v805 = vadd.f32 0.0, %v804
    %v806 = vpop.f32.mrf.mxu0
    %807 = vdwg.mxu0
    %808 = vmatpush.bf16.msra.mxu0 %v652
    %809 = vmatpush.bf16.msra.mxu0 %v648
    %810 = vmatpush.bf16.msra.mxu0 %v644
    %811 = vmatpush.bf16.msra.mxu0 %v640
    %812 = vmatpush.bf16.msra.mxu0 %v636
    %813 = vmatpush.bf16.msra.mxu0 %v632
    %814 = vmatpush.bf16.msra.mxu0 %v628
    %815 = vmatpush.bf16.msra.mxu0 %v624
    %816 = vmatmul.bf16.gmra.mxu0 %v332
    %v817 = vpop.f32.mrf.mxu0
    %v818 = vadd.f32 %v805, %v817
    %v819 = vpop.f32.mrf.mxu0
    %820 = vdwg.mxu0
    %v821 = vmul.f32 %v740, %v740
    %v822 = vmul.f32 %v766, %v766
    %v823 = vmul.f32 %v792, %v792
    %v824 = vmul.f32 %v818, %v818
    %v825 = vadd.f32 %v821, %v822
    %v826 = vadd.f32 %v825, %v823
    %v827 = vadd.f32 %v826, %v824
    %828 = vadd.xlane.f32.xlu0 %v827
    %v829 = vpop.xlane.xlu0 %828
    %v830 = vadd.f32 %v829, 1e-12
    %v831 = vrsqrt.pop %v830
    %v832 = vmul.f32 %v831, %v830
    %v833 = vmul.f32 %v832, %v831
    %v834 = vmul.f32 0.5, %v833
    %v835 = vsub.f32 1.5, %v834
    %v836 = vmul.f32 %v831, %v835
    %vm837 = vweird.f32 %v830
    %vm838 = vweird.f32 %v831
    %vm839 = vmor %vm837, %vm838
    %v840 = vsel %vm839, %v831, %v836
    %v841 = vmul.f32 %v740, %v840
    %v842 = vmul.f32 %v766, %v840
    %v843 = vmul.f32 %v792, %v840
    %v844 = vmul.f32 %v818, %v840
    %v849 = vrot.slane %v842, 4
    %v850 = vrot.slane %v844, 4
    %vm851 = vcmask 1043456
    %v852 = vsel %vm851, %v841, %v849
    %v853 = vsel %vm851, %v843, %v850
    %v854 = vsel %vm851, %v849, %v841
    %v855 = vrot.slane %v854, 4
    %v856 = vsel %vm851, %v850, %v843
    %v857 = vrot.slane %v856, 4
    %858 = vst [vmem:[#allocation1] ss:$2 sm:$0xff] %v852
    %s859 = scalar_lea.vmem [#allocation1], 16
    %860 = vst [vmem:[%s859] ss:$2 sm:$0xff] %v853
    %v861 = vld.sshfl [vmem:[#allocation1] sm:$0xff pattern:$0x75316420]
    %v862 = vld.sshfl [vmem:[#allocation1 + $0x8] sm:$0xff pattern:$0x75316420]
    %v863 = vld.sshfl [vmem:[#allocation1 + $0x10] sm:$0xff pattern:$0x75316420]
    %v864 = vld.sshfl [vmem:[#allocation1 + $0x18] sm:$0xff pattern:$0x75316420]
    %s865 = scalar_lea.vmem [#allocation1], 32
    %866 = vst [vmem:[%s865] ss:$2 sm:$0xff] %v855
    %s867 = scalar_lea.vmem [#allocation1], 48
    %868 = vst [vmem:[%s867] ss:$2 sm:$0xff] %v857
    %v869 = vld.sshfl [vmem:[#allocation1 + $0x20] sm:$0xff pattern:$0x75316420]
    %v870 = vld.sshfl [vmem:[#allocation1 + $0x28] sm:$0xff pattern:$0x75316420]
    %v871 = vld.sshfl [vmem:[#allocation1 + $0x30] sm:$0xff pattern:$0x75316420]
    %v872 = vld.sshfl [vmem:[#allocation1 + $0x38] sm:$0xff pattern:$0x75316420]
    %v881 = vsel %vm851, %v861, 0.0
    %v882 = vrot.slane %v881, 4
    %v883 = vadd.f32 %v881, %v882
    %v884 = vrot.slane %v883, 2
    %v885 = vadd.f32 %v883, %v884
    %v886 = vrot.slane %v885, 1
    %v887 = vadd.f32 %v885, %v886
    %v888 = vsel %vm851, %v862, 0.0
    %v889 = vrot.slane %v888, 4
    %v890 = vadd.f32 %v888, %v889
    %v891 = vrot.slane %v890, 2
    %v892 = vadd.f32 %v890, %v891
    %v893 = vrot.slane %v892, 1
    %v894 = vadd.f32 %v892, %v893
    %v895 = vsel %vm851, %v863, 0.0
    %v896 = vrot.slane %v895, 4
    %v897 = vadd.f32 %v895, %v896
    %v898 = vrot.slane %v897, 2
    %v899 = vadd.f32 %v897, %v898
    %v900 = vrot.slane %v899, 1
    %v901 = vadd.f32 %v899, %v900
    %v902 = vsel %vm851, %v864, 0.0
    %v903 = vrot.slane %v902, 4
    %v904 = vadd.f32 %v902, %v903
    %v905 = vrot.slane %v904, 2
    %v906 = vadd.f32 %v904, %v905
    %v907 = vrot.slane %v906, 1
    %v908 = vadd.f32 %v906, %v907
    %v909 = vsel %vm851, %v869, 0.0
    %v910 = vrot.slane %v909, 4
    %v911 = vadd.f32 %v909, %v910
    %v912 = vrot.slane %v911, 2
    %v913 = vadd.f32 %v911, %v912
    %v914 = vrot.slane %v913, 1
    %v915 = vadd.f32 %v913, %v914
    %v916 = vsel %vm851, %v870, 0.0
    %v917 = vrot.slane %v916, 4
    %v918 = vadd.f32 %v916, %v917
    %v919 = vrot.slane %v918, 2
    %v920 = vadd.f32 %v918, %v919
    %v921 = vrot.slane %v920, 1
    %v922 = vadd.f32 %v920, %v921
    %v923 = vsel %vm851, %v871, 0.0
    %v924 = vrot.slane %v923, 4
    %v925 = vadd.f32 %v923, %v924
    %v926 = vrot.slane %v925, 2
    %v927 = vadd.f32 %v925, %v926
    %v928 = vrot.slane %v927, 1
    %v929 = vadd.f32 %v927, %v928
    %v930 = vsel %vm851, %v872, 0.0
    %v931 = vrot.slane %v930, 4
    %v932 = vadd.f32 %v930, %v931
    %v933 = vrot.slane %v932, 2
    %v934 = vadd.f32 %v932, %v933
    %v935 = vrot.slane %v934, 1
    %v936 = vadd.f32 %v934, %v935
    %v937 = vrcp.pop 4.0
    %v938 = vmul.f32 4.0, %v937
    %v939 = vsub.f32 1.0, %v938
    %v940 = vmul.f32 %v937, %v939
    %v941 = vadd.f32 %v937, %v940
    %vm942 = vweird.f32 %v937
    %v943 = vsel %vm942, %v937, %v941
    %v944 = vmul.f32 %v887, %v943
    %v945 = vmul.f32 %v894, %v943
    %v946 = vmul.f32 %v901, %v943
    %v947 = vmul.f32 %v908, %v943
    %v948 = vmul.f32 %v915, %v943
    %v949 = vmul.f32 %v922, %v943
    %v950 = vmul.f32 %v929, %v943
    %v951 = vmul.f32 %v936, %v943
    %v952 = vmul.f32 %v944, %v944
    %v953 = vmul.f32 %v945, %v945
    %v954 = vmul.f32 %v946, %v946
    %v955 = vmul.f32 %v947, %v947
    %v956 = vmul.f32 %v948, %v948
    %v957 = vmul.f32 %v949, %v949
    %v958 = vmul.f32 %v950, %v950
    %v959 = vmul.f32 %v951, %v951
    %v968 = vsel %vm207, %v956, %v952
    %v969 = vsel %vm207, %v957, %v953
    %v970 = vsel %vm207, %v958, %v954
    %v971 = vsel %vm207, %v959, %v955
    %vm976 = vcmask 1041408
    %v977 = vsel %vm976, %v968, 0.0
    %v978 = vsel %vm976, %v969, 0.0
    %v979 = vadd.f32 %v977, %v978
    %v980 = vsel %vm976, %v970, 0.0
    %v981 = vadd.f32 %v979, %v980
    %v982 = vsel %vm976, %v971, 0.0
    %v983 = vadd.f32 %v981, %v982
    %984 = vadd.xlane.f32.xlu0 %v983
    %v985 = vpop.xlane.xlu0 %984
    %v986 = vadd.f32 %v985, 1e-12
    %v987 = vrsqrt.pop %v986
    %v988 = vmul.f32 %v987, %v986
    %v989 = vmul.f32 %v988, %v987
    %v990 = vmul.f32 0.5, %v989
    %v991 = vsub.f32 1.5, %v990
    %v992 = vmul.f32 %v987, %v991
    %vm993 = vweird.f32 %v986
    %vm994 = vweird.f32 %v987
    %vm995 = vmor %vm993, %vm994
    %v996 = vsel %vm995, %v987, %v992
    %v998 = vrot.slane %v996, 1
    %v1001 = vmul.f32 %v944, %v996
    %v1002 = vmul.f32 %v945, %v996
    %v1003 = vmul.f32 %v946, %v996
    %v1004 = vmul.f32 %v947, %v996
    %v1005 = vmul.f32 %v948, %v998
    %v1006 = vmul.f32 %v949, %v998
    %v1007 = vmul.f32 %v950, %v998
    %v1008 = vmul.f32 %v951, %v998
    %v1017 = vrot.slane %v1002, 6
    %v1018 = vrot.slane %v1003, 4
    %v1019 = vrot.slane %v1004, 2
    %v1020 = vrot.slane %v1006, 6
    %v1021 = vrot.slane %v1007, 4
    %v1022 = vrot.slane %v1008, 2
    %v1023 = vsel %vm976, %v1001, %v1017
    %vm1024 = vcmask 1045508
    %v1025 = vsel %vm1024, %v1018, %v1019
    %v1026 = vsel %vm851, %v1023, %v1025
    %v1027 = vsel %vm976, %v1005, %v1020
    %v1028 = vsel %vm1024, %v1021, %v1022
    %v1029 = vsel %vm851, %v1027, %v1028
    %v1030 = vsel %vm213, %v1026, %v1026
    %v1031 = vsel %vm217, %v1026, %v1030
    %v1032 = vrot.slane %v1029, 7
    %v1033 = vsel %vm207, %v1032, %v1031
    %v1034 = vsel %vm211, %v1032, %v1033
    %v1035 = vsel %vm215, %v1032, %v1034
    %v1036 = vsel %vm219, %v1032, %v1035
    %1038 = vst [vmem:[#allocation2] sm:$0xff] %v1036
    %v1039 = vld [vmem:[%s3] sm:$0xff]
    %v1040 = vld [vmem:[%s3 + $0x8] sm:$0xff]
    %v1041 = vld [vmem:[%s3 + $0x10] sm:$0xff]
    %v1042 = vld [vmem:[%s3 + $0x18] sm:$0xff]
    %v1043 = vld [vmem:[%s3 + $0x20] sm:$0xff]
    %v1044 = vld [vmem:[%s3 + $0x28] sm:$0xff]
    %v1045 = vld [vmem:[%s3 + $0x30] sm:$0xff]
    %v1046 = vld [vmem:[%s3 + $0x38] sm:$0xff]
    %v1047 = vld [vmem:[%s3 + $0x40] sm:$0xff]
    %v1048 = vld [vmem:[%s3 + $0x48] sm:$0xff]
    %v1049 = vld [vmem:[%s3 + $0x50] sm:$0xff]
    %v1050 = vld [vmem:[%s3 + $0x58] sm:$0xff]
    %v1051 = vld [vmem:[%s3 + $0x60] sm:$0xff]
    %v1052 = vld [vmem:[%s3 + $0x68] sm:$0xff]
    %v1053 = vld [vmem:[%s3 + $0x70] sm:$0xff]
    %v1054 = vld [vmem:[%s3 + $0x78] sm:$0xff]
    %v1055 = vld [vmem:[%s3 + $0x80] sm:$0xff]
    %v1056 = vld [vmem:[%s3 + $0x88] sm:$0xff]
    %v1057 = vld [vmem:[%s3 + $0x90] sm:$0xff]
    %v1058 = vld [vmem:[%s3 + $0x98] sm:$0xff]
    %v1059 = vld [vmem:[%s3 + $0xa0] sm:$0xff]
    %v1060 = vld [vmem:[%s3 + $0xa8] sm:$0xff]
    %v1061 = vld [vmem:[%s3 + $0xb0] sm:$0xff]
    %v1062 = vld [vmem:[%s3 + $0xb8] sm:$0xff]
    %v1063 = vld [vmem:[%s3 + $0xc0] sm:$0xff]
    %v1064 = vld [vmem:[%s3 + $0xc8] sm:$0xff]
    %v1065 = vld [vmem:[%s3 + $0xd0] sm:$0xff]
    %v1066 = vld [vmem:[%s3 + $0xd8] sm:$0xff]
    %v1067 = vld [vmem:[%s3 + $0xe0] sm:$0xff]
    %v1068 = vld [vmem:[%s3 + $0xe8] sm:$0xff]
    %v1069 = vld [vmem:[%s3 + $0xf0] sm:$0xff]
    %v1070 = vld [vmem:[%s3 + $0xf8] sm:$0xff]
    %v1071 = vld [vmem:[%s4] sm:$0x77]
    %1073 = vset.pattern.permute.xlu0 0
    %1074 = vperm.xlu0 %1073, %v1039
    %v1075 = vpop.permute.xlu0 %1074
    %1078 = vset.pattern.permute.xlu0 0
    %1079 = vperm.xlu0 %1078, %v1040
    %v1080 = vpop.permute.xlu0 %1079
    %1083 = vset.pattern.permute.xlu0 0
    %1084 = vperm.xlu0 %1083, %v1041
    %v1085 = vpop.permute.xlu0 %1084
    %1088 = vset.pattern.permute.xlu0 0
    %1089 = vperm.xlu0 %1088, %v1042
    %v1090 = vpop.permute.xlu0 %1089
    %1093 = vset.pattern.permute.xlu0 0
    %1094 = vperm.xlu0 %1093, %v1043
    %v1095 = vpop.permute.xlu0 %1094
    %1098 = vset.pattern.permute.xlu0 0
    %1099 = vperm.xlu0 %1098, %v1044
    %v1100 = vpop.permute.xlu0 %1099
    %1103 = vset.pattern.permute.xlu0 0
    %1104 = vperm.xlu0 %1103, %v1045
    %v1105 = vpop.permute.xlu0 %1104
    %1108 = vset.pattern.permute.xlu0 0
    %1109 = vperm.xlu0 %1108, %v1046
    %v1110 = vpop.permute.xlu0 %1109
    %1113 = vset.pattern.permute.xlu0 0
    %1114 = vperm.xlu0 %1113, %v1047
    %v1115 = vpop.permute.xlu0 %1114
    %1118 = vset.pattern.permute.xlu0 0
    %1119 = vperm.xlu0 %1118, %v1048
    %v1120 = vpop.permute.xlu0 %1119
    %1123 = vset.pattern.permute.xlu0 0
    %1124 = vperm.xlu0 %1123, %v1049
    %v1125 = vpop.permute.xlu0 %1124
    %1128 = vset.pattern.permute.xlu0 0
    %1129 = vperm.xlu0 %1128, %v1050
    %v1130 = vpop.permute.xlu0 %1129
    %1133 = vset.pattern.permute.xlu0 0
    %1134 = vperm.xlu0 %1133, %v1051
    %v1135 = vpop.permute.xlu0 %1134
    %1138 = vset.pattern.permute.xlu0 0
    %1139 = vperm.xlu0 %1138, %v1052
    %v1140 = vpop.permute.xlu0 %1139
    %1143 = vset.pattern.permute.xlu0 0
    %1144 = vperm.xlu0 %1143, %v1053
    %v1145 = vpop.permute.xlu0 %1144
    %1148 = vset.pattern.permute.xlu0 0
    %1149 = vperm.xlu0 %1148, %v1054
    %v1150 = vpop.permute.xlu0 %1149
    %1153 = vset.pattern.permute.xlu0 0
    %1154 = vperm.xlu0 %1153, %v1055
    %v1155 = vpop.permute.xlu0 %1154
    %1158 = vset.pattern.permute.xlu0 0
    %1159 = vperm.xlu0 %1158, %v1056
    %v1160 = vpop.permute.xlu0 %1159
    %1163 = vset.pattern.permute.xlu0 0
    %1164 = vperm.xlu0 %1163, %v1057
    %v1165 = vpop.permute.xlu0 %1164
    %1168 = vset.pattern.permute.xlu0 0
    %1169 = vperm.xlu0 %1168, %v1058
    %v1170 = vpop.permute.xlu0 %1169
    %1173 = vset.pattern.permute.xlu0 0
    %1174 = vperm.xlu0 %1173, %v1059
    %v1175 = vpop.permute.xlu0 %1174
    %1178 = vset.pattern.permute.xlu0 0
    %1179 = vperm.xlu0 %1178, %v1060
    %v1180 = vpop.permute.xlu0 %1179
    %1183 = vset.pattern.permute.xlu0 0
    %1184 = vperm.xlu0 %1183, %v1061
    %v1185 = vpop.permute.xlu0 %1184
    %1188 = vset.pattern.permute.xlu0 0
    %1189 = vperm.xlu0 %1188, %v1062
    %v1190 = vpop.permute.xlu0 %1189
    %1193 = vset.pattern.permute.xlu0 0
    %1194 = vperm.xlu0 %1193, %v1063
    %v1195 = vpop.permute.xlu0 %1194
    %1198 = vset.pattern.permute.xlu0 0
    %1199 = vperm.xlu0 %1198, %v1064
    %v1200 = vpop.permute.xlu0 %1199
    %1203 = vset.pattern.permute.xlu0 0
    %1204 = vperm.xlu0 %1203, %v1065
    %v1205 = vpop.permute.xlu0 %1204
    %1208 = vset.pattern.permute.xlu0 0
    %1209 = vperm.xlu0 %1208, %v1066
    %v1210 = vpop.permute.xlu0 %1209
    %1213 = vset.pattern.permute.xlu0 0
    %1214 = vperm.xlu0 %1213, %v1067
    %v1215 = vpop.permute.xlu0 %1214
    %1218 = vset.pattern.permute.xlu0 0
    %1219 = vperm.xlu0 %1218, %v1068
    %v1220 = vpop.permute.xlu0 %1219
    %1223 = vset.pattern.permute.xlu0 0
    %1224 = vperm.xlu0 %1223, %v1069
    %v1225 = vpop.permute.xlu0 %1224
    %1228 = vset.pattern.permute.xlu0 0
    %1229 = vperm.xlu0 %1228, %v1070
    %v1230 = vpop.permute.xlu0 %1229
    %v1233 = vperm.slane %v1071, 0
    %v1234 = vperm.slane %v1071, 4
    %v1237 = vperm.slane %v1233, 0
    %v1238 = vperm.slane %v1234, 0
    %v1239 = vmul.f32 %v1075, %v1237
    %v1240 = vmul.f32 %v1075, %v1238
    %v1241 = vmul.f32 %v1080, %v1237
    %v1242 = vmul.f32 %v1080, %v1238
    %v1243 = vmul.f32 %v1085, %v1237
    %v1244 = vmul.f32 %v1085, %v1238
    %v1245 = vmul.f32 %v1090, %v1237
    %v1246 = vmul.f32 %v1090, %v1238
    %v1247 = vmul.f32 %v1095, %v1237
    %v1248 = vmul.f32 %v1095, %v1238
    %v1249 = vmul.f32 %v1100, %v1237
    %v1250 = vmul.f32 %v1100, %v1238
    %v1251 = vmul.f32 %v1105, %v1237
    %v1252 = vmul.f32 %v1105, %v1238
    %v1253 = vmul.f32 %v1110, %v1237
    %v1254 = vmul.f32 %v1110, %v1238
    %v1255 = vmul.f32 %v1115, %v1237
    %v1256 = vmul.f32 %v1115, %v1238
    %v1257 = vmul.f32 %v1120, %v1237
    %v1258 = vmul.f32 %v1120, %v1238
    %v1259 = vmul.f32 %v1125, %v1237
    %v1260 = vmul.f32 %v1125, %v1238
    %v1261 = vmul.f32 %v1130, %v1237
    %v1262 = vmul.f32 %v1130, %v1238
    %v1263 = vmul.f32 %v1135, %v1237
    %v1264 = vmul.f32 %v1135, %v1238
    %v1265 = vmul.f32 %v1140, %v1237
    %v1266 = vmul.f32 %v1140, %v1238
    %v1267 = vmul.f32 %v1145, %v1237
    %v1268 = vmul.f32 %v1145, %v1238
    %v1269 = vmul.f32 %v1150, %v1237
    %v1270 = vmul.f32 %v1150, %v1238
    %v1271 = vmul.f32 %v1155, %v1237
    %v1272 = vmul.f32 %v1155, %v1238
    %v1273 = vmul.f32 %v1160, %v1237
    %v1274 = vmul.f32 %v1160, %v1238
    %v1275 = vmul.f32 %v1165, %v1237
    %v1276 = vmul.f32 %v1165, %v1238
    %v1277 = vmul.f32 %v1170, %v1237
    %v1278 = vmul.f32 %v1170, %v1238
    %v1279 = vmul.f32 %v1175, %v1237
    %v1280 = vmul.f32 %v1175, %v1238
    %v1281 = vmul.f32 %v1180, %v1237
    %v1282 = vmul.f32 %v1180, %v1238
    %v1283 = vmul.f32 %v1185, %v1237
    %v1284 = vmul.f32 %v1185, %v1238
    %v1285 = vmul.f32 %v1190, %v1237
    %v1286 = vmul.f32 %v1190, %v1238
    %v1287 = vmul.f32 %v1195, %v1237
    %v1288 = vmul.f32 %v1195, %v1238
    %v1289 = vmul.f32 %v1200, %v1237
    %v1290 = vmul.f32 %v1200, %v1238
    %v1291 = vmul.f32 %v1205, %v1237
    %v1292 = vmul.f32 %v1205, %v1238
    %v1293 = vmul.f32 %v1210, %v1237
    %v1294 = vmul.f32 %v1210, %v1238
    %v1295 = vmul.f32 %v1215, %v1237
    %v1296 = vmul.f32 %v1215, %v1238
    %v1297 = vmul.f32 %v1220, %v1237
    %v1298 = vmul.f32 %v1220, %v1238
    %v1299 = vmul.f32 %v1225, %v1237
    %v1300 = vmul.f32 %v1225, %v1238
    %v1301 = vmul.f32 %v1230, %v1237
    %v1302 = vmul.f32 %v1230, %v1238
    %1303 = vset.pattern.permute.xlu0 1
    %1304 = vperm.xlu0 %1303, %v1039
    %v1305 = vpop.permute.xlu0 %1304
    %1307 = vset.pattern.permute.xlu0 1
    %1308 = vperm.xlu0 %1307, %v1040
    %v1309 = vpop.permute.xlu0 %1308
    %1311 = vset.pattern.permute.xlu0 1
    %1312 = vperm.xlu0 %1311, %v1041
    %v1313 = vpop.permute.xlu0 %1312
    %1315 = vset.pattern.permute.xlu0 1
    %1316 = vperm.xlu0 %1315, %v1042
    %v1317 = vpop.permute.xlu0 %1316
    %1319 = vset.pattern.permute.xlu0 1
    %1320 = vperm.xlu0 %1319, %v1043
    %v1321 = vpop.permute.xlu0 %1320
    %1323 = vset.pattern.permute.xlu0 1
    %1324 = vperm.xlu0 %1323, %v1044
    %v1325 = vpop.permute.xlu0 %1324
    %1327 = vset.pattern.permute.xlu0 1
    %1328 = vperm.xlu0 %1327, %v1045
    %v1329 = vpop.permute.xlu0 %1328
    %1331 = vset.pattern.permute.xlu0 1
    %1332 = vperm.xlu0 %1331, %v1046
    %v1333 = vpop.permute.xlu0 %1332
    %1335 = vset.pattern.permute.xlu0 1
    %1336 = vperm.xlu0 %1335, %v1047
    %v1337 = vpop.permute.xlu0 %1336
    %1339 = vset.pattern.permute.xlu0 1
    %1340 = vperm.xlu0 %1339, %v1048
    %v1341 = vpop.permute.xlu0 %1340
    %1343 = vset.pattern.permute.xlu0 1
    %1344 = vperm.xlu0 %1343, %v1049
    %v1345 = vpop.permute.xlu0 %1344
    %1347 = vset.pattern.permute.xlu0 1
    %1348 = vperm.xlu0 %1347, %v1050
    %v1349 = vpop.permute.xlu0 %1348
    %1351 = vset.pattern.permute.xlu0 1
    %1352 = vperm.xlu0 %1351, %v1051
    %v1353 = vpop.permute.xlu0 %1352
    %1355 = vset.pattern.permute.xlu0 1
    %1356 = vperm.xlu0 %1355, %v1052
    %v1357 = vpop.permute.xlu0 %1356
    %1359 = vset.pattern.permute.xlu0 1
    %1360 = vperm.xlu0 %1359, %v1053
    %v1361 = vpop.permute.xlu0 %1360
    %1363 = vset.pattern.permute.xlu0 1
    %1364 = vperm.xlu0 %1363, %v1054
    %v1365 = vpop.permute.xlu0 %1364
    %1367 = vset.pattern.permute.xlu0 1
    %1368 = vperm.xlu0 %1367, %v1055
    %v1369 = vpop.permute.xlu0 %1368
    %1371 = vset.pattern.permute.xlu0 1
    %1372 = vperm.xlu0 %1371, %v1056
    %v1373 = vpop.permute.xlu0 %1372
    %1375 = vset.pattern.permute.xlu0 1
    %1376 = vperm.xlu0 %1375, %v1057
    %v1377 = vpop.permute.xlu0 %1376
    %1379 = vset.pattern.permute.xlu0 1
    %1380 = vperm.xlu0 %1379, %v1058
    %v1381 = vpop.permute.xlu0 %1380
    %1383 = vset.pattern.permute.xlu0 1
    %1384 = vperm.xlu0 %1383, %v1059
    %v1385 = vpop.permute.xlu0 %1384
    %1387 = vset.pattern.permute.xlu0 1
    %1388 = vperm.xlu0 %1387, %v1060
    %v1389 = vpop.permute.xlu0 %1388
    %1391 = vset.pattern.permute.xlu0 1
    %1392 = vperm.xlu0 %1391, %v1061
    %v1393 = vpop.permute.xlu0 %1392
    %1395 = vset.pattern.permute.xlu0 1
    %1396 = vperm.xlu0 %1395, %v1062
    %v1397 = vpop.permute.xlu0 %1396
    %1399 = vset.pattern.permute.xlu0 1
    %1400 = vperm.xlu0 %1399, %v1063
    %v1401 = vpop.permute.xlu0 %1400
    %1403 = vset.pattern.permute.xlu0 1
    %1404 = vperm.xlu0 %1403, %v1064
    %v1405 = vpop.permute.xlu0 %1404
    %1407 = vset.pattern.permute.xlu0 1
    %1408 = vperm.xlu0 %1407, %v1065
    %v1409 = vpop.permute.xlu0 %1408
    %1411 = vset.pattern.permute.xlu0 1
    %1412 = vperm.xlu0 %1411, %v1066
    %v1413 = vpop.permute.xlu0 %1412
    %1415 = vset.pattern.permute.xlu0 1
    %1416 = vperm.xlu0 %1415, %v1067
    %v1417 = vpop.permute.xlu0 %1416
    %1419 = vset.pattern.permute.xlu0 1
    %1420 = vperm.xlu0 %1419, %v1068
    %v1421 = vpop.permute.xlu0 %1420
    %1423 = vset.pattern.permute.xlu0 1
    %1424 = vperm.xlu0 %1423, %v1069
    %v1425 = vpop.permute.xlu0 %1424
    %1427 = vset.pattern.permute.xlu0 1
    %1428 = vperm.xlu0 %1427, %v1070
    %v1429 = vpop.permute.xlu0 %1428
    %v1431 = vperm.slane %v1071, 1
    %v1432 = vperm.slane %v1071, 5
    %v1435 = vperm.slane %v1431, 1
    %v1436 = vperm.slane %v1432, 1
    %v1437 = vmul.f32 %v1305, %v1435
    %v1438 = vmul.f32 %v1305, %v1436
    %v1439 = vmul.f32 %v1309, %v1435
    %v1440 = vmul.f32 %v1309, %v1436
    %v1441 = vmul.f32 %v1313, %v1435
    %v1442 = vmul.f32 %v1313, %v1436
    %v1443 = vmul.f32 %v1317, %v1435
    %v1444 = vmul.f32 %v1317, %v1436
    %v1445 = vmul.f32 %v1321, %v1435
    %v1446 = vmul.f32 %v1321, %v1436
    %v1447 = vmul.f32 %v1325, %v1435
    %v1448 = vmul.f32 %v1325, %v1436
    %v1449 = vmul.f32 %v1329, %v1435
    %v1450 = vmul.f32 %v1329, %v1436
    %v1451 = vmul.f32 %v1333, %v1435
    %v1452 = vmul.f32 %v1333, %v1436
    %v1453 = vmul.f32 %v1337, %v1435
    %v1454 = vmul.f32 %v1337, %v1436
    %v1455 = vmul.f32 %v1341, %v1435
    %v1456 = vmul.f32 %v1341, %v1436
    %v1457 = vmul.f32 %v1345, %v1435
    %v1458 = vmul.f32 %v1345, %v1436
    %v1459 = vmul.f32 %v1349, %v1435
    %v1460 = vmul.f32 %v1349, %v1436
    %v1461 = vmul.f32 %v1353, %v1435
    %v1462 = vmul.f32 %v1353, %v1436
    %v1463 = vmul.f32 %v1357, %v1435
    %v1464 = vmul.f32 %v1357, %v1436
    %v1465 = vmul.f32 %v1361, %v1435
    %v1466 = vmul.f32 %v1361, %v1436
    %v1467 = vmul.f32 %v1365, %v1435
    %v1468 = vmul.f32 %v1365, %v1436
    %v1469 = vmul.f32 %v1369, %v1435
    %v1470 = vmul.f32 %v1369, %v1436
    %v1471 = vmul.f32 %v1373, %v1435
    %v1472 = vmul.f32 %v1373, %v1436
    %v1473 = vmul.f32 %v1377, %v1435
    %v1474 = vmul.f32 %v1377, %v1436
    %v1475 = vmul.f32 %v1381, %v1435
    %v1476 = vmul.f32 %v1381, %v1436
    %v1477 = vmul.f32 %v1385, %v1435
    %v1478 = vmul.f32 %v1385, %v1436
    %v1479 = vmul.f32 %v1389, %v1435
    %v1480 = vmul.f32 %v1389, %v1436
    %v1481 = vmul.f32 %v1393, %v1435
    %v1482 = vmul.f32 %v1393, %v1436
    %v1483 = vmul.f32 %v1397, %v1435
    %v1484 = vmul.f32 %v1397, %v1436
    %v1485 = vmul.f32 %v1401, %v1435
    %v1486 = vmul.f32 %v1401, %v1436
    %v1487 = vmul.f32 %v1405, %v1435
    %v1488 = vmul.f32 %v1405, %v1436
    %v1489 = vmul.f32 %v1409, %v1435
    %v1490 = vmul.f32 %v1409, %v1436
    %v1491 = vmul.f32 %v1413, %v1435
    %v1492 = vmul.f32 %v1413, %v1436
    %v1493 = vmul.f32 %v1417, %v1435
    %v1494 = vmul.f32 %v1417, %v1436
    %v1495 = vmul.f32 %v1421, %v1435
    %v1496 = vmul.f32 %v1421, %v1436
    %v1497 = vmul.f32 %v1425, %v1435
    %v1498 = vmul.f32 %v1425, %v1436
    %v1499 = vmul.f32 %v1429, %v1435
    %v1500 = vmul.f32 %v1429, %v1436
    %v1501 = vadd.f32 %v1239, %v1437
    %v1502 = vadd.f32 %v1240, %v1438
    %v1503 = vadd.f32 %v1241, %v1439
    %v1504 = vadd.f32 %v1242, %v1440
    %v1505 = vadd.f32 %v1243, %v1441
    %v1506 = vadd.f32 %v1244, %v1442
    %v1507 = vadd.f32 %v1245, %v1443
    %v1508 = vadd.f32 %v1246, %v1444
    %v1509 = vadd.f32 %v1247, %v1445
    %v1510 = vadd.f32 %v1248, %v1446
    %v1511 = vadd.f32 %v1249, %v1447
    %v1512 = vadd.f32 %v1250, %v1448
    %v1513 = vadd.f32 %v1251, %v1449
    %v1514 = vadd.f32 %v1252, %v1450
    %v1515 = vadd.f32 %v1253, %v1451
    %v1516 = vadd.f32 %v1254, %v1452
    %v1517 = vadd.f32 %v1255, %v1453
    %v1518 = vadd.f32 %v1256, %v1454
    %v1519 = vadd.f32 %v1257, %v1455
    %v1520 = vadd.f32 %v1258, %v1456
    %v1521 = vadd.f32 %v1259, %v1457
    %v1522 = vadd.f32 %v1260, %v1458
    %v1523 = vadd.f32 %v1261, %v1459
    %v1524 = vadd.f32 %v1262, %v1460
    %v1525 = vadd.f32 %v1263, %v1461
    %v1526 = vadd.f32 %v1264, %v1462
    %v1527 = vadd.f32 %v1265, %v1463
    %v1528 = vadd.f32 %v1266, %v1464
    %v1529 = vadd.f32 %v1267, %v1465
    %v1530 = vadd.f32 %v1268, %v1466
    %v1531 = vadd.f32 %v1269, %v1467
    %v1532 = vadd.f32 %v1270, %v1468
    %v1533 = vadd.f32 %v1271, %v1469
    %v1534 = vadd.f32 %v1272, %v1470
    %v1535 = vadd.f32 %v1273, %v1471
    %v1536 = vadd.f32 %v1274, %v1472
    %v1537 = vadd.f32 %v1275, %v1473
    %v1538 = vadd.f32 %v1276, %v1474
    %v1539 = vadd.f32 %v1277, %v1475
    %v1540 = vadd.f32 %v1278, %v1476
    %v1541 = vadd.f32 %v1279, %v1477
    %v1542 = vadd.f32 %v1280, %v1478
    %v1543 = vadd.f32 %v1281, %v1479
    %v1544 = vadd.f32 %v1282, %v1480
    %v1545 = vadd.f32 %v1283, %v1481
    %v1546 = vadd.f32 %v1284, %v1482
    %v1547 = vadd.f32 %v1285, %v1483
    %v1548 = vadd.f32 %v1286, %v1484
    %v1549 = vadd.f32 %v1287, %v1485
    %v1550 = vadd.f32 %v1288, %v1486
    %v1551 = vadd.f32 %v1289, %v1487
    %v1552 = vadd.f32 %v1290, %v1488
    %v1553 = vadd.f32 %v1291, %v1489
    %v1554 = vadd.f32 %v1292, %v1490
    %v1555 = vadd.f32 %v1293, %v1491
    %v1556 = vadd.f32 %v1294, %v1492
    %v1557 = vadd.f32 %v1295, %v1493
    %v1558 = vadd.f32 %v1296, %v1494
    %v1559 = vadd.f32 %v1297, %v1495
    %v1560 = vadd.f32 %v1298, %v1496
    %v1561 = vadd.f32 %v1299, %v1497
    %v1562 = vadd.f32 %v1300, %v1498
    %v1563 = vadd.f32 %v1301, %v1499
    %v1564 = vadd.f32 %v1302, %v1500
    %1565 = vset.pattern.permute.xlu0 2
    %1566 = vperm.xlu0 %1565, %v1039
    %v1567 = vpop.permute.xlu0 %1566
    %1569 = vset.pattern.permute.xlu0 2
    %1570 = vperm.xlu0 %1569, %v1040
    %v1571 = vpop.permute.xlu0 %1570
    %1573 = vset.pattern.permute.xlu0 2
    %1574 = vperm.xlu0 %1573, %v1041
    %v1575 = vpop.permute.xlu0 %1574
    %1577 = vset.pattern.permute.xlu0 2
    %1578 = vperm.xlu0 %1577, %v1042
    %v1579 = vpop.permute.xlu0 %1578
    %1581 = vset.pattern.permute.xlu0 2
    %1582 = vperm.xlu0 %1581, %v1043
    %v1583 = vpop.permute.xlu0 %1582
    %1585 = vset.pattern.permute.xlu0 2
    %1586 = vperm.xlu0 %1585, %v1044
    %v1587 = vpop.permute.xlu0 %1586
    %1589 = vset.pattern.permute.xlu0 2
    %1590 = vperm.xlu0 %1589, %v1045
    %v1591 = vpop.permute.xlu0 %1590
    %1593 = vset.pattern.permute.xlu0 2
    %1594 = vperm.xlu0 %1593, %v1046
    %v1595 = vpop.permute.xlu0 %1594
    %1597 = vset.pattern.permute.xlu0 2
    %1598 = vperm.xlu0 %1597, %v1047
    %v1599 = vpop.permute.xlu0 %1598
    %1601 = vset.pattern.permute.xlu0 2
    %1602 = vperm.xlu0 %1601, %v1048
    %v1603 = vpop.permute.xlu0 %1602
    %1605 = vset.pattern.permute.xlu0 2
    %1606 = vperm.xlu0 %1605, %v1049
    %v1607 = vpop.permute.xlu0 %1606
    %1609 = vset.pattern.permute.xlu0 2
    %1610 = vperm.xlu0 %1609, %v1050
    %v1611 = vpop.permute.xlu0 %1610
    %1613 = vset.pattern.permute.xlu0 2
    %1614 = vperm.xlu0 %1613, %v1051
    %v1615 = vpop.permute.xlu0 %1614
    %1617 = vset.pattern.permute.xlu0 2
    %1618 = vperm.xlu0 %1617, %v1052
    %v1619 = vpop.permute.xlu0 %1618
    %1621 = vset.pattern.permute.xlu0 2
    %1622 = vperm.xlu0 %1621, %v1053
    %v1623 = vpop.permute.xlu0 %1622
    %1625 = vset.pattern.permute.xlu0 2
    %1626 = vperm.xlu0 %1625, %v1054
    %v1627 = vpop.permute.xlu0 %1626
    %1629 = vset.pattern.permute.xlu0 2
    %1630 = vperm.xlu0 %1629, %v1055
    %v1631 = vpop.permute.xlu0 %1630
    %1633 = vset.pattern.permute.xlu0 2
    %1634 = vperm.xlu0 %1633, %v1056
    %v1635 = vpop.permute.xlu0 %1634
    %1637 = vset.pattern.permute.xlu0 2
    %1638 = vperm.xlu0 %1637, %v1057
    %v1639 = vpop.permute.xlu0 %1638
    %1641 = vset.pattern.permute.xlu0 2
    %1642 = vperm.xlu0 %1641, %v1058
    %v1643 = vpop.permute.xlu0 %1642
    %1645 = vset.pattern.permute.xlu0 2
    %1646 = vperm.xlu0 %1645, %v1059
    %v1647 = vpop.permute.xlu0 %1646
    %1649 = vset.pattern.permute.xlu0 2
    %1650 = vperm.xlu0 %1649, %v1060
    %v1651 = vpop.permute.xlu0 %1650
    %1653 = vset.pattern.permute.xlu0 2
    %1654 = vperm.xlu0 %1653, %v1061
    %v1655 = vpop.permute.xlu0 %1654
    %1657 = vset.pattern.permute.xlu0 2
    %1658 = vperm.xlu0 %1657, %v1062
    %v1659 = vpop.permute.xlu0 %1658
    %1661 = vset.pattern.permute.xlu0 2
    %1662 = vperm.xlu0 %1661, %v1063
    %v1663 = vpop.permute.xlu0 %1662
    %1665 = vset.pattern.permute.xlu0 2
    %1666 = vperm.xlu0 %1665, %v1064
    %v1667 = vpop.permute.xlu0 %1666
    %1669 = vset.pattern.permute.xlu0 2
    %1670 = vperm.xlu0 %1669, %v1065
    %v1671 = vpop.permute.xlu0 %1670
    %1673 = vset.pattern.permute.xlu0 2
    %1674 = vperm.xlu0 %1673, %v1066
    %v1675 = vpop.permute.xlu0 %1674
    %1677 = vset.pattern.permute.xlu0 2
    %1678 = vperm.xlu0 %1677, %v1067
    %v1679 = vpop.permute.xlu0 %1678
    %1681 = vset.pattern.permute.xlu0 2
    %1682 = vperm.xlu0 %1681, %v1068
    %v1683 = vpop.permute.xlu0 %1682
    %1685 = vset.pattern.permute.xlu0 2
    %1686 = vperm.xlu0 %1685, %v1069
    %v1687 = vpop.permute.xlu0 %1686
    %1689 = vset.pattern.permute.xlu0 2
    %1690 = vperm.xlu0 %1689, %v1070
    %v1691 = vpop.permute.xlu0 %1690
    %v1693 = vperm.slane %v1071, 2
    %v1694 = vperm.slane %v1071, 6
    %v1697 = vperm.slane %v1693, 2
    %v1698 = vperm.slane %v1694, 2
    %v1699 = vmul.f32 %v1567, %v1697
    %v1700 = vmul.f32 %v1567, %v1698
    %v1701 = vmul.f32 %v1571, %v1697
    %v1702 = vmul.f32 %v1571, %v1698
    %v1703 = vmul.f32 %v1575, %v1697
    %v1704 = vmul.f32 %v1575, %v1698
    %v1705 = vmul.f32 %v1579, %v1697
    %v1706 = vmul.f32 %v1579, %v1698
    %v1707 = vmul.f32 %v1583, %v1697
    %v1708 = vmul.f32 %v1583, %v1698
    %v1709 = vmul.f32 %v1587, %v1697
    %v1710 = vmul.f32 %v1587, %v1698
    %v1711 = vmul.f32 %v1591, %v1697
    %v1712 = vmul.f32 %v1591, %v1698
    %v1713 = vmul.f32 %v1595, %v1697
    %v1714 = vmul.f32 %v1595, %v1698
    %v1715 = vmul.f32 %v1599, %v1697
    %v1716 = vmul.f32 %v1599, %v1698
    %v1717 = vmul.f32 %v1603, %v1697
    %v1718 = vmul.f32 %v1603, %v1698
    %v1719 = vmul.f32 %v1607, %v1697
    %v1720 = vmul.f32 %v1607, %v1698
    %v1721 = vmul.f32 %v1611, %v1697
    %v1722 = vmul.f32 %v1611, %v1698
    %v1723 = vmul.f32 %v1615, %v1697
    %v1724 = vmul.f32 %v1615, %v1698
    %v1725 = vmul.f32 %v1619, %v1697
    %v1726 = vmul.f32 %v1619, %v1698
    %v1727 = vmul.f32 %v1623, %v1697
    %v1728 = vmul.f32 %v1623, %v1698
    %v1729 = vmul.f32 %v1627, %v1697
    %v1730 = vmul.f32 %v1627, %v1698
    %v1731 = vmul.f32 %v1631, %v1697
    %v1732 = vmul.f32 %v1631, %v1698
    %v1733 = vmul.f32 %v1635, %v1697
    %v1734 = vmul.f32 %v1635, %v1698
    %v1735 = vmul.f32 %v1639, %v1697
    %v1736 = vmul.f32 %v1639, %v1698
    %v1737 = vmul.f32 %v1643, %v1697
    %v1738 = vmul.f32 %v1643, %v1698
    %v1739 = vmul.f32 %v1647, %v1697
    %v1740 = vmul.f32 %v1647, %v1698
    %v1741 = vmul.f32 %v1651, %v1697
    %v1742 = vmul.f32 %v1651, %v1698
    %v1743 = vmul.f32 %v1655, %v1697
    %v1744 = vmul.f32 %v1655, %v1698
    %v1745 = vmul.f32 %v1659, %v1697
    %v1746 = vmul.f32 %v1659, %v1698
    %v1747 = vmul.f32 %v1663, %v1697
    %v1748 = vmul.f32 %v1663, %v1698
    %v1749 = vmul.f32 %v1667, %v1697
    %v1750 = vmul.f32 %v1667, %v1698
    %v1751 = vmul.f32 %v1671, %v1697
    %v1752 = vmul.f32 %v1671, %v1698
    %v1753 = vmul.f32 %v1675, %v1697
    %v1754 = vmul.f32 %v1675, %v1698
    %v1755 = vmul.f32 %v1679, %v1697
    %v1756 = vmul.f32 %v1679, %v1698
    %v1757 = vmul.f32 %v1683, %v1697
    %v1758 = vmul.f32 %v1683, %v1698
    %v1759 = vmul.f32 %v1687, %v1697
    %v1760 = vmul.f32 %v1687, %v1698
    %v1761 = vmul.f32 %v1691, %v1697
    %v1762 = vmul.f32 %v1691, %v1698
    %v1763 = vadd.f32 %v1501, %v1699
    %v1764 = vadd.f32 %v1502, %v1700
    %v1765 = vadd.f32 %v1503, %v1701
    %v1766 = vadd.f32 %v1504, %v1702
    %v1767 = vadd.f32 %v1505, %v1703
    %v1768 = vadd.f32 %v1506, %v1704
    %v1769 = vadd.f32 %v1507, %v1705
    %v1770 = vadd.f32 %v1508, %v1706
    %v1771 = vadd.f32 %v1509, %v1707
    %v1772 = vadd.f32 %v1510, %v1708
    %v1773 = vadd.f32 %v1511, %v1709
    %v1774 = vadd.f32 %v1512, %v1710
    %v1775 = vadd.f32 %v1513, %v1711
    %v1776 = vadd.f32 %v1514, %v1712
    %v1777 = vadd.f32 %v1515, %v1713
    %v1778 = vadd.f32 %v1516, %v1714
    %v1779 = vadd.f32 %v1517, %v1715
    %v1780 = vadd.f32 %v1518, %v1716
    %v1781 = vadd.f32 %v1519, %v1717
    %v1782 = vadd.f32 %v1520, %v1718
    %v1783 = vadd.f32 %v1521, %v1719
    %v1784 = vadd.f32 %v1522, %v1720
    %v1785 = vadd.f32 %v1523, %v1721
    %v1786 = vadd.f32 %v1524, %v1722
    %v1787 = vadd.f32 %v1525, %v1723
    %v1788 = vadd.f32 %v1526, %v1724
    %v1789 = vadd.f32 %v1527, %v1725
    %v1790 = vadd.f32 %v1528, %v1726
    %v1791 = vadd.f32 %v1529, %v1727
    %v1792 = vadd.f32 %v1530, %v1728
    %v1793 = vadd.f32 %v1531, %v1729
    %v1794 = vadd.f32 %v1532, %v1730
    %v1795 = vadd.f32 %v1533, %v1731
    %v1796 = vadd.f32 %v1534, %v1732
    %v1797 = vadd.f32 %v1535, %v1733
    %v1798 = vadd.f32 %v1536, %v1734
    %v1799 = vadd.f32 %v1537, %v1735
    %v1800 = vadd.f32 %v1538, %v1736
    %v1801 = vadd.f32 %v1539, %v1737
    %v1802 = vadd.f32 %v1540, %v1738
    %v1803 = vadd.f32 %v1541, %v1739
    %v1804 = vadd.f32 %v1542, %v1740
    %v1805 = vadd.f32 %v1543, %v1741
    %v1806 = vadd.f32 %v1544, %v1742
    %v1807 = vadd.f32 %v1545, %v1743
    %v1808 = vadd.f32 %v1546, %v1744
    %v1809 = vadd.f32 %v1547, %v1745
    %v1810 = vadd.f32 %v1548, %v1746
    %v1811 = vadd.f32 %v1549, %v1747
    %v1812 = vadd.f32 %v1550, %v1748
    %v1813 = vadd.f32 %v1551, %v1749
    %v1814 = vadd.f32 %v1552, %v1750
    %v1815 = vadd.f32 %v1553, %v1751
    %v1816 = vadd.f32 %v1554, %v1752
    %v1817 = vadd.f32 %v1555, %v1753
    %v1818 = vadd.f32 %v1556, %v1754
    %v1819 = vadd.f32 %v1557, %v1755
    %v1820 = vadd.f32 %v1558, %v1756
    %v1821 = vadd.f32 %v1559, %v1757
    %v1822 = vadd.f32 %v1560, %v1758
    %v1823 = vadd.f32 %v1561, %v1759
    %v1824 = vadd.f32 %v1562, %v1760
    %v1825 = vadd.f32 %v1563, %v1761
    %v1826 = vadd.f32 %v1564, %v1762
    %v1827 = vld [vmem:[%s5] sm:$0x3]
    %v1829 = vperm.slane %v1827, 0
    %v1830 = vperm.slane %v1827, 1
    %v1833 = vadd.f32 %v1763, %v1829
    %v1834 = vadd.f32 %v1764, %v1830
    %v1835 = vadd.f32 %v1765, %v1829
    %v1836 = vadd.f32 %v1766, %v1830
    %v1837 = vadd.f32 %v1767, %v1829
    %v1838 = vadd.f32 %v1768, %v1830
    %v1839 = vadd.f32 %v1769, %v1829
    %v1840 = vadd.f32 %v1770, %v1830
    %v1841 = vadd.f32 %v1771, %v1829
    %v1842 = vadd.f32 %v1772, %v1830
    %v1843 = vadd.f32 %v1773, %v1829
    %v1844 = vadd.f32 %v1774, %v1830
    %v1845 = vadd.f32 %v1775, %v1829
    %v1846 = vadd.f32 %v1776, %v1830
    %v1847 = vadd.f32 %v1777, %v1829
    %v1848 = vadd.f32 %v1778, %v1830
    %v1849 = vadd.f32 %v1779, %v1829
    %v1850 = vadd.f32 %v1780, %v1830
    %v1851 = vadd.f32 %v1781, %v1829
    %v1852 = vadd.f32 %v1782, %v1830
    %v1853 = vadd.f32 %v1783, %v1829
    %v1854 = vadd.f32 %v1784, %v1830
    %v1855 = vadd.f32 %v1785, %v1829
    %v1856 = vadd.f32 %v1786, %v1830
    %v1857 = vadd.f32 %v1787, %v1829
    %v1858 = vadd.f32 %v1788, %v1830
    %v1859 = vadd.f32 %v1789, %v1829
    %v1860 = vadd.f32 %v1790, %v1830
    %v1861 = vadd.f32 %v1791, %v1829
    %v1862 = vadd.f32 %v1792, %v1830
    %v1863 = vadd.f32 %v1793, %v1829
    %v1864 = vadd.f32 %v1794, %v1830
    %v1865 = vadd.f32 %v1795, %v1829
    %v1866 = vadd.f32 %v1796, %v1830
    %v1867 = vadd.f32 %v1797, %v1829
    %v1868 = vadd.f32 %v1798, %v1830
    %v1869 = vadd.f32 %v1799, %v1829
    %v1870 = vadd.f32 %v1800, %v1830
    %v1871 = vadd.f32 %v1801, %v1829
    %v1872 = vadd.f32 %v1802, %v1830
    %v1873 = vadd.f32 %v1803, %v1829
    %v1874 = vadd.f32 %v1804, %v1830
    %v1875 = vadd.f32 %v1805, %v1829
    %v1876 = vadd.f32 %v1806, %v1830
    %v1877 = vadd.f32 %v1807, %v1829
    %v1878 = vadd.f32 %v1808, %v1830
    %v1879 = vadd.f32 %v1809, %v1829
    %v1880 = vadd.f32 %v1810, %v1830
    %v1881 = vadd.f32 %v1811, %v1829
    %v1882 = vadd.f32 %v1812, %v1830
    %v1883 = vadd.f32 %v1813, %v1829
    %v1884 = vadd.f32 %v1814, %v1830
    %v1885 = vadd.f32 %v1815, %v1829
    %v1886 = vadd.f32 %v1816, %v1830
    %v1887 = vadd.f32 %v1817, %v1829
    %v1888 = vadd.f32 %v1818, %v1830
    %v1889 = vadd.f32 %v1819, %v1829
    %v1890 = vadd.f32 %v1820, %v1830
    %v1891 = vadd.f32 %v1821, %v1829
    %v1892 = vadd.f32 %v1822, %v1830
    %v1893 = vadd.f32 %v1823, %v1829
    %v1894 = vadd.f32 %v1824, %v1830
    %v1895 = vadd.f32 %v1825, %v1829
    %v1896 = vadd.f32 %v1826, %v1830
    %v1897 = vmax.f32 %v1833, 0.0
    %v1898 = vmax.f32 %v1834, 0.0
    %v1899 = vmax.f32 %v1835, 0.0
    %v1900 = vmax.f32 %v1836, 0.0
    %v1901 = vmax.f32 %v1837, 0.0
    %v1902 = vmax.f32 %v1838, 0.0
    %v1903 = vmax.f32 %v1839, 0.0
    %v1904 = vmax.f32 %v1840, 0.0
    %v1905 = vmax.f32 %v1841, 0.0
    %v1906 = vmax.f32 %v1842, 0.0
    %v1907 = vmax.f32 %v1843, 0.0
    %v1908 = vmax.f32 %v1844, 0.0
    %v1909 = vmax.f32 %v1845, 0.0
    %v1910 = vmax.f32 %v1846, 0.0
    %v1911 = vmax.f32 %v1847, 0.0
    %v1912 = vmax.f32 %v1848, 0.0
    %v1913 = vmax.f32 %v1849, 0.0
    %v1914 = vmax.f32 %v1850, 0.0
    %v1915 = vmax.f32 %v1851, 0.0
    %v1916 = vmax.f32 %v1852, 0.0
    %v1917 = vmax.f32 %v1853, 0.0
    %v1918 = vmax.f32 %v1854, 0.0
    %v1919 = vmax.f32 %v1855, 0.0
    %v1920 = vmax.f32 %v1856, 0.0
    %v1921 = vmax.f32 %v1857, 0.0
    %v1922 = vmax.f32 %v1858, 0.0
    %v1923 = vmax.f32 %v1859, 0.0
    %v1924 = vmax.f32 %v1860, 0.0
    %v1925 = vmax.f32 %v1861, 0.0
    %v1926 = vmax.f32 %v1862, 0.0
    %v1927 = vmax.f32 %v1863, 0.0
    %v1928 = vmax.f32 %v1864, 0.0
    %v1929 = vmax.f32 %v1865, 0.0
    %v1930 = vmax.f32 %v1866, 0.0
    %v1931 = vmax.f32 %v1867, 0.0
    %v1932 = vmax.f32 %v1868, 0.0
    %v1933 = vmax.f32 %v1869, 0.0
    %v1934 = vmax.f32 %v1870, 0.0
    %v1935 = vmax.f32 %v1871, 0.0
    %v1936 = vmax.f32 %v1872, 0.0
    %v1937 = vmax.f32 %v1873, 0.0
    %v1938 = vmax.f32 %v1874, 0.0
    %v1939 = vmax.f32 %v1875, 0.0
    %v1940 = vmax.f32 %v1876, 0.0
    %v1941 = vmax.f32 %v1877, 0.0
    %v1942 = vmax.f32 %v1878, 0.0
    %v1943 = vmax.f32 %v1879, 0.0
    %v1944 = vmax.f32 %v1880, 0.0
    %v1945 = vmax.f32 %v1881, 0.0
    %v1946 = vmax.f32 %v1882, 0.0
    %v1947 = vmax.f32 %v1883, 0.0
    %v1948 = vmax.f32 %v1884, 0.0
    %v1949 = vmax.f32 %v1885, 0.0
    %v1950 = vmax.f32 %v1886, 0.0
    %v1951 = vmax.f32 %v1887, 0.0
    %v1952 = vmax.f32 %v1888, 0.0
    %v1953 = vmax.f32 %v1889, 0.0
    %v1954 = vmax.f32 %v1890, 0.0
    %v1955 = vmax.f32 %v1891, 0.0
    %v1956 = vmax.f32 %v1892, 0.0
    %v1957 = vmax.f32 %v1893, 0.0
    %v1958 = vmax.f32 %v1894, 0.0
    %v1959 = vmax.f32 %v1895, 0.0
    %v1960 = vmax.f32 %v1896, 0.0
    %v1961 = vpack.c.bf16 %v1899, %v1897
    %v1962 = vpack.c.bf16 %v1900, %v1898
    %v1963 = vpack.c.bf16 %v1903, %v1901
    %v1964 = vpack.c.bf16 %v1904, %v1902
    %v1965 = vpack.c.bf16 %v1907, %v1905
    %v1966 = vpack.c.bf16 %v1908, %v1906
    %v1967 = vpack.c.bf16 %v1911, %v1909
    %v1968 = vpack.c.bf16 %v1912, %v1910
    %v1969 = vpack.c.bf16 %v1915, %v1913
    %v1970 = vpack.c.bf16 %v1916, %v1914
    %v1971 = vpack.c.bf16 %v1919, %v1917
    %v1972 = vpack.c.bf16 %v1920, %v1918
    %v1973 = vpack.c.bf16 %v1923, %v1921
    %v1974 = vpack.c.bf16 %v1924, %v1922
    %v1975 = vpack.c.bf16 %v1927, %v1925
    %v1976 = vpack.c.bf16 %v1928, %v1926
    %v1977 = vpack.c.bf16 %v1931, %v1929
    %v1978 = vpack.c.bf16 %v1932, %v1930
    %v1979 = vpack.c.bf16 %v1935, %v1933
    %v1980 = vpack.c.bf16 %v1936, %v1934
    %v1981 = vpack.c.bf16 %v1939, %v1937
    %v1982 = vpack.c.bf16 %v1940, %v1938
    %v1983 = vpack.c.bf16 %v1943, %v1941
    %v1984 = vpack.c.bf16 %v1944, %v1942
    %v1985 = vpack.c.bf16 %v1947, %v1945
    %v1986 = vpack.c.bf16 %v1948, %v1946
    %v1987 = vpack.c.bf16 %v1951, %v1949
    %v1988 = vpack.c.bf16 %v1952, %v1950
    %v1989 = vpack.c.bf16 %v1955, %v1953
    %v1990 = vpack.c.bf16 %v1956, %v1954
    %v1991 = vpack.c.bf16 %v1959, %v1957
    %v1992 = vpack.c.bf16 %v1960, %v1958
    %v1993 = vld [vmem:[%s6] sm:$0xff]
    %v1994 = vld [vmem:[%s6 + $0x8] sm:$0xff]
    %v1995 = vld [vmem:[%s6 + $0x10] sm:$0xff]
    %v1996 = vld [vmem:[%s6 + $0x18] sm:$0xff]
    %v1997 = vld [vmem:[%s6 + $0x20] sm:$0xff]
    %v1998 = vld [vmem:[%s6 + $0x28] sm:$0xff]
    %v1999 = vld [vmem:[%s6 + $0x30] sm:$0xff]
    %v2000 = vld [vmem:[%s6 + $0x38] sm:$0xff]
    %v2001 = vld [vmem:[%s6 + $0x40] sm:$0xff]
    %v2002 = vld [vmem:[%s6 + $0x48] sm:$0xff]
    %v2003 = vld [vmem:[%s6 + $0x50] sm:$0xff]
    %v2004 = vld [vmem:[%s6 + $0x58] sm:$0xff]
    %v2005 = vld [vmem:[%s6 + $0x60] sm:$0xff]
    %v2006 = vld [vmem:[%s6 + $0x68] sm:$0xff]
    %v2007 = vld [vmem:[%s6 + $0x70] sm:$0xff]
    %v2008 = vld [vmem:[%s6 + $0x78] sm:$0xff]
    %v2009 = vld [vmem:[%s6 + $0x80] sm:$0xff]
    %v2010 = vld [vmem:[%s6 + $0x88] sm:$0xff]
    %v2011 = vld [vmem:[%s6 + $0x90] sm:$0xff]
    %v2012 = vld [vmem:[%s6 + $0x98] sm:$0xff]
    %v2013 = vld [vmem:[%s6 + $0xa0] sm:$0xff]
    %v2014 = vld [vmem:[%s6 + $0xa8] sm:$0xff]
    %v2015 = vld [vmem:[%s6 + $0xb0] sm:$0xff]
    %v2016 = vld [vmem:[%s6 + $0xb8] sm:$0xff]
    %v2017 = vld [vmem:[%s6 + $0xc0] sm:$0xff]
    %v2018 = vld [vmem:[%s6 + $0xc8] sm:$0xff]
    %v2019 = vld [vmem:[%s6 + $0xd0] sm:$0xff]
    %v2020 = vld [vmem:[%s6 + $0xd8] sm:$0xff]
    %v2021 = vld [vmem:[%s6 + $0xe0] sm:$0xff]
    %v2022 = vld [vmem:[%s6 + $0xe8] sm:$0xff]
    %v2023 = vld [vmem:[%s6 + $0xf0] sm:$0xff]
    %v2024 = vld [vmem:[%s6 + $0xf8] sm:$0xff]
    %v2025 = vld [vmem:[%s6 + $0x100] sm:$0xff]
    %v2026 = vld [vmem:[%s6 + $0x108] sm:$0xff]
    %v2027 = vld [vmem:[%s6 + $0x110] sm:$0xff]
    %v2028 = vld [vmem:[%s6 + $0x118] sm:$0xff]
    %v2029 = vld [vmem:[%s6 + $0x120] sm:$0xff]
    %v2030 = vld [vmem:[%s6 + $0x128] sm:$0xff]
    %v2031 = vld [vmem:[%s6 + $0x130] sm:$0xff]
    %v2032 = vld [vmem:[%s6 + $0x138] sm:$0xff]
    %v2033 = vld [vmem:[%s6 + $0x140] sm:$0xff]
    %v2034 = vld [vmem:[%s6 + $0x148] sm:$0xff]
    %v2035 = vld [vmem:[%s6 + $0x150] sm:$0xff]
    %v2036 = vld [vmem:[%s6 + $0x158] sm:$0xff]
    %v2037 = vld [vmem:[%s6 + $0x160] sm:$0xff]
    %v2038 = vld [vmem:[%s6 + $0x168] sm:$0xff]
    %v2039 = vld [vmem:[%s6 + $0x170] sm:$0xff]
    %v2040 = vld [vmem:[%s6 + $0x178] sm:$0xff]
    %v2041 = vld [vmem:[%s6 + $0x180] sm:$0xff]
    %v2042 = vld [vmem:[%s6 + $0x188] sm:$0xff]
    %v2043 = vld [vmem:[%s6 + $0x190] sm:$0xff]
    %v2044 = vld [vmem:[%s6 + $0x198] sm:$0xff]
    %v2045 = vld [vmem:[%s6 + $0x1a0] sm:$0xff]
    %v2046 = vld [vmem:[%s6 + $0x1a8] sm:$0xff]
    %v2047 = vld [vmem:[%s6 + $0x1b0] sm:$0xff]
    %v2048 = vld [vmem:[%s6 + $0x1b8] sm:$0xff]
    %v2049 = vld [vmem:[%s6 + $0x1c0] sm:$0xff]
    %v2050 = vld [vmem:[%s6 + $0x1c8] sm:$0xff]
    %v2051 = vld [vmem:[%s6 + $0x1d0] sm:$0xff]
    %v2052 = vld [vmem:[%s6 + $0x1d8] sm:$0xff]
    %v2053 = vld [vmem:[%s6 + $0x1e0] sm:$0xff]
    %v2054 = vld [vmem:[%s6 + $0x1e8] sm:$0xff]
    %v2055 = vld [vmem:[%s6 + $0x1f0] sm:$0xff]
    %v2056 = vld [vmem:[%s6 + $0x1f8] sm:$0xff]
    %v2057 = vld [vmem:[%s6 + $0x200] sm:$0xff]
    %v2058 = vld [vmem:[%s6 + $0x208] sm:$0xff]
    %v2059 = vld [vmem:[%s6 + $0x210] sm:$0xff]
    %v2060 = vld [vmem:[%s6 + $0x218] sm:$0xff]
    %v2061 = vld [vmem:[%s6 + $0x220] sm:$0xff]
    %v2062 = vld [vmem:[%s6 + $0x228] sm:$0xff]
    %v2063 = vld [vmem:[%s6 + $0x230] sm:$0xff]
    %v2064 = vld [vmem:[%s6 + $0x238] sm:$0xff]
    %v2065 = vld [vmem:[%s6 + $0x240] sm:$0xff]
    %v2066 = vld [vmem:[%s6 + $0x248] sm:$0xff]
    %v2067 = vld [vmem:[%s6 + $0x250] sm:$0xff]
    %v2068 = vld [vmem:[%s6 + $0x258] sm:$0xff]
    %v2069 = vld [vmem:[%s6 + $0x260] sm:$0xff]
    %v2070 = vld [vmem:[%s6 + $0x268] sm:$0xff]
    %v2071 = vld [vmem:[%s6 + $0x270] sm:$0xff]
    %v2072 = vld [vmem:[%s6 + $0x278] sm:$0xff]
    %v2073 = vld [vmem:[%s6 + $0x280] sm:$0xff]
    %v2074 = vld [vmem:[%s6 + $0x288] sm:$0xff]
    %v2075 = vld [vmem:[%s6 + $0x290] sm:$0xff]
    %v2076 = vld [vmem:[%s6 + $0x298] sm:$0xff]
    %v2077 = vld [vmem:[%s6 + $0x2a0] sm:$0xff]
    %v2078 = vld [vmem:[%s6 + $0x2a8] sm:$0xff]
    %v2079 = vld [vmem:[%s6 + $0x2b0] sm:$0xff]
    %v2080 = vld [vmem:[%s6 + $0x2b8] sm:$0xff]
    %v2081 = vld [vmem:[%s6 + $0x2c0] sm:$0xff]
    %v2082 = vld [vmem:[%s6 + $0x2c8] sm:$0xff]
    %v2083 = vld [vmem:[%s6 + $0x2d0] sm:$0xff]
    %v2084 = vld [vmem:[%s6 + $0x2d8] sm:$0xff]
    %v2085 = vld [vmem:[%s6 + $0x2e0] sm:$0xff]
    %v2086 = vld [vmem:[%s6 + $0x2e8] sm:$0xff]
    %v2087 = vld [vmem:[%s6 + $0x2f0] sm:$0xff]
    %v2088 = vld [vmem:[%s6 + $0x2f8] sm:$0xff]
    %v2089 = vld [vmem:[%s7] sm:$0x3f]
    %v2091 = vperm.slane %v2089, 0
    %v2092 = vperm.slane %v2089, 1
    %v2093 = vperm.slane %v2089, 2
    %v2094 = vperm.slane %v2089, 3
    %v2095 = vperm.slane %v2089, 4
    %v2096 = vperm.slane %v2089, 5
    %v2199 = vunpack.c.l.b16 %v1993
    %v2200 = vunpack.c.h.b16 %v1993
    %v2201 = vunpack.c.l.b16 %v1994
    %v2202 = vunpack.c.h.b16 %v1994
    %v2203 = vunpack.c.l.b16 %v1995
    %v2204 = vunpack.c.h.b16 %v1995
    %v2205 = vunpack.c.l.b16 %v1996
    %v2206 = vunpack.c.h.b16 %v1996
    %v2207 = vunpack.c.l.b16 %v1997
    %v2208 = vunpack.c.h.b16 %v1997
    %v2209 = vunpack.c.l.b16 %v1998
    %v2210 = vunpack.c.h.b16 %v1998
    %v2211 = vunpack.c.l.b16 %v1999
    %v2212 = vunpack.c.h.b16 %v1999
    %v2213 = vunpack.c.l.b16 %v2000
    %v2214 = vunpack.c.h.b16 %v2000
    %v2215 = vunpack.c.l.b16 %v2001
    %v2216 = vunpack.c.h.b16 %v2001
    %v2217 = vunpack.c.l.b16 %v2002
    %v2218 = vunpack.c.h.b16 %v2002
    %v2219 = vunpack.c.l.b16 %v2003
    %v2220 = vunpack.c.h.b16 %v2003
    %v2221 = vunpack.c.l.b16 %v2004
    %v2222 = vunpack.c.h.b16 %v2004
    %v2223 = vunpack.c.l.b16 %v2005
    %v2224 = vunpack.c.h.b16 %v2005
    %v2225 = vunpack.c.l.b16 %v2006
    %v2226 = vunpack.c.h.b16 %v2006
    %v2227 = vunpack.c.l.b16 %v2007
    %v2228 = vunpack.c.h.b16 %v2007
    %v2229 = vunpack.c.l.b16 %v2008
    %v2230 = vunpack.c.h.b16 %v2008
    %v2231 = vunpack.c.l.b16 %v2009
    %v2232 = vunpack.c.h.b16 %v2009
    %v2233 = vunpack.c.l.b16 %v2010
    %v2234 = vunpack.c.h.b16 %v2010
    %v2235 = vunpack.c.l.b16 %v2011
    %v2236 = vunpack.c.h.b16 %v2011
    %v2237 = vunpack.c.l.b16 %v2012
    %v2238 = vunpack.c.h.b16 %v2012
    %v2239 = vunpack.c.l.b16 %v2013
    %v2240 = vunpack.c.h.b16 %v2013
    %v2241 = vunpack.c.l.b16 %v2014
    %v2242 = vunpack.c.h.b16 %v2014
    %v2243 = vunpack.c.l.b16 %v2015
    %v2244 = vunpack.c.h.b16 %v2015
    %v2245 = vunpack.c.l.b16 %v2016
    %v2246 = vunpack.c.h.b16 %v2016
    %v2247 = vunpack.c.l.b16 %v2017
    %v2248 = vunpack.c.h.b16 %v2017
    %v2249 = vunpack.c.l.b16 %v2018
    %v2250 = vunpack.c.h.b16 %v2018
    %v2251 = vunpack.c.l.b16 %v2019
    %v2252 = vunpack.c.h.b16 %v2019
    %v2253 = vunpack.c.l.b16 %v2020
    %v2254 = vunpack.c.h.b16 %v2020
    %v2255 = vunpack.c.l.b16 %v2021
    %v2256 = vunpack.c.h.b16 %v2021
    %v2257 = vunpack.c.l.b16 %v2022
    %v2258 = vunpack.c.h.b16 %v2022
    %v2259 = vunpack.c.l.b16 %v2023
    %v2260 = vunpack.c.h.b16 %v2023
    %v2261 = vunpack.c.l.b16 %v2024
    %v2262 = vunpack.c.h.b16 %v2024
    %v2263 = vunpack.c.l.b16 %v2025
    %v2264 = vunpack.c.h.b16 %v2025
    %v2265 = vunpack.c.l.b16 %v2026
    %v2266 = vunpack.c.h.b16 %v2026
    %v2267 = vunpack.c.l.b16 %v2027
    %v2268 = vunpack.c.h.b16 %v2027
    %v2269 = vunpack.c.l.b16 %v2028
    %v2270 = vunpack.c.h.b16 %v2028
    %v2271 = vunpack.c.l.b16 %v2029
    %v2272 = vunpack.c.h.b16 %v2029
    %v2273 = vunpack.c.l.b16 %v2030
    %v2274 = vunpack.c.h.b16 %v2030
    %v2275 = vunpack.c.l.b16 %v2031
    %v2276 = vunpack.c.h.b16 %v2031
    %v2277 = vunpack.c.l.b16 %v2032
    %v2278 = vunpack.c.h.b16 %v2032
    %v2279 = vunpack.c.l.b16 %v2033
    %v2280 = vunpack.c.h.b16 %v2033
    %v2281 = vunpack.c.l.b16 %v2034
    %v2282 = vunpack.c.h.b16 %v2034
    %v2283 = vunpack.c.l.b16 %v2035
    %v2284 = vunpack.c.h.b16 %v2035
    %v2285 = vunpack.c.l.b16 %v2036
    %v2286 = vunpack.c.h.b16 %v2036
    %v2287 = vunpack.c.l.b16 %v2037
    %v2288 = vunpack.c.h.b16 %v2037
    %v2289 = vunpack.c.l.b16 %v2038
    %v2290 = vunpack.c.h.b16 %v2038
    %v2291 = vunpack.c.l.b16 %v2039
    %v2292 = vunpack.c.h.b16 %v2039
    %v2293 = vunpack.c.l.b16 %v2040
    %v2294 = vunpack.c.h.b16 %v2040
    %v2295 = vunpack.c.l.b16 %v2041
    %v2296 = vunpack.c.h.b16 %v2041
    %v2297 = vunpack.c.l.b16 %v2042
    %v2298 = vunpack.c.h.b16 %v2042
    %v2299 = vunpack.c.l.b16 %v2043
    %v2300 = vunpack.c.h.b16 %v2043
    %v2301 = vunpack.c.l.b16 %v2044
    %v2302 = vunpack.c.h.b16 %v2044
    %v2303 = vunpack.c.l.b16 %v2045
    %v2304 = vunpack.c.h.b16 %v2045
    %v2305 = vunpack.c.l.b16 %v2046
    %v2306 = vunpack.c.h.b16 %v2046
    %v2307 = vunpack.c.l.b16 %v2047
    %v2308 = vunpack.c.h.b16 %v2047
    %v2309 = vunpack.c.l.b16 %v2048
    %v2310 = vunpack.c.h.b16 %v2048
    %v2311 = vunpack.c.l.b16 %v2049
    %v2312 = vunpack.c.h.b16 %v2049
    %v2313 = vunpack.c.l.b16 %v2050
    %v2314 = vunpack.c.h.b16 %v2050
    %v2315 = vunpack.c.l.b16 %v2051
    %v2316 = vunpack.c.h.b16 %v2051
    %v2317 = vunpack.c.l.b16 %v2052
    %v2318 = vunpack.c.h.b16 %v2052
    %v2319 = vunpack.c.l.b16 %v2053
    %v2320 = vunpack.c.h.b16 %v2053
    %v2321 = vunpack.c.l.b16 %v2054
    %v2322 = vunpack.c.h.b16 %v2054
    %v2323 = vunpack.c.l.b16 %v2055
    %v2324 = vunpack.c.h.b16 %v2055
    %v2325 = vunpack.c.l.b16 %v2056
    %v2326 = vunpack.c.h.b16 %v2056
    %v2327 = vunpack.c.l.b16 %v2057
    %v2328 = vunpack.c.h.b16 %v2057
    %v2329 = vunpack.c.l.b16 %v2058
    %v2330 = vunpack.c.h.b16 %v2058
    %v2331 = vunpack.c.l.b16 %v2059
    %v2332 = vunpack.c.h.b16 %v2059
    %v2333 = vunpack.c.l.b16 %v2060
    %v2334 = vunpack.c.h.b16 %v2060
    %v2335 = vunpack.c.l.b16 %v2061
    %v2336 = vunpack.c.h.b16 %v2061
    %v2337 = vunpack.c.l.b16 %v2062
    %v2338 = vunpack.c.h.b16 %v2062
    %v2339 = vunpack.c.l.b16 %v2063
    %v2340 = vunpack.c.h.b16 %v2063
    %v2341 = vunpack.c.l.b16 %v2064
    %v2342 = vunpack.c.h.b16 %v2064
    %v2343 = vunpack.c.l.b16 %v2065
    %v2344 = vunpack.c.h.b16 %v2065
    %v2345 = vunpack.c.l.b16 %v2066
    %v2346 = vunpack.c.h.b16 %v2066
    %v2347 = vunpack.c.l.b16 %v2067
    %v2348 = vunpack.c.h.b16 %v2067
    %v2349 = vunpack.c.l.b16 %v2068
    %v2350 = vunpack.c.h.b16 %v2068
    %v2351 = vunpack.c.l.b16 %v2069
    %v2352 = vunpack.c.h.b16 %v2069
    %v2353 = vunpack.c.l.b16 %v2070
    %v2354 = vunpack.c.h.b16 %v2070
    %v2355 = vunpack.c.l.b16 %v2071
    %v2356 = vunpack.c.h.b16 %v2071
    %v2357 = vunpack.c.l.b16 %v2072
    %v2358 = vunpack.c.h.b16 %v2072
    %v2359 = vunpack.c.l.b16 %v2073
    %v2360 = vunpack.c.h.b16 %v2073
    %v2361 = vunpack.c.l.b16 %v2074
    %v2362 = vunpack.c.h.b16 %v2074
    %v2363 = vunpack.c.l.b16 %v2075
    %v2364 = vunpack.c.h.b16 %v2075
    %v2365 = vunpack.c.l.b16 %v2076
    %v2366 = vunpack.c.h.b16 %v2076
    %v2367 = vunpack.c.l.b16 %v2077
    %v2368 = vunpack.c.h.b16 %v2077
    %v2369 = vunpack.c.l.b16 %v2078
    %v2370 = vunpack.c.h.b16 %v2078
    %v2371 = vunpack.c.l.b16 %v2079
    %v2372 = vunpack.c.h.b16 %v2079
    %v2373 = vunpack.c.l.b16 %v2080
    %v2374 = vunpack.c.h.b16 %v2080
    %v2375 = vunpack.c.l.b16 %v2081
    %v2376 = vunpack.c.h.b16 %v2081
    %v2377 = vunpack.c.l.b16 %v2082
    %v2378 = vunpack.c.h.b16 %v2082
    %v2379 = vunpack.c.l.b16 %v2083
    %v2380 = vunpack.c.h.b16 %v2083
    %v2381 = vunpack.c.l.b16 %v2084
    %v2382 = vunpack.c.h.b16 %v2084
    %v2383 = vunpack.c.l.b16 %v2085
    %v2384 = vunpack.c.h.b16 %v2085
    %v2385 = vunpack.c.l.b16 %v2086
    %v2386 = vunpack.c.h.b16 %v2086
    %v2387 = vunpack.c.l.b16 %v2087
    %v2388 = vunpack.c.h.b16 %v2087
    %v2389 = vunpack.c.l.b16 %v2088
    %v2390 = vunpack.c.h.b16 %v2088
    %v2391 = vpack.c.b16 %v2205, %v2199
    %v2392 = vpack.c.b16 %v2206, %v2200
    %v2393 = vpack.c.b16 %v2207, %v2201
    %v2394 = vpack.c.b16 %v2208, %v2202
    %v2395 = vpack.c.b16 %v2209, %v2203
    %v2396 = vpack.c.b16 %v2210, %v2204
    %v2397 = vpack.c.b16 %v2217, %v2211
    %v2398 = vpack.c.b16 %v2218, %v2212
    %v2399 = vpack.c.b16 %v2219, %v2213
    %v2400 = vpack.c.b16 %v2220, %v2214
    %v2401 = vpack.c.b16 %v2221, %v2215
    %v2402 = vpack.c.b16 %v2222, %v2216
    %v2403 = vpack.c.b16 %v2229, %v2223
    %v2404 = vpack.c.b16 %v2230, %v2224
    %v2405 = vpack.c.b16 %v2231, %v2225
    %v2406 = vpack.c.b16 %v2232, %v2226
    %v2407 = vpack.c.b16 %v2233, %v2227
    %v2408 = vpack.c.b16 %v2234, %v2228
    %v2409 = vpack.c.b16 %v2241, %v2235
    %v2410 = vpack.c.b16 %v2242, %v2236
    %v2411 = vpack.c.b16 %v2243, %v2237
    %v2412 = vpack.c.b16 %v2244, %v2238
    %v2413 = vpack.c.b16 %v2245, %v2239
    %v2414 = vpack.c.b16 %v2246, %v2240
    %v2415 = vpack.c.b16 %v2253, %v2247
    %v2416 = vpack.c.b16 %v2254, %v2248
    %v2417 = vpack.c.b16 %v2255, %v2249
    %v2418 = vpack.c.b16 %v2256, %v2250
    %v2419 = vpack.c.b16 %v2257, %v2251
    %v2420 = vpack.c.b16 %v2258, %v2252
    %v2421 = vpack.c.b16 %v2265, %v2259
    %v2422 = vpack.c.b16 %v2266, %v2260
    %v2423 = vpack.c.b16 %v2267, %v2261
    %v2424 = vpack.c.b16 %v2268, %v2262
    %v2425 = vpack.c.b16 %v2269, %v2263
    %v2426 = vpack.c.b16 %v2270, %v2264
    %v2427 = vpack.c.b16 %v2277, %v2271
    %v2428 = vpack.c.b16 %v2278, %v2272
    %v2429 = vpack.c.b16 %v2279, %v2273
    %v2430 = vpack.c.b16 %v2280, %v2274
    %v2431 = vpack.c.b16 %v2281, %v2275
    %v2432 = vpack.c.b16 %v2282, %v2276
    %v2433 = vpack.c.b16 %v2289, %v2283
    %v2434 = vpack.c.b16 %v2290, %v2284
    %v2435 = vpack.c.b16 %v2291, %v2285
    %v2436 = vpack.c.b16 %v2292, %v2286
    %v2437 = vpack.c.b16 %v2293, %v2287
    %v2438 = vpack.c.b16 %v2294, %v2288
    %v2439 = vpack.c.b16 %v2301, %v2295
    %v2440 = vpack.c.b16 %v2302, %v2296
    %v2441 = vpack.c.b16 %v2303, %v2297
    %v2442 = vpack.c.b16 %v2304, %v2298
    %v2443 = vpack.c.b16 %v2305, %v2299
    %v2444 = vpack.c.b16 %v2306, %v2300
    %v2445 = vpack.c.b16 %v2313, %v2307
    %v2446 = vpack.c.b16 %v2314, %v2308
    %v2447 = vpack.c.b16 %v2315, %v2309
    %v2448 = vpack.c.b16 %v2316, %v2310
    %v2449 = vpack.c.b16 %v2317, %v2311
    %v2450 = vpack.c.b16 %v2318, %v2312
    %v2451 = vpack.c.b16 %v2325, %v2319
    %v2452 = vpack.c.b16 %v2326, %v2320
    %v2453 = vpack.c.b16 %v2327, %v2321
    %v2454 = vpack.c.b16 %v2328, %v2322
    %v2455 = vpack.c.b16 %v2329, %v2323
    %v2456 = vpack.c.b16 %v2330, %v2324
    %v2457 = vpack.c.b16 %v2337, %v2331
    %v2458 = vpack.c.b16 %v2338, %v2332
    %v2459 = vpack.c.b16 %v2339, %v2333
    %v2460 = vpack.c.b16 %v2340, %v2334
    %v2461 = vpack.c.b16 %v2341, %v2335
    %v2462 = vpack.c.b16 %v2342, %v2336
    %v2463 = vpack.c.b16 %v2349, %v2343
    %v2464 = vpack.c.b16 %v2350, %v2344
    %v2465 = vpack.c.b16 %v2351, %v2345
    %v2466 = vpack.c.b16 %v2352, %v2346
    %v2467 = vpack.c.b16 %v2353, %v2347
    %v2468 = vpack.c.b16 %v2354, %v2348
    %v2469 = vpack.c.b16 %v2361, %v2355
    %v2470 = vpack.c.b16 %v2362, %v2356
    %v2471 = vpack.c.b16 %v2363, %v2357
    %v2472 = vpack.c.b16 %v2364, %v2358
    %v2473 = vpack.c.b16 %v2365, %v2359
    %v2474 = vpack.c.b16 %v2366, %v2360
    %v2475 = vpack.c.b16 %v2373, %v2367
    %v2476 = vpack.c.b16 %v2374, %v2368
    %v2477 = vpack.c.b16 %v2375, %v2369
    %v2478 = vpack.c.b16 %v2376, %v2370
    %v2479 = vpack.c.b16 %v2377, %v2371
    %v2480 = vpack.c.b16 %v2378, %v2372
    %v2481 = vpack.c.b16 %v2385, %v2379
    %v2482 = vpack.c.b16 %v2386, %v2380
    %v2483 = vpack.c.b16 %v2387, %v2381
    %v2484 = vpack.c.b16 %v2388, %v2382
    %v2485 = vpack.c.b16 %v2389, %v2383
    %v2486 = vpack.c.b16 %v2390, %v2384
    %2583 = vmatpush.bf16.msra.mxu0 %v2433
    %2584 = vmatpush.bf16.msra.mxu0 %v2427
    %2585 = vmatpush.bf16.msra.mxu0 %v2421
    %2586 = vmatpush.bf16.msra.mxu0 %v2415
    %2587 = vmatpush.bf16.msra.mxu0 %v2409
    %2588 = vmatpush.bf16.msra.mxu0 %v2403
    %2589 = vmatpush.bf16.msra.mxu0 %v2397
    %2590 = vmatpush.bf16.msra.mxu0 %v2391
    %2591 = vmatmul.bf16.gmra.mxu0 %v1961
    %v2592 = vpop.f32.mrf.mxu0
    %v2593 = vadd.f32 %v2091, %v2592
    %v2594 = vpop.f32.mrf.mxu0
    %v2595 = vadd.f32 %v2091, %v2594
    %2596 = vmatmul.bf16.gmra.mxu0 %v1963
    %v2597 = vpop.f32.mrf.mxu0
    %v2598 = vadd.f32 %v2091, %v2597
    %v2599 = vpop.f32.mrf.mxu0
    %v2600 = vadd.f32 %v2091, %v2599
    %2601 = vmatmul.bf16.gmra.mxu0 %v1965
    %v2602 = vpop.f32.mrf.mxu0
    %v2603 = vadd.f32 %v2091, %v2602
    %v2604 = vpop.f32.mrf.mxu0
    %v2605 = vadd.f32 %v2091, %v2604
    %2606 = vmatmul.bf16.gmra.mxu0 %v1967
    %v2607 = vpop.f32.mrf.mxu0
    %v2608 = vadd.f32 %v2091, %v2607
    %v2609 = vpop.f32.mrf.mxu0
    %v2610 = vadd.f32 %v2091, %v2609
    %2611 = vmatmul.bf16.gmra.mxu0 %v1969
    %v2612 = vpop.f32.mrf.mxu0
    %v2613 = vadd.f32 %v2091, %v2612
    %v2614 = vpop.f32.mrf.mxu0
    %v2615 = vadd.f32 %v2091, %v2614
    %2616 = vmatmul.bf16.gmra.mxu0 %v1971
    %v2617 = vpop.f32.mrf.mxu0
    %v2618 = vadd.f32 %v2091, %v2617
    %v2619 = vpop.f32.mrf.mxu0
    %v2620 = vadd.f32 %v2091, %v2619
    %2621 = vmatmul.bf16.gmra.mxu0 %v1973
    %v2622 = vpop.f32.mrf.mxu0
    %v2623 = vadd.f32 %v2091, %v2622
    %v2624 = vpop.f32.mrf.mxu0
    %v2625 = vadd.f32 %v2091, %v2624
    %2626 = vmatmul.bf16.gmra.mxu0 %v1975
    %v2627 = vpop.f32.mrf.mxu0
    %v2628 = vadd.f32 %v2091, %v2627
    %v2629 = vpop.f32.mrf.mxu0
    %v2630 = vadd.f32 %v2091, %v2629
    %2631 = vmatmul.bf16.gmra.mxu0 %v1977
    %v2632 = vpop.f32.mrf.mxu0
    %v2633 = vadd.f32 %v2091, %v2632
    %v2634 = vpop.f32.mrf.mxu0
    %v2635 = vadd.f32 %v2091, %v2634
    %2636 = vmatmul.bf16.gmra.mxu0 %v1979
    %v2637 = vpop.f32.mrf.mxu0
    %v2638 = vadd.f32 %v2091, %v2637
    %v2639 = vpop.f32.mrf.mxu0
    %v2640 = vadd.f32 %v2091, %v2639
    %2641 = vmatmul.bf16.gmra.mxu0 %v1981
    %v2642 = vpop.f32.mrf.mxu0
    %v2643 = vadd.f32 %v2091, %v2642
    %v2644 = vpop.f32.mrf.mxu0
    %v2645 = vadd.f32 %v2091, %v2644
    %2646 = vmatmul.bf16.gmra.mxu0 %v1983
    %v2647 = vpop.f32.mrf.mxu0
    %v2648 = vadd.f32 %v2091, %v2647
    %v2649 = vpop.f32.mrf.mxu0
    %v2650 = vadd.f32 %v2091, %v2649
    %2651 = vmatmul.bf16.gmra.mxu0 %v1985
    %v2652 = vpop.f32.mrf.mxu0
    %v2653 = vadd.f32 %v2091, %v2652
    %v2654 = vpop.f32.mrf.mxu0
    %v2655 = vadd.f32 %v2091, %v2654
    %2656 = vmatmul.bf16.gmra.mxu0 %v1987
    %v2657 = vpop.f32.mrf.mxu0
    %v2658 = vadd.f32 %v2091, %v2657
    %v2659 = vpop.f32.mrf.mxu0
    %v2660 = vadd.f32 %v2091, %v2659
    %2661 = vmatmul.bf16.gmra.mxu0 %v1989
    %v2662 = vpop.f32.mrf.mxu0
    %v2663 = vadd.f32 %v2091, %v2662
    %v2664 = vpop.f32.mrf.mxu0
    %v2665 = vadd.f32 %v2091, %v2664
    %2666 = vmatmul.bf16.gmra.mxu0 %v1991
    %v2667 = vpop.f32.mrf.mxu0
    %v2668 = vadd.f32 %v2091, %v2667
    %v2669 = vpop.f32.mrf.mxu0
    %v2670 = vadd.f32 %v2091, %v2669
    %2671 = vdwg.mxu0
    %2672 = vmatpush.bf16.msra.mxu0 %v2481
    %2673 = vmatpush.bf16.msra.mxu0 %v2475
    %2674 = vmatpush.bf16.msra.mxu0 %v2469
    %2675 = vmatpush.bf16.msra.mxu0 %v2463
    %2676 = vmatpush.bf16.msra.mxu0 %v2457
    %2677 = vmatpush.bf16.msra.mxu0 %v2451
    %2678 = vmatpush.bf16.msra.mxu0 %v2445
    %2679 = vmatpush.bf16.msra.mxu0 %v2439
    %2680 = vmatmul.bf16.gmra.mxu0 %v1962
    %v2681 = vpop.f32.mrf.mxu0
    %v2682 = vadd.f32 %v2593, %v2681
    %v2683 = vpop.f32.mrf.mxu0
    %v2684 = vadd.f32 %v2595, %v2683
    %2685 = vmatmul.bf16.gmra.mxu0 %v1964
    %v2686 = vpop.f32.mrf.mxu0
    %v2687 = vadd.f32 %v2598, %v2686
    %v2688 = vpop.f32.mrf.mxu0
    %v2689 = vadd.f32 %v2600, %v2688
    %2690 = vmatmul.bf16.gmra.mxu0 %v1966
    %v2691 = vpop.f32.mrf.mxu0
    %v2692 = vadd.f32 %v2603, %v2691
    %v2693 = vpop.f32.mrf.mxu0
    %v2694 = vadd.f32 %v2605, %v2693
    %2695 = vmatmul.bf16.gmra.mxu0 %v1968
    %v2696 = vpop.f32.mrf.mxu0
    %v2697 = vadd.f32 %v2608, %v2696
    %v2698 = vpop.f32.mrf.mxu0
    %v2699 = vadd.f32 %v2610, %v2698
    %2700 = vmatmul.bf16.gmra.mxu0 %v1970
    %v2701 = vpop.f32.mrf.mxu0
    %v2702 = vadd.f32 %v2613, %v2701
    %v2703 = vpop.f32.mrf.mxu0
    %v2704 = vadd.f32 %v2615, %v2703
    %2705 = vmatmul.bf16.gmra.mxu0 %v1972
    %v2706 = vpop.f32.mrf.mxu0
    %v2707 = vadd.f32 %v2618, %v2706
    %v2708 = vpop.f32.mrf.mxu0
    %v2709 = vadd.f32 %v2620, %v2708
    %2710 = vmatmul.bf16.gmra.mxu0 %v1974
    %v2711 = vpop.f32.mrf.mxu0
    %v2712 = vadd.f32 %v2623, %v2711
    %v2713 = vpop.f32.mrf.mxu0
    %v2714 = vadd.f32 %v2625, %v2713
    %2715 = vmatmul.bf16.gmra.mxu0 %v1976
    %v2716 = vpop.f32.mrf.mxu0
    %v2717 = vadd.f32 %v2628, %v2716
    %v2718 = vpop.f32.mrf.mxu0
    %v2719 = vadd.f32 %v2630, %v2718
    %2720 = vmatmul.bf16.gmra.mxu0 %v1978
    %v2721 = vpop.f32.mrf.mxu0
    %v2722 = vadd.f32 %v2633, %v2721
    %v2723 = vpop.f32.mrf.mxu0
    %v2724 = vadd.f32 %v2635, %v2723
    %2725 = vmatmul.bf16.gmra.mxu0 %v1980
    %v2726 = vpop.f32.mrf.mxu0
    %v2727 = vadd.f32 %v2638, %v2726
    %v2728 = vpop.f32.mrf.mxu0
    %v2729 = vadd.f32 %v2640, %v2728
    %2730 = vmatmul.bf16.gmra.mxu0 %v1982
    %v2731 = vpop.f32.mrf.mxu0
    %v2732 = vadd.f32 %v2643, %v2731
    %v2733 = vpop.f32.mrf.mxu0
    %v2734 = vadd.f32 %v2645, %v2733
    %2735 = vmatmul.bf16.gmra.mxu0 %v1984
    %v2736 = vpop.f32.mrf.mxu0
    %v2737 = vadd.f32 %v2648, %v2736
    %v2738 = vpop.f32.mrf.mxu0
    %v2739 = vadd.f32 %v2650, %v2738
    %2740 = vmatmul.bf16.gmra.mxu0 %v1986
    %v2741 = vpop.f32.mrf.mxu0
    %v2742 = vadd.f32 %v2653, %v2741
    %v2743 = vpop.f32.mrf.mxu0
    %v2744 = vadd.f32 %v2655, %v2743
    %2745 = vmatmul.bf16.gmra.mxu0 %v1988
    %v2746 = vpop.f32.mrf.mxu0
    %v2747 = vadd.f32 %v2658, %v2746
    %v2748 = vpop.f32.mrf.mxu0
    %v2749 = vadd.f32 %v2660, %v2748
    %2750 = vmatmul.bf16.gmra.mxu0 %v1990
    %v2751 = vpop.f32.mrf.mxu0
    %v2752 = vadd.f32 %v2663, %v2751
    %v2753 = vpop.f32.mrf.mxu0
    %v2754 = vadd.f32 %v2665, %v2753
    %2755 = vmatmul.bf16.gmra.mxu0 %v1992
    %v2756 = vpop.f32.mrf.mxu0
    %v2757 = vadd.f32 %v2668, %v2756
    %v2758 = vpop.f32.mrf.mxu0
    %v2759 = vadd.f32 %v2670, %v2758
    %2760 = vdwg.mxu0
    %2761 = vmatpush.bf16.msra.mxu0 %v2434
    %2762 = vmatpush.bf16.msra.mxu0 %v2428
    %2763 = vmatpush.bf16.msra.mxu0 %v2422
    %2764 = vmatpush.bf16.msra.mxu0 %v2416
    %2765 = vmatpush.bf16.msra.mxu0 %v2410
    %2766 = vmatpush.bf16.msra.mxu0 %v2404
    %2767 = vmatpush.bf16.msra.mxu0 %v2398
    %2768 = vmatpush.bf16.msra.mxu0 %v2392
    %2769 = vmatmul.bf16.gmra.mxu0 %v1961
    %v2770 = vpop.f32.mrf.mxu0
    %v2771 = vadd.f32 %v2092, %v2770
    %v2772 = vpop.f32.mrf.mxu0
    %v2773 = vadd.f32 %v2092, %v2772
    %2774 = vmatmul.bf16.gmra.mxu0 %v1963
    %v2775 = vpop.f32.mrf.mxu0
    %v2776 = vadd.f32 %v2092, %v2775
    %v2777 = vpop.f32.mrf.mxu0
    %v2778 = vadd.f32 %v2092, %v2777
    %2779 = vmatmul.bf16.gmra.mxu0 %v1965
    %v2780 = vpop.f32.mrf.mxu0
    %v2781 = vadd.f32 %v2092, %v2780
    %v2782 = vpop.f32.mrf.mxu0
    %v2783 = vadd.f32 %v2092, %v2782
    %2784 = vmatmul.bf16.gmra.mxu0 %v1967
    %v2785 = vpop.f32.mrf.mxu0
    %v2786 = vadd.f32 %v2092, %v2785
    %v2787 = vpop.f32.mrf.mxu0
    %v2788 = vadd.f32 %v2092, %v2787
    %2789 = vmatmul.bf16.gmra.mxu0 %v1969
    %v2790 = vpop.f32.mrf.mxu0
    %v2791 = vadd.f32 %v2092, %v2790
    %v2792 = vpop.f32.mrf.mxu0
    %v2793 = vadd.f32 %v2092, %v2792
    %2794 = vmatmul.bf16.gmra.mxu0 %v1971
    %v2795 = vpop.f32.mrf.mxu0
    %v2796 = vadd.f32 %v2092, %v2795
    %v2797 = vpop.f32.mrf.mxu0
    %v2798 = vadd.f32 %v2092, %v2797
    %2799 = vmatmul.bf16.gmra.mxu0 %v1973
    %v2800 = vpop.f32.mrf.mxu0
    %v2801 = vadd.f32 %v2092, %v2800
    %v2802 = vpop.f32.mrf.mxu0
    %v2803 = vadd.f32 %v2092, %v2802
    %2804 = vmatmul.bf16.gmra.mxu0 %v1975
    %v2805 = vpop.f32.mrf.mxu0
    %v2806 = vadd.f32 %v2092, %v2805
    %v2807 = vpop.f32.mrf.mxu0
    %v2808 = vadd.f32 %v2092, %v2807
    %2809 = vmatmul.bf16.gmra.mxu0 %v1977
    %v2810 = vpop.f32.mrf.mxu0
    %v2811 = vadd.f32 %v2092, %v2810
    %v2812 = vpop.f32.mrf.mxu0
    %v2813 = vadd.f32 %v2092, %v2812
    %2814 = vmatmul.bf16.gmra.mxu0 %v1979
    %v2815 = vpop.f32.mrf.mxu0
    %v2816 = vadd.f32 %v2092, %v2815
    %v2817 = vpop.f32.mrf.mxu0
    %v2818 = vadd.f32 %v2092, %v2817
    %2819 = vmatmul.bf16.gmra.mxu0 %v1981
    %v2820 = vpop.f32.mrf.mxu0
    %v2821 = vadd.f32 %v2092, %v2820
    %v2822 = vpop.f32.mrf.mxu0
    %v2823 = vadd.f32 %v2092, %v2822
    %2824 = vmatmul.bf16.gmra.mxu0 %v1983
    %v2825 = vpop.f32.mrf.mxu0
    %v2826 = vadd.f32 %v2092, %v2825
    %v2827 = vpop.f32.mrf.mxu0
    %v2828 = vadd.f32 %v2092, %v2827
    %2829 = vmatmul.bf16.gmra.mxu0 %v1985
    %v2830 = vpop.f32.mrf.mxu0
    %v2831 = vadd.f32 %v2092, %v2830
    %v2832 = vpop.f32.mrf.mxu0
    %v2833 = vadd.f32 %v2092, %v2832
    %2834 = vmatmul.bf16.gmra.mxu0 %v1987
    %v2835 = vpop.f32.mrf.mxu0
    %v2836 = vadd.f32 %v2092, %v2835
    %v2837 = vpop.f32.mrf.mxu0
    %v2838 = vadd.f32 %v2092, %v2837
    %2839 = vmatmul.bf16.gmra.mxu0 %v1989
    %v2840 = vpop.f32.mrf.mxu0
    %v2841 = vadd.f32 %v2092, %v2840
    %v2842 = vpop.f32.mrf.mxu0
    %v2843 = vadd.f32 %v2092, %v2842
    %2844 = vmatmul.bf16.gmra.mxu0 %v1991
    %v2845 = vpop.f32.mrf.mxu0
    %v2846 = vadd.f32 %v2092, %v2845
    %v2847 = vpop.f32.mrf.mxu0
    %v2848 = vadd.f32 %v2092, %v2847
    %2849 = vdwg.mxu0
    %2850 = vmatpush.bf16.msra.mxu0 %v2482
    %2851 = vmatpush.bf16.msra.mxu0 %v2476
    %2852 = vmatpush.bf16.msra.mxu0 %v2470
    %2853 = vmatpush.bf16.msra.mxu0 %v2464
    %2854 = vmatpush.bf16.msra.mxu0 %v2458
    %2855 = vmatpush.bf16.msra.mxu0 %v2452
    %2856 = vmatpush.bf16.msra.mxu0 %v2446
    %2857 = vmatpush.bf16.msra.mxu0 %v2440
    %2858 = vmatmul.bf16.gmra.mxu0 %v1962
    %v2859 = vpop.f32.mrf.mxu0
    %v2860 = vadd.f32 %v2771, %v2859
    %v2861 = vpop.f32.mrf.mxu0
    %v2862 = vadd.f32 %v2773, %v2861
    %2863 = vmatmul.bf16.gmra.mxu0 %v1964
    %v2864 = vpop.f32.mrf.mxu0
    %v2865 = vadd.f32 %v2776, %v2864
    %v2866 = vpop.f32.mrf.mxu0
    %v2867 = vadd.f32 %v2778, %v2866
    %2868 = vmatmul.bf16.gmra.mxu0 %v1966
    %v2869 = vpop.f32.mrf.mxu0
    %v2870 = vadd.f32 %v2781, %v2869
    %v2871 = vpop.f32.mrf.mxu0
    %v2872 = vadd.f32 %v2783, %v2871
    %2873 = vmatmul.bf16.gmra.mxu0 %v1968
    %v2874 = vpop.f32.mrf.mxu0
    %v2875 = vadd.f32 %v2786, %v2874
    %v2876 = vpop.f32.mrf.mxu0
    %v2877 = vadd.f32 %v2788, %v2876
    %2878 = vmatmul.bf16.gmra.mxu0 %v1970
    %v2879 = vpop.f32.mrf.mxu0
    %v2880 = vadd.f32 %v2791, %v2879
    %v2881 = vpop.f32.mrf.mxu0
    %v2882 = vadd.f32 %v2793, %v2881
    %2883 = vmatmul.bf16.gmra.mxu0 %v1972
    %v2884 = vpop.f32.mrf.mxu0
    %v2885 = vadd.f32 %v2796, %v2884
    %v2886 = vpop.f32.mrf.mxu0
    %v2887 = vadd.f32 %v2798, %v2886
    %2888 = vmatmul.bf16.gmra.mxu0 %v1974
    %v2889 = vpop.f32.mrf.mxu0
    %v2890 = vadd.f32 %v2801, %v2889
    %v2891 = vpop.f32.mrf.mxu0
    %v2892 = vadd.f32 %v2803, %v2891
    %2893 = vmatmul.bf16.gmra.mxu0 %v1976
    %v2894 = vpop.f32.mrf.mxu0
    %v2895 = vadd.f32 %v2806, %v2894
    %v2896 = vpop.f32.mrf.mxu0
    %v2897 = vadd.f32 %v2808, %v2896
    %2898 = vmatmul.bf16.gmra.mxu0 %v1978
    %v2899 = vpop.f32.mrf.mxu0
    %v2900 = vadd.f32 %v2811, %v2899
    %v2901 = vpop.f32.mrf.mxu0
    %v2902 = vadd.f32 %v2813, %v2901
    %2903 = vmatmul.bf16.gmra.mxu0 %v1980
    %v2904 = vpop.f32.mrf.mxu0
    %v2905 = vadd.f32 %v2816, %v2904
    %v2906 = vpop.f32.mrf.mxu0
    %v2907 = vadd.f32 %v2818, %v2906
    %2908 = vmatmul.bf16.gmra.mxu0 %v1982
    %v2909 = vpop.f32.mrf.mxu0
    %v2910 = vadd.f32 %v2821, %v2909
    %v2911 = vpop.f32.mrf.mxu0
    %v2912 = vadd.f32 %v2823, %v2911
    %2913 = vmatmul.bf16.gmra.mxu0 %v1984
    %v2914 = vpop.f32.mrf.mxu0
    %v2915 = vadd.f32 %v2826, %v2914
    %v2916 = vpop.f32.mrf.mxu0
    %v2917 = vadd.f32 %v2828, %v2916
    %2918 = vmatmul.bf16.gmra.mxu0 %v1986
    %v2919 = vpop.f32.mrf.mxu0
    %v2920 = vadd.f32 %v2831, %v2919
    %v2921 = vpop.f32.mrf.mxu0
    %v2922 = vadd.f32 %v2833, %v2921
    %2923 = vmatmul.bf16.gmra.mxu0 %v1988
    %v2924 = vpop.f32.mrf.mxu0
    %v2925 = vadd.f32 %v2836, %v2924
    %v2926 = vpop.f32.mrf.mxu0
    %v2927 = vadd.f32 %v2838, %v2926
    %2928 = vmatmul.bf16.gmra.mxu0 %v1990
    %v2929 = vpop.f32.mrf.mxu0
    %v2930 = vadd.f32 %v2841, %v2929
    %v2931 = vpop.f32.mrf.mxu0
    %v2932 = vadd.f32 %v2843, %v2931
    %2933 = vmatmul.bf16.gmra.mxu0 %v1992
    %v2934 = vpop.f32.mrf.mxu0
    %v2935 = vadd.f32 %v2846, %v2934
    %v2936 = vpop.f32.mrf.mxu0
    %v2937 = vadd.f32 %v2848, %v2936
    %2938 = vdwg.mxu0
    %2939 = vmatpush.bf16.msra.mxu0 %v2435
    %2940 = vmatpush.bf16.msra.mxu0 %v2429
    %2941 = vmatpush.bf16.msra.mxu0 %v2423
    %2942 = vmatpush.bf16.msra.mxu0 %v2417
    %2943 = vmatpush.bf16.msra.mxu0 %v2411
    %2944 = vmatpush.bf16.msra.mxu0 %v2405
    %2945 = vmatpush.bf16.msra.mxu0 %v2399
    %2946 = vmatpush.bf16.msra.mxu0 %v2393
    %2947 = vmatmul.bf16.gmra.mxu0 %v1961
    %v2948 = vpop.f32.mrf.mxu0
    %v2949 = vadd.f32 %v2093, %v2948
    %v2950 = vpop.f32.mrf.mxu0
    %v2951 = vadd.f32 %v2093, %v2950
    %2952 = vmatmul.bf16.gmra.mxu0 %v1963
    %v2953 = vpop.f32.mrf.mxu0
    %v2954 = vadd.f32 %v2093, %v2953
    %v2955 = vpop.f32.mrf.mxu0
    %v2956 = vadd.f32 %v2093, %v2955
    %2957 = vmatmul.bf16.gmra.mxu0 %v1965
    %v2958 = vpop.f32.mrf.mxu0
    %v2959 = vadd.f32 %v2093, %v2958
    %v2960 = vpop.f32.mrf.mxu0
    %v2961 = vadd.f32 %v2093, %v2960
    %2962 = vmatmul.bf16.gmra.mxu0 %v1967
    %v2963 = vpop.f32.mrf.mxu0
    %v2964 = vadd.f32 %v2093, %v2963
    %v2965 = vpop.f32.mrf.mxu0
    %v2966 = vadd.f32 %v2093, %v2965
    %2967 = vmatmul.bf16.gmra.mxu0 %v1969
    %v2968 = vpop.f32.mrf.mxu0
    %v2969 = vadd.f32 %v2093, %v2968
    %v2970 = vpop.f32.mrf.mxu0
    %v2971 = vadd.f32 %v2093, %v2970
    %2972 = vmatmul.bf16.gmra.mxu0 %v1971
    %v2973 = vpop.f32.mrf.mxu0
    %v2974 = vadd.f32 %v2093, %v2973
    %v2975 = vpop.f32.mrf.mxu0
    %v2976 = vadd.f32 %v2093, %v2975
    %2977 = vmatmul.bf16.gmra.mxu0 %v1973
    %v2978 = vpop.f32.mrf.mxu0
    %v2979 = vadd.f32 %v2093, %v2978
    %v2980 = vpop.f32.mrf.mxu0
    %v2981 = vadd.f32 %v2093, %v2980
    %2982 = vmatmul.bf16.gmra.mxu0 %v1975
    %v2983 = vpop.f32.mrf.mxu0
    %v2984 = vadd.f32 %v2093, %v2983
    %v2985 = vpop.f32.mrf.mxu0
    %v2986 = vadd.f32 %v2093, %v2985
    %2987 = vmatmul.bf16.gmra.mxu0 %v1977
    %v2988 = vpop.f32.mrf.mxu0
    %v2989 = vadd.f32 %v2093, %v2988
    %v2990 = vpop.f32.mrf.mxu0
    %v2991 = vadd.f32 %v2093, %v2990
    %2992 = vmatmul.bf16.gmra.mxu0 %v1979
    %v2993 = vpop.f32.mrf.mxu0
    %v2994 = vadd.f32 %v2093, %v2993
    %v2995 = vpop.f32.mrf.mxu0
    %v2996 = vadd.f32 %v2093, %v2995
    %2997 = vmatmul.bf16.gmra.mxu0 %v1981
    %v2998 = vpop.f32.mrf.mxu0
    %v2999 = vadd.f32 %v2093, %v2998
    %v3000 = vpop.f32.mrf.mxu0
    %v3001 = vadd.f32 %v2093, %v3000
    %3002 = vmatmul.bf16.gmra.mxu0 %v1983
    %v3003 = vpop.f32.mrf.mxu0
    %v3004 = vadd.f32 %v2093, %v3003
    %v3005 = vpop.f32.mrf.mxu0
    %v3006 = vadd.f32 %v2093, %v3005
    %3007 = vmatmul.bf16.gmra.mxu0 %v1985
    %v3008 = vpop.f32.mrf.mxu0
    %v3009 = vadd.f32 %v2093, %v3008
    %v3010 = vpop.f32.mrf.mxu0
    %v3011 = vadd.f32 %v2093, %v3010
    %3012 = vmatmul.bf16.gmra.mxu0 %v1987
    %v3013 = vpop.f32.mrf.mxu0
    %v3014 = vadd.f32 %v2093, %v3013
    %v3015 = vpop.f32.mrf.mxu0
    %v3016 = vadd.f32 %v2093, %v3015
    %3017 = vmatmul.bf16.gmra.mxu0 %v1989
    %v3018 = vpop.f32.mrf.mxu0
    %v3019 = vadd.f32 %v2093, %v3018
    %v3020 = vpop.f32.mrf.mxu0
    %v3021 = vadd.f32 %v2093, %v3020
    %3022 = vmatmul.bf16.gmra.mxu0 %v1991
    %v3023 = vpop.f32.mrf.mxu0
    %v3024 = vadd.f32 %v2093, %v3023
    %v3025 = vpop.f32.mrf.mxu0
    %v3026 = vadd.f32 %v2093, %v3025
    %3027 = vdwg.mxu0
    %3028 = vmatpush.bf16.msra.mxu0 %v2483
    %3029 = vmatpush.bf16.msra.mxu0 %v2477
    %3030 = vmatpush.bf16.msra.mxu0 %v2471
    %3031 = vmatpush.bf16.msra.mxu0 %v2465
    %3032 = vmatpush.bf16.msra.mxu0 %v2459
    %3033 = vmatpush.bf16.msra.mxu0 %v2453
    %3034 = vmatpush.bf16.msra.mxu0 %v2447
    %3035 = vmatpush.bf16.msra.mxu0 %v2441
    %3036 = vmatmul.bf16.gmra.mxu0 %v1962
    %v3037 = vpop.f32.mrf.mxu0
    %v3038 = vadd.f32 %v2949, %v3037
    %v3039 = vpop.f32.mrf.mxu0
    %v3040 = vadd.f32 %v2951, %v3039
    %3041 = vmatmul.bf16.gmra.mxu0 %v1964
    %v3042 = vpop.f32.mrf.mxu0
    %v3043 = vadd.f32 %v2954, %v3042
    %v3044 = vpop.f32.mrf.mxu0
    %v3045 = vadd.f32 %v2956, %v3044
    %3046 = vmatmul.bf16.gmra.mxu0 %v1966
    %v3047 = vpop.f32.mrf.mxu0
    %v3048 = vadd.f32 %v2959, %v3047
    %v3049 = vpop.f32.mrf.mxu0
    %v3050 = vadd.f32 %v2961, %v3049
    %3051 = vmatmul.bf16.gmra.mxu0 %v1968
    %v3052 = vpop.f32.mrf.mxu0
    %v3053 = vadd.f32 %v2964, %v3052
    %v3054 = vpop.f32.mrf.mxu0
    %v3055 = vadd.f32 %v2966, %v3054
    %3056 = vmatmul.bf16.gmra.mxu0 %v1970
    %v3057 = vpop.f32.mrf.mxu0
    %v3058 = vadd.f32 %v2969, %v3057
    %v3059 = vpop.f32.mrf.mxu0
    %v3060 = vadd.f32 %v2971, %v3059
    %3061 = vmatmul.bf16.gmra.mxu0 %v1972
    %v3062 = vpop.f32.mrf.mxu0
    %v3063 = vadd.f32 %v2974, %v3062
    %v3064 = vpop.f32.mrf.mxu0
    %v3065 = vadd.f32 %v2976, %v3064
    %3066 = vmatmul.bf16.gmra.mxu0 %v1974
    %v3067 = vpop.f32.mrf.mxu0
    %v3068 = vadd.f32 %v2979, %v3067
    %v3069 = vpop.f32.mrf.mxu0
    %v3070 = vadd.f32 %v2981, %v3069
    %3071 = vmatmul.bf16.gmra.mxu0 %v1976
    %v3072 = vpop.f32.mrf.mxu0
    %v3073 = vadd.f32 %v2984, %v3072
    %v3074 = vpop.f32.mrf.mxu0
    %v3075 = vadd.f32 %v2986, %v3074
    %3076 = vmatmul.bf16.gmra.mxu0 %v1978
    %v3077 = vpop.f32.mrf.mxu0
    %v3078 = vadd.f32 %v2989, %v3077
    %v3079 = vpop.f32.mrf.mxu0
    %v3080 = vadd.f32 %v2991, %v3079
    %3081 = vmatmul.bf16.gmra.mxu0 %v1980
    %v3082 = vpop.f32.mrf.mxu0
    %v3083 = vadd.f32 %v2994, %v3082
    %v3084 = vpop.f32.mrf.mxu0
    %v3085 = vadd.f32 %v2996, %v3084
    %3086 = vmatmul.bf16.gmra.mxu0 %v1982
    %v3087 = vpop.f32.mrf.mxu0
    %v3088 = vadd.f32 %v2999, %v3087
    %v3089 = vpop.f32.mrf.mxu0
    %v3090 = vadd.f32 %v3001, %v3089
    %3091 = vmatmul.bf16.gmra.mxu0 %v1984
    %v3092 = vpop.f32.mrf.mxu0
    %v3093 = vadd.f32 %v3004, %v3092
    %v3094 = vpop.f32.mrf.mxu0
    %v3095 = vadd.f32 %v3006, %v3094
    %3096 = vmatmul.bf16.gmra.mxu0 %v1986
    %v3097 = vpop.f32.mrf.mxu0
    %v3098 = vadd.f32 %v3009, %v3097
    %v3099 = vpop.f32.mrf.mxu0
    %v3100 = vadd.f32 %v3011, %v3099
    %3101 = vmatmul.bf16.gmra.mxu0 %v1988
    %v3102 = vpop.f32.mrf.mxu0
    %v3103 = vadd.f32 %v3014, %v3102
    %v3104 = vpop.f32.mrf.mxu0
    %v3105 = vadd.f32 %v3016, %v3104
    %3106 = vmatmul.bf16.gmra.mxu0 %v1990
    %v3107 = vpop.f32.mrf.mxu0
    %v3108 = vadd.f32 %v3019, %v3107
    %v3109 = vpop.f32.mrf.mxu0
    %v3110 = vadd.f32 %v3021, %v3109
    %3111 = vmatmul.bf16.gmra.mxu0 %v1992
    %v3112 = vpop.f32.mrf.mxu0
    %v3113 = vadd.f32 %v3024, %v3112
    %v3114 = vpop.f32.mrf.mxu0
    %v3115 = vadd.f32 %v3026, %v3114
    %3116 = vdwg.mxu0
    %3117 = vmatpush.bf16.msra.mxu0 %v2436
    %3118 = vmatpush.bf16.msra.mxu0 %v2430
    %3119 = vmatpush.bf16.msra.mxu0 %v2424
    %3120 = vmatpush.bf16.msra.mxu0 %v2418
    %3121 = vmatpush.bf16.msra.mxu0 %v2412
    %3122 = vmatpush.bf16.msra.mxu0 %v2406
    %3123 = vmatpush.bf16.msra.mxu0 %v2400
    %3124 = vmatpush.bf16.msra.mxu0 %v2394
    %3125 = vmatmul.bf16.gmra.mxu0 %v1961
    %v3126 = vpop.f32.mrf.mxu0
    %v3127 = vadd.f32 %v2094, %v3126
    %v3128 = vpop.f32.mrf.mxu0
    %v3129 = vadd.f32 %v2094, %v3128
    %3130 = vmatmul.bf16.gmra.mxu0 %v1963
    %v3131 = vpop.f32.mrf.mxu0
    %v3132 = vadd.f32 %v2094, %v3131
    %v3133 = vpop.f32.mrf.mxu0
    %v3134 = vadd.f32 %v2094, %v3133
    %3135 = vmatmul.bf16.gmra.mxu0 %v1965
    %v3136 = vpop.f32.mrf.mxu0
    %v3137 = vadd.f32 %v2094, %v3136
    %v3138 = vpop.f32.mrf.mxu0
    %v3139 = vadd.f32 %v2094, %v3138
    %3140 = vmatmul.bf16.gmra.mxu0 %v1967
    %v3141 = vpop.f32.mrf.mxu0
    %v3142 = vadd.f32 %v2094, %v3141
    %v3143 = vpop.f32.mrf.mxu0
    %v3144 = vadd.f32 %v2094, %v3143
    %3145 = vmatmul.bf16.gmra.mxu0 %v1969
    %v3146 = vpop.f32.mrf.mxu0
    %v3147 = vadd.f32 %v2094, %v3146
    %v3148 = vpop.f32.mrf.mxu0
    %v3149 = vadd.f32 %v2094, %v3148
    %3150 = vmatmul.bf16.gmra.mxu0 %v1971
    %v3151 = vpop.f32.mrf.mxu0
    %v3152 = vadd.f32 %v2094, %v3151
    %v3153 = vpop.f32.mrf.mxu0
    %v3154 = vadd.f32 %v2094, %v3153
    %3155 = vmatmul.bf16.gmra.mxu0 %v1973
    %v3156 = vpop.f32.mrf.mxu0
    %v3157 = vadd.f32 %v2094, %v3156
    %v3158 = vpop.f32.mrf.mxu0
    %v3159 = vadd.f32 %v2094, %v3158
    %3160 = vmatmul.bf16.gmra.mxu0 %v1975
    %v3161 = vpop.f32.mrf.mxu0
    %v3162 = vadd.f32 %v2094, %v3161
    %v3163 = vpop.f32.mrf.mxu0
    %v3164 = vadd.f32 %v2094, %v3163
    %3165 = vmatmul.bf16.gmra.mxu0 %v1977
    %v3166 = vpop.f32.mrf.mxu0
    %v3167 = vadd.f32 %v2094, %v3166
    %v3168 = vpop.f32.mrf.mxu0
    %v3169 = vadd.f32 %v2094, %v3168
    %3170 = vmatmul.bf16.gmra.mxu0 %v1979
    %v3171 = vpop.f32.mrf.mxu0
    %v3172 = vadd.f32 %v2094, %v3171
    %v3173 = vpop.f32.mrf.mxu0
    %v3174 = vadd.f32 %v2094, %v3173
    %3175 = vmatmul.bf16.gmra.mxu0 %v1981
    %v3176 = vpop.f32.mrf.mxu0
    %v3177 = vadd.f32 %v2094, %v3176
    %v3178 = vpop.f32.mrf.mxu0
    %v3179 = vadd.f32 %v2094, %v3178
    %3180 = vmatmul.bf16.gmra.mxu0 %v1983
    %v3181 = vpop.f32.mrf.mxu0
    %v3182 = vadd.f32 %v2094, %v3181
    %v3183 = vpop.f32.mrf.mxu0
    %v3184 = vadd.f32 %v2094, %v3183
    %3185 = vmatmul.bf16.gmra.mxu0 %v1985
    %v3186 = vpop.f32.mrf.mxu0
    %v3187 = vadd.f32 %v2094, %v3186
    %v3188 = vpop.f32.mrf.mxu0
    %v3189 = vadd.f32 %v2094, %v3188
    %3190 = vmatmul.bf16.gmra.mxu0 %v1987
    %v3191 = vpop.f32.mrf.mxu0
    %v3192 = vadd.f32 %v2094, %v3191
    %v3193 = vpop.f32.mrf.mxu0
    %v3194 = vadd.f32 %v2094, %v3193
    %3195 = vmatmul.bf16.gmra.mxu0 %v1989
    %v3196 = vpop.f32.mrf.mxu0
    %v3197 = vadd.f32 %v2094, %v3196
    %v3198 = vpop.f32.mrf.mxu0
    %v3199 = vadd.f32 %v2094, %v3198
    %3200 = vmatmul.bf16.gmra.mxu0 %v1991
    %v3201 = vpop.f32.mrf.mxu0
    %v3202 = vadd.f32 %v2094, %v3201
    %v3203 = vpop.f32.mrf.mxu0
    %v3204 = vadd.f32 %v2094, %v3203
    %3205 = vdwg.mxu0
    %3206 = vmatpush.bf16.msra.mxu0 %v2484
    %3207 = vmatpush.bf16.msra.mxu0 %v2478
    %3208 = vmatpush.bf16.msra.mxu0 %v2472
    %3209 = vmatpush.bf16.msra.mxu0 %v2466
    %3210 = vmatpush.bf16.msra.mxu0 %v2460
    %3211 = vmatpush.bf16.msra.mxu0 %v2454
    %3212 = vmatpush.bf16.msra.mxu0 %v2448
    %3213 = vmatpush.bf16.msra.mxu0 %v2442
    %3214 = vmatmul.bf16.gmra.mxu0 %v1962
    %v3215 = vpop.f32.mrf.mxu0
    %v3216 = vadd.f32 %v3127, %v3215
    %v3217 = vpop.f32.mrf.mxu0
    %v3218 = vadd.f32 %v3129, %v3217
    %3219 = vmatmul.bf16.gmra.mxu0 %v1964
    %v3220 = vpop.f32.mrf.mxu0
    %v3221 = vadd.f32 %v3132, %v3220
    %v3222 = vpop.f32.mrf.mxu0
    %v3223 = vadd.f32 %v3134, %v3222
    %3224 = vmatmul.bf16.gmra.mxu0 %v1966
    %v3225 = vpop.f32.mrf.mxu0
    %v3226 = vadd.f32 %v3137, %v3225
    %v3227 = vpop.f32.mrf.mxu0
    %v3228 = vadd.f32 %v3139, %v3227
    %3229 = vmatmul.bf16.gmra.mxu0 %v1968
    %v3230 = vpop.f32.mrf.mxu0
    %v3231 = vadd.f32 %v3142, %v3230
    %v3232 = vpop.f32.mrf.mxu0
    %v3233 = vadd.f32 %v3144, %v3232
    %3234 = vmatmul.bf16.gmra.mxu0 %v1970
    %v3235 = vpop.f32.mrf.mxu0
    %v3236 = vadd.f32 %v3147, %v3235
    %v3237 = vpop.f32.mrf.mxu0
    %v3238 = vadd.f32 %v3149, %v3237
    %3239 = vmatmul.bf16.gmra.mxu0 %v1972
    %v3240 = vpop.f32.mrf.mxu0
    %v3241 = vadd.f32 %v3152, %v3240
    %v3242 = vpop.f32.mrf.mxu0
    %v3243 = vadd.f32 %v3154, %v3242
    %3244 = vmatmul.bf16.gmra.mxu0 %v1974
    %v3245 = vpop.f32.mrf.mxu0
    %v3246 = vadd.f32 %v3157, %v3245
    %v3247 = vpop.f32.mrf.mxu0
    %v3248 = vadd.f32 %v3159, %v3247
    %3249 = vmatmul.bf16.gmra.mxu0 %v1976
    %v3250 = vpop.f32.mrf.mxu0
    %v3251 = vadd.f32 %v3162, %v3250
    %v3252 = vpop.f32.mrf.mxu0
    %v3253 = vadd.f32 %v3164, %v3252
    %3254 = vmatmul.bf16.gmra.mxu0 %v1978
    %v3255 = vpop.f32.mrf.mxu0
    %v3256 = vadd.f32 %v3167, %v3255
    %v3257 = vpop.f32.mrf.mxu0
    %v3258 = vadd.f32 %v3169, %v3257
    %3259 = vmatmul.bf16.gmra.mxu0 %v1980
    %v3260 = vpop.f32.mrf.mxu0
    %v3261 = vadd.f32 %v3172, %v3260
    %v3262 = vpop.f32.mrf.mxu0
    %v3263 = vadd.f32 %v3174, %v3262
    %3264 = vmatmul.bf16.gmra.mxu0 %v1982
    %v3265 = vpop.f32.mrf.mxu0
    %v3266 = vadd.f32 %v3177, %v3265
    %v3267 = vpop.f32.mrf.mxu0
    %v3268 = vadd.f32 %v3179, %v3267
    %3269 = vmatmul.bf16.gmra.mxu0 %v1984
    %v3270 = vpop.f32.mrf.mxu0
    %v3271 = vadd.f32 %v3182, %v3270
    %v3272 = vpop.f32.mrf.mxu0
    %v3273 = vadd.f32 %v3184, %v3272
    %3274 = vmatmul.bf16.gmra.mxu0 %v1986
    %v3275 = vpop.f32.mrf.mxu0
    %v3276 = vadd.f32 %v3187, %v3275
    %v3277 = vpop.f32.mrf.mxu0
    %v3278 = vadd.f32 %v3189, %v3277
    %3279 = vmatmul.bf16.gmra.mxu0 %v1988
    %v3280 = vpop.f32.mrf.mxu0
    %v3281 = vadd.f32 %v3192, %v3280
    %v3282 = vpop.f32.mrf.mxu0
    %v3283 = vadd.f32 %v3194, %v3282
    %3284 = vmatmul.bf16.gmra.mxu0 %v1990
    %v3285 = vpop.f32.mrf.mxu0
    %v3286 = vadd.f32 %v3197, %v3285
    %v3287 = vpop.f32.mrf.mxu0
    %v3288 = vadd.f32 %v3199, %v3287
    %3289 = vmatmul.bf16.gmra.mxu0 %v1992
    %v3290 = vpop.f32.mrf.mxu0
    %v3291 = vadd.f32 %v3202, %v3290
    %v3292 = vpop.f32.mrf.mxu0
    %v3293 = vadd.f32 %v3204, %v3292
    %3294 = vdwg.mxu0
    %3295 = vmatpush.bf16.msra.mxu0 %v2437
    %3296 = vmatpush.bf16.msra.mxu0 %v2431
    %3297 = vmatpush.bf16.msra.mxu0 %v2425
    %3298 = vmatpush.bf16.msra.mxu0 %v2419
    %3299 = vmatpush.bf16.msra.mxu0 %v2413
    %3300 = vmatpush.bf16.msra.mxu0 %v2407
    %3301 = vmatpush.bf16.msra.mxu0 %v2401
    %3302 = vmatpush.bf16.msra.mxu0 %v2395
    %3303 = vmatmul.bf16.gmra.mxu0 %v1961
    %v3304 = vpop.f32.mrf.mxu0
    %v3305 = vadd.f32 %v2095, %v3304
    %v3306 = vpop.f32.mrf.mxu0
    %v3307 = vadd.f32 %v2095, %v3306
    %3308 = vmatmul.bf16.gmra.mxu0 %v1963
    %v3309 = vpop.f32.mrf.mxu0
    %v3310 = vadd.f32 %v2095, %v3309
    %v3311 = vpop.f32.mrf.mxu0
    %v3312 = vadd.f32 %v2095, %v3311
    %3313 = vmatmul.bf16.gmra.mxu0 %v1965
    %v3314 = vpop.f32.mrf.mxu0
    %v3315 = vadd.f32 %v2095, %v3314
    %v3316 = vpop.f32.mrf.mxu0
    %v3317 = vadd.f32 %v2095, %v3316
    %3318 = vmatmul.bf16.gmra.mxu0 %v1967
    %v3319 = vpop.f32.mrf.mxu0
    %v3320 = vadd.f32 %v2095, %v3319
    %v3321 = vpop.f32.mrf.mxu0
    %v3322 = vadd.f32 %v2095, %v3321
    %3323 = vmatmul.bf16.gmra.mxu0 %v1969
    %v3324 = vpop.f32.mrf.mxu0
    %v3325 = vadd.f32 %v2095, %v3324
    %v3326 = vpop.f32.mrf.mxu0
    %v3327 = vadd.f32 %v2095, %v3326
    %3328 = vmatmul.bf16.gmra.mxu0 %v1971
    %v3329 = vpop.f32.mrf.mxu0
    %v3330 = vadd.f32 %v2095, %v3329
    %v3331 = vpop.f32.mrf.mxu0
    %v3332 = vadd.f32 %v2095, %v3331
    %3333 = vmatmul.bf16.gmra.mxu0 %v1973
    %v3334 = vpop.f32.mrf.mxu0
    %v3335 = vadd.f32 %v2095, %v3334
    %v3336 = vpop.f32.mrf.mxu0
    %v3337 = vadd.f32 %v2095, %v3336
    %3338 = vmatmul.bf16.gmra.mxu0 %v1975
    %v3339 = vpop.f32.mrf.mxu0
    %v3340 = vadd.f32 %v2095, %v3339
    %v3341 = vpop.f32.mrf.mxu0
    %v3342 = vadd.f32 %v2095, %v3341
    %3343 = vmatmul.bf16.gmra.mxu0 %v1977
    %v3344 = vpop.f32.mrf.mxu0
    %v3345 = vadd.f32 %v2095, %v3344
    %v3346 = vpop.f32.mrf.mxu0
    %v3347 = vadd.f32 %v2095, %v3346
    %3348 = vmatmul.bf16.gmra.mxu0 %v1979
    %v3349 = vpop.f32.mrf.mxu0
    %v3350 = vadd.f32 %v2095, %v3349
    %v3351 = vpop.f32.mrf.mxu0
    %v3352 = vadd.f32 %v2095, %v3351
    %3353 = vmatmul.bf16.gmra.mxu0 %v1981
    %v3354 = vpop.f32.mrf.mxu0
    %v3355 = vadd.f32 %v2095, %v3354
    %v3356 = vpop.f32.mrf.mxu0
    %v3357 = vadd.f32 %v2095, %v3356
    %3358 = vmatmul.bf16.gmra.mxu0 %v1983
    %v3359 = vpop.f32.mrf.mxu0
    %v3360 = vadd.f32 %v2095, %v3359
    %v3361 = vpop.f32.mrf.mxu0
    %v3362 = vadd.f32 %v2095, %v3361
    %3363 = vmatmul.bf16.gmra.mxu0 %v1985
    %v3364 = vpop.f32.mrf.mxu0
    %v3365 = vadd.f32 %v2095, %v3364
    %v3366 = vpop.f32.mrf.mxu0
    %v3367 = vadd.f32 %v2095, %v3366
    %3368 = vmatmul.bf16.gmra.mxu0 %v1987
    %v3369 = vpop.f32.mrf.mxu0
    %v3370 = vadd.f32 %v2095, %v3369
    %v3371 = vpop.f32.mrf.mxu0
    %v3372 = vadd.f32 %v2095, %v3371
    %3373 = vmatmul.bf16.gmra.mxu0 %v1989
    %v3374 = vpop.f32.mrf.mxu0
    %v3375 = vadd.f32 %v2095, %v3374
    %v3376 = vpop.f32.mrf.mxu0
    %v3377 = vadd.f32 %v2095, %v3376
    %3378 = vmatmul.bf16.gmra.mxu0 %v1991
    %v3379 = vpop.f32.mrf.mxu0
    %v3380 = vadd.f32 %v2095, %v3379
    %v3381 = vpop.f32.mrf.mxu0
    %v3382 = vadd.f32 %v2095, %v3381
    %3383 = vdwg.mxu0
    %3384 = vmatpush.bf16.msra.mxu0 %v2485
    %3385 = vmatpush.bf16.msra.mxu0 %v2479
    %3386 = vmatpush.bf16.msra.mxu0 %v2473
    %3387 = vmatpush.bf16.msra.mxu0 %v2467
    %3388 = vmatpush.bf16.msra.mxu0 %v2461
    %3389 = vmatpush.bf16.msra.mxu0 %v2455
    %3390 = vmatpush.bf16.msra.mxu0 %v2449
    %3391 = vmatpush.bf16.msra.mxu0 %v2443
    %3392 = vmatmul.bf16.gmra.mxu0 %v1962
    %v3393 = vpop.f32.mrf.mxu0
    %v3394 = vadd.f32 %v3305, %v3393
    %v3395 = vpop.f32.mrf.mxu0
    %v3396 = vadd.f32 %v3307, %v3395
    %3397 = vmatmul.bf16.gmra.mxu0 %v1964
    %v3398 = vpop.f32.mrf.mxu0
    %v3399 = vadd.f32 %v3310, %v3398
    %v3400 = vpop.f32.mrf.mxu0
    %v3401 = vadd.f32 %v3312, %v3400
    %3402 = vmatmul.bf16.gmra.mxu0 %v1966
    %v3403 = vpop.f32.mrf.mxu0
    %v3404 = vadd.f32 %v3315, %v3403
    %v3405 = vpop.f32.mrf.mxu0
    %v3406 = vadd.f32 %v3317, %v3405
    %3407 = vmatmul.bf16.gmra.mxu0 %v1968
    %v3408 = vpop.f32.mrf.mxu0
    %v3409 = vadd.f32 %v3320, %v3408
    %v3410 = vpop.f32.mrf.mxu0
    %v3411 = vadd.f32 %v3322, %v3410
    %3412 = vmatmul.bf16.gmra.mxu0 %v1970
    %v3413 = vpop.f32.mrf.mxu0
    %v3414 = vadd.f32 %v3325, %v3413
    %v3415 = vpop.f32.mrf.mxu0
    %v3416 = vadd.f32 %v3327, %v3415
    %3417 = vmatmul.bf16.gmra.mxu0 %v1972
    %v3418 = vpop.f32.mrf.mxu0
    %v3419 = vadd.f32 %v3330, %v3418
    %v3420 = vpop.f32.mrf.mxu0
    %v3421 = vadd.f32 %v3332, %v3420
    %3422 = vmatmul.bf16.gmra.mxu0 %v1974
    %v3423 = vpop.f32.mrf.mxu0
    %v3424 = vadd.f32 %v3335, %v3423
    %v3425 = vpop.f32.mrf.mxu0
    %v3426 = vadd.f32 %v3337, %v3425
    %3427 = vmatmul.bf16.gmra.mxu0 %v1976
    %v3428 = vpop.f32.mrf.mxu0
    %v3429 = vadd.f32 %v3340, %v3428
    %v3430 = vpop.f32.mrf.mxu0
    %v3431 = vadd.f32 %v3342, %v3430
    %3432 = vmatmul.bf16.gmra.mxu0 %v1978
    %v3433 = vpop.f32.mrf.mxu0
    %v3434 = vadd.f32 %v3345, %v3433
    %v3435 = vpop.f32.mrf.mxu0
    %v3436 = vadd.f32 %v3347, %v3435
    %3437 = vmatmul.bf16.gmra.mxu0 %v1980
    %v3438 = vpop.f32.mrf.mxu0
    %v3439 = vadd.f32 %v3350, %v3438
    %v3440 = vpop.f32.mrf.mxu0
    %v3441 = vadd.f32 %v3352, %v3440
    %3442 = vmatmul.bf16.gmra.mxu0 %v1982
    %v3443 = vpop.f32.mrf.mxu0
    %v3444 = vadd.f32 %v3355, %v3443
    %v3445 = vpop.f32.mrf.mxu0
    %v3446 = vadd.f32 %v3357, %v3445
    %3447 = vmatmul.bf16.gmra.mxu0 %v1984
    %v3448 = vpop.f32.mrf.mxu0
    %v3449 = vadd.f32 %v3360, %v3448
    %v3450 = vpop.f32.mrf.mxu0
    %v3451 = vadd.f32 %v3362, %v3450
    %3452 = vmatmul.bf16.gmra.mxu0 %v1986
    %v3453 = vpop.f32.mrf.mxu0
    %v3454 = vadd.f32 %v3365, %v3453
    %v3455 = vpop.f32.mrf.mxu0
    %v3456 = vadd.f32 %v3367, %v3455
    %3457 = vmatmul.bf16.gmra.mxu0 %v1988
    %v3458 = vpop.f32.mrf.mxu0
    %v3459 = vadd.f32 %v3370, %v3458
    %v3460 = vpop.f32.mrf.mxu0
    %v3461 = vadd.f32 %v3372, %v3460
    %3462 = vmatmul.bf16.gmra.mxu0 %v1990
    %v3463 = vpop.f32.mrf.mxu0
    %v3464 = vadd.f32 %v3375, %v3463
    %v3465 = vpop.f32.mrf.mxu0
    %v3466 = vadd.f32 %v3377, %v3465
    %3467 = vmatmul.bf16.gmra.mxu0 %v1992
    %v3468 = vpop.f32.mrf.mxu0
    %v3469 = vadd.f32 %v3380, %v3468
    %v3470 = vpop.f32.mrf.mxu0
    %v3471 = vadd.f32 %v3382, %v3470
    %3472 = vdwg.mxu0
    %3473 = vmatpush.bf16.msra.mxu0 %v2438
    %3474 = vmatpush.bf16.msra.mxu0 %v2432
    %3475 = vmatpush.bf16.msra.mxu0 %v2426
    %3476 = vmatpush.bf16.msra.mxu0 %v2420
    %3477 = vmatpush.bf16.msra.mxu0 %v2414
    %3478 = vmatpush.bf16.msra.mxu0 %v2408
    %3479 = vmatpush.bf16.msra.mxu0 %v2402
    %3480 = vmatpush.bf16.msra.mxu0 %v2396
    %3481 = vmatmul.bf16.gmra.mxu0 %v1961
    %v3482 = vpop.f32.mrf.mxu0
    %v3483 = vadd.f32 %v2096, %v3482
    %v3484 = vpop.f32.mrf.mxu0
    %v3485 = vadd.f32 %v2096, %v3484
    %3486 = vmatmul.bf16.gmra.mxu0 %v1963
    %v3487 = vpop.f32.mrf.mxu0
    %v3488 = vadd.f32 %v2096, %v3487
    %v3489 = vpop.f32.mrf.mxu0
    %v3490 = vadd.f32 %v2096, %v3489
    %3491 = vmatmul.bf16.gmra.mxu0 %v1965
    %v3492 = vpop.f32.mrf.mxu0
    %v3493 = vadd.f32 %v2096, %v3492
    %v3494 = vpop.f32.mrf.mxu0
    %v3495 = vadd.f32 %v2096, %v3494
    %3496 = vmatmul.bf16.gmra.mxu0 %v1967
    %v3497 = vpop.f32.mrf.mxu0
    %v3498 = vadd.f32 %v2096, %v3497
    %v3499 = vpop.f32.mrf.mxu0
    %v3500 = vadd.f32 %v2096, %v3499
    %3501 = vmatmul.bf16.gmra.mxu0 %v1969
    %v3502 = vpop.f32.mrf.mxu0
    %v3503 = vadd.f32 %v2096, %v3502
    %v3504 = vpop.f32.mrf.mxu0
    %v3505 = vadd.f32 %v2096, %v3504
    %3506 = vmatmul.bf16.gmra.mxu0 %v1971
    %v3507 = vpop.f32.mrf.mxu0
    %v3508 = vadd.f32 %v2096, %v3507
    %v3509 = vpop.f32.mrf.mxu0
    %v3510 = vadd.f32 %v2096, %v3509
    %3511 = vmatmul.bf16.gmra.mxu0 %v1973
    %v3512 = vpop.f32.mrf.mxu0
    %v3513 = vadd.f32 %v2096, %v3512
    %v3514 = vpop.f32.mrf.mxu0
    %v3515 = vadd.f32 %v2096, %v3514
    %3516 = vmatmul.bf16.gmra.mxu0 %v1975
    %v3517 = vpop.f32.mrf.mxu0
    %v3518 = vadd.f32 %v2096, %v3517
    %v3519 = vpop.f32.mrf.mxu0
    %v3520 = vadd.f32 %v2096, %v3519
    %3521 = vmatmul.bf16.gmra.mxu0 %v1977
    %v3522 = vpop.f32.mrf.mxu0
    %v3523 = vadd.f32 %v2096, %v3522
    %v3524 = vpop.f32.mrf.mxu0
    %v3525 = vadd.f32 %v2096, %v3524
    %3526 = vmatmul.bf16.gmra.mxu0 %v1979
    %v3527 = vpop.f32.mrf.mxu0
    %v3528 = vadd.f32 %v2096, %v3527
    %v3529 = vpop.f32.mrf.mxu0
    %v3530 = vadd.f32 %v2096, %v3529
    %3531 = vmatmul.bf16.gmra.mxu0 %v1981
    %v3532 = vpop.f32.mrf.mxu0
    %v3533 = vadd.f32 %v2096, %v3532
    %v3534 = vpop.f32.mrf.mxu0
    %v3535 = vadd.f32 %v2096, %v3534
    %3536 = vmatmul.bf16.gmra.mxu0 %v1983
    %v3537 = vpop.f32.mrf.mxu0
    %v3538 = vadd.f32 %v2096, %v3537
    %v3539 = vpop.f32.mrf.mxu0
    %v3540 = vadd.f32 %v2096, %v3539
    %3541 = vmatmul.bf16.gmra.mxu0 %v1985
    %v3542 = vpop.f32.mrf.mxu0
    %v3543 = vadd.f32 %v2096, %v3542
    %v3544 = vpop.f32.mrf.mxu0
    %v3545 = vadd.f32 %v2096, %v3544
    %3546 = vmatmul.bf16.gmra.mxu0 %v1987
    %v3547 = vpop.f32.mrf.mxu0
    %v3548 = vadd.f32 %v2096, %v3547
    %v3549 = vpop.f32.mrf.mxu0
    %v3550 = vadd.f32 %v2096, %v3549
    %3551 = vmatmul.bf16.gmra.mxu0 %v1989
    %v3552 = vpop.f32.mrf.mxu0
    %v3553 = vadd.f32 %v2096, %v3552
    %v3554 = vpop.f32.mrf.mxu0
    %v3555 = vadd.f32 %v2096, %v3554
    %3556 = vmatmul.bf16.gmra.mxu0 %v1991
    %v3557 = vpop.f32.mrf.mxu0
    %v3558 = vadd.f32 %v2096, %v3557
    %v3559 = vpop.f32.mrf.mxu0
    %v3560 = vadd.f32 %v2096, %v3559
    %3561 = vdwg.mxu0
    %3562 = vmatpush.bf16.msra.mxu0 %v2486
    %3563 = vmatpush.bf16.msra.mxu0 %v2480
    %3564 = vmatpush.bf16.msra.mxu0 %v2474
    %3565 = vmatpush.bf16.msra.mxu0 %v2468
    %3566 = vmatpush.bf16.msra.mxu0 %v2462
    %3567 = vmatpush.bf16.msra.mxu0 %v2456
    %3568 = vmatpush.bf16.msra.mxu0 %v2450
    %3569 = vmatpush.bf16.msra.mxu0 %v2444
    %3570 = vmatmul.bf16.gmra.mxu0 %v1962
    %v3571 = vpop.f32.mrf.mxu0
    %v3572 = vadd.f32 %v3483, %v3571
    %v3573 = vpop.f32.mrf.mxu0
    %v3574 = vadd.f32 %v3485, %v3573
    %3575 = vmatmul.bf16.gmra.mxu0 %v1964
    %v3576 = vpop.f32.mrf.mxu0
    %v3577 = vadd.f32 %v3488, %v3576
    %v3578 = vpop.f32.mrf.mxu0
    %v3579 = vadd.f32 %v3490, %v3578
    %3580 = vmatmul.bf16.gmra.mxu0 %v1966
    %v3581 = vpop.f32.mrf.mxu0
    %v3582 = vadd.f32 %v3493, %v3581
    %v3583 = vpop.f32.mrf.mxu0
    %v3584 = vadd.f32 %v3495, %v3583
    %3585 = vmatmul.bf16.gmra.mxu0 %v1968
    %v3586 = vpop.f32.mrf.mxu0
    %v3587 = vadd.f32 %v3498, %v3586
    %v3588 = vpop.f32.mrf.mxu0
    %v3589 = vadd.f32 %v3500, %v3588
    %3590 = vmatmul.bf16.gmra.mxu0 %v1970
    %v3591 = vpop.f32.mrf.mxu0
    %v3592 = vadd.f32 %v3503, %v3591
    %v3593 = vpop.f32.mrf.mxu0
    %v3594 = vadd.f32 %v3505, %v3593
    %3595 = vmatmul.bf16.gmra.mxu0 %v1972
    %v3596 = vpop.f32.mrf.mxu0
    %v3597 = vadd.f32 %v3508, %v3596
    %v3598 = vpop.f32.mrf.mxu0
    %v3599 = vadd.f32 %v3510, %v3598
    %3600 = vmatmul.bf16.gmra.mxu0 %v1974
    %v3601 = vpop.f32.mrf.mxu0
    %v3602 = vadd.f32 %v3513, %v3601
    %v3603 = vpop.f32.mrf.mxu0
    %v3604 = vadd.f32 %v3515, %v3603
    %3605 = vmatmul.bf16.gmra.mxu0 %v1976
    %v3606 = vpop.f32.mrf.mxu0
    %v3607 = vadd.f32 %v3518, %v3606
    %v3608 = vpop.f32.mrf.mxu0
    %v3609 = vadd.f32 %v3520, %v3608
    %3610 = vmatmul.bf16.gmra.mxu0 %v1978
    %v3611 = vpop.f32.mrf.mxu0
    %v3612 = vadd.f32 %v3523, %v3611
    %v3613 = vpop.f32.mrf.mxu0
    %v3614 = vadd.f32 %v3525, %v3613
    %3615 = vmatmul.bf16.gmra.mxu0 %v1980
    %v3616 = vpop.f32.mrf.mxu0
    %v3617 = vadd.f32 %v3528, %v3616
    %v3618 = vpop.f32.mrf.mxu0
    %v3619 = vadd.f32 %v3530, %v3618
    %3620 = vmatmul.bf16.gmra.mxu0 %v1982
    %v3621 = vpop.f32.mrf.mxu0
    %v3622 = vadd.f32 %v3533, %v3621
    %v3623 = vpop.f32.mrf.mxu0
    %v3624 = vadd.f32 %v3535, %v3623
    %3625 = vmatmul.bf16.gmra.mxu0 %v1984
    %v3626 = vpop.f32.mrf.mxu0
    %v3627 = vadd.f32 %v3538, %v3626
    %v3628 = vpop.f32.mrf.mxu0
    %v3629 = vadd.f32 %v3540, %v3628
    %3630 = vmatmul.bf16.gmra.mxu0 %v1986
    %v3631 = vpop.f32.mrf.mxu0
    %v3632 = vadd.f32 %v3543, %v3631
    %v3633 = vpop.f32.mrf.mxu0
    %v3634 = vadd.f32 %v3545, %v3633
    %3635 = vmatmul.bf16.gmra.mxu0 %v1988
    %v3636 = vpop.f32.mrf.mxu0
    %v3637 = vadd.f32 %v3548, %v3636
    %v3638 = vpop.f32.mrf.mxu0
    %v3639 = vadd.f32 %v3550, %v3638
    %3640 = vmatmul.bf16.gmra.mxu0 %v1990
    %v3641 = vpop.f32.mrf.mxu0
    %v3642 = vadd.f32 %v3553, %v3641
    %v3643 = vpop.f32.mrf.mxu0
    %v3644 = vadd.f32 %v3555, %v3643
    %3645 = vmatmul.bf16.gmra.mxu0 %v1992
    %v3646 = vpop.f32.mrf.mxu0
    %v3647 = vadd.f32 %v3558, %v3646
    %v3648 = vpop.f32.mrf.mxu0
    %v3649 = vadd.f32 %v3560, %v3648
    %3650 = vdwg.mxu0
    %v3651 = vmax.f32 %v2682, %v2684
    %v3652 = vmax.f32 %v3651, %v2687
    %v3653 = vmax.f32 %v3652, %v2689
    %v3654 = vmax.f32 %v3653, %v2692
    %v3655 = vmax.f32 %v3654, %v2694
    %v3656 = vmax.f32 %v3655, %v2697
    %v3657 = vmax.f32 %v3656, %v2699
    %v3658 = vmax.f32 %v3657, %v2702
    %v3659 = vmax.f32 %v3658, %v2704
    %v3660 = vmax.f32 %v3659, %v2707
    %v3661 = vmax.f32 %v3660, %v2709
    %v3662 = vmax.f32 %v3661, %v2712
    %v3663 = vmax.f32 %v3662, %v2714
    %v3664 = vmax.f32 %v3663, %v2717
    %v3665 = vmax.f32 %v3664, %v2719
    %v3666 = vrot.slane %v3665, 4
    %v3667 = vmax.f32 %v3665, %v3666
    %v3668 = vrot.slane %v3667, 2
    %v3669 = vmax.f32 %v3667, %v3668
    %v3670 = vrot.slane %v3669, 1
    %v3671 = vmax.f32 %v3669, %v3670
    %v3672 = vmax.f32 %v2860, %v2862
    %v3673 = vmax.f32 %v3672, %v2865
    %v3674 = vmax.f32 %v3673, %v2867
    %v3675 = vmax.f32 %v3674, %v2870
    %v3676 = vmax.f32 %v3675, %v2872
    %v3677 = vmax.f32 %v3676, %v2875
    %v3678 = vmax.f32 %v3677, %v2877
    %v3679 = vmax.f32 %v3678, %v2880
    %v3680 = vmax.f32 %v3679, %v2882
    %v3681 = vmax.f32 %v3680, %v2885
    %v3682 = vmax.f32 %v3681, %v2887
    %v3683 = vmax.f32 %v3682, %v2890
    %v3684 = vmax.f32 %v3683, %v2892
    %v3685 = vmax.f32 %v3684, %v2895
    %v3686 = vmax.f32 %v3685, %v2897
    %v3687 = vrot.slane %v3686, 4
    %v3688 = vmax.f32 %v3686, %v3687
    %v3689 = vrot.slane %v3688, 2
    %v3690 = vmax.f32 %v3688, %v3689
    %v3691 = vrot.slane %v3690, 1
    %v3692 = vmax.f32 %v3690, %v3691
    %v3693 = vmax.f32 %v3038, %v3040
    %v3694 = vmax.f32 %v3693, %v3043
    %v3695 = vmax.f32 %v3694, %v3045
    %v3696 = vmax.f32 %v3695, %v3048
    %v3697 = vmax.f32 %v3696, %v3050
    %v3698 = vmax.f32 %v3697, %v3053
    %v3699 = vmax.f32 %v3698, %v3055
    %v3700 = vmax.f32 %v3699, %v3058
    %v3701 = vmax.f32 %v3700, %v3060
    %v3702 = vmax.f32 %v3701, %v3063
    %v3703 = vmax.f32 %v3702, %v3065
    %v3704 = vmax.f32 %v3703, %v3068
    %v3705 = vmax.f32 %v3704, %v3070
    %v3706 = vmax.f32 %v3705, %v3073
    %v3707 = vmax.f32 %v3706, %v3075
    %v3708 = vrot.slane %v3707, 4
    %v3709 = vmax.f32 %v3707, %v3708
    %v3710 = vrot.slane %v3709, 2
    %v3711 = vmax.f32 %v3709, %v3710
    %v3712 = vrot.slane %v3711, 1
    %v3713 = vmax.f32 %v3711, %v3712
    %v3714 = vmax.f32 %v3216, %v3218
    %v3715 = vmax.f32 %v3714, %v3221
    %v3716 = vmax.f32 %v3715, %v3223
    %v3717 = vmax.f32 %v3716, %v3226
    %v3718 = vmax.f32 %v3717, %v3228
    %v3719 = vmax.f32 %v3718, %v3231
    %v3720 = vmax.f32 %v3719, %v3233
    %v3721 = vmax.f32 %v3720, %v3236
    %v3722 = vmax.f32 %v3721, %v3238
    %v3723 = vmax.f32 %v3722, %v3241
    %v3724 = vmax.f32 %v3723, %v3243
    %v3725 = vmax.f32 %v3724, %v3246
    %v3726 = vmax.f32 %v3725, %v3248
    %v3727 = vmax.f32 %v3726, %v3251
    %v3728 = vmax.f32 %v3727, %v3253
    %v3729 = vrot.slane %v3728, 4
    %v3730 = vmax.f32 %v3728, %v3729
    %v3731 = vrot.slane %v3730, 2
    %v3732 = vmax.f32 %v3730, %v3731
    %v3733 = vrot.slane %v3732, 1
    %v3734 = vmax.f32 %v3732, %v3733
    %v3735 = vmax.f32 %v3394, %v3396
    %v3736 = vmax.f32 %v3735, %v3399
    %v3737 = vmax.f32 %v3736, %v3401
    %v3738 = vmax.f32 %v3737, %v3404
    %v3739 = vmax.f32 %v3738, %v3406
    %v3740 = vmax.f32 %v3739, %v3409
    %v3741 = vmax.f32 %v3740, %v3411
    %v3742 = vmax.f32 %v3741, %v3414
    %v3743 = vmax.f32 %v3742, %v3416
    %v3744 = vmax.f32 %v3743, %v3419
    %v3745 = vmax.f32 %v3744, %v3421
    %v3746 = vmax.f32 %v3745, %v3424
    %v3747 = vmax.f32 %v3746, %v3426
    %v3748 = vmax.f32 %v3747, %v3429
    %v3749 = vmax.f32 %v3748, %v3431
    %v3750 = vrot.slane %v3749, 4
    %v3751 = vmax.f32 %v3749, %v3750
    %v3752 = vrot.slane %v3751, 2
    %v3753 = vmax.f32 %v3751, %v3752
    %v3754 = vrot.slane %v3753, 1
    %v3755 = vmax.f32 %v3753, %v3754
    %v3756 = vmax.f32 %v3572, %v3574
    %v3757 = vmax.f32 %v3756, %v3577
    %v3758 = vmax.f32 %v3757, %v3579
    %v3759 = vmax.f32 %v3758, %v3582
    %v3760 = vmax.f32 %v3759, %v3584
    %v3761 = vmax.f32 %v3760, %v3587
    %v3762 = vmax.f32 %v3761, %v3589
    %v3763 = vmax.f32 %v3762, %v3592
    %v3764 = vmax.f32 %v3763, %v3594
    %v3765 = vmax.f32 %v3764, %v3597
    %v3766 = vmax.f32 %v3765, %v3599
    %v3767 = vmax.f32 %v3766, %v3602
    %v3768 = vmax.f32 %v3767, %v3604
    %v3769 = vmax.f32 %v3768, %v3607
    %v3770 = vmax.f32 %v3769, %v3609
    %v3771 = vrot.slane %v3770, 4
    %v3772 = vmax.f32 %v3770, %v3771
    %v3773 = vrot.slane %v3772, 2
    %v3774 = vmax.f32 %v3772, %v3773
    %v3775 = vrot.slane %v3774, 1
    %v3776 = vmax.f32 %v3774, %v3775
    %v3777 = vmax.f32 %v2722, %v2724
    %v3778 = vmax.f32 %v3777, %v2727
    %v3779 = vmax.f32 %v3778, %v2729
    %v3780 = vmax.f32 %v3779, %v2732
    %v3781 = vmax.f32 %v3780, %v2734
    %v3782 = vmax.f32 %v3781, %v2737
    %v3783 = vmax.f32 %v3782, %v2739
    %v3784 = vmax.f32 %v3783, %v2742
    %v3785 = vmax.f32 %v3784, %v2744
    %v3786 = vmax.f32 %v3785, %v2747
    %v3787 = vmax.f32 %v3786, %v2749
    %v3788 = vmax.f32 %v3787, %v2752
    %v3789 = vmax.f32 %v3788, %v2754
    %v3790 = vmax.f32 %v3789, %v2757
    %v3791 = vmax.f32 %v3790, %v2759
    %v3792 = vrot.slane %v3791, 4
    %v3793 = vmax.f32 %v3791, %v3792
    %v3794 = vrot.slane %v3793, 2
    %v3795 = vmax.f32 %v3793, %v3794
    %v3796 = vrot.slane %v3795, 1
    %v3797 = vmax.f32 %v3795, %v3796
    %v3798 = vmax.f32 %v2900, %v2902
    %v3799 = vmax.f32 %v3798, %v2905
    %v3800 = vmax.f32 %v3799, %v2907
    %v3801 = vmax.f32 %v3800, %v2910
    %v3802 = vmax.f32 %v3801, %v2912
    %v3803 = vmax.f32 %v3802, %v2915
    %v3804 = vmax.f32 %v3803, %v2917
    %v3805 = vmax.f32 %v3804, %v2920
    %v3806 = vmax.f32 %v3805, %v2922
    %v3807 = vmax.f32 %v3806, %v2925
    %v3808 = vmax.f32 %v3807, %v2927
    %v3809 = vmax.f32 %v3808, %v2930
    %v3810 = vmax.f32 %v3809, %v2932
    %v3811 = vmax.f32 %v3810, %v2935
    %v3812 = vmax.f32 %v3811, %v2937
    %v3813 = vrot.slane %v3812, 4
    %v3814 = vmax.f32 %v3812, %v3813
    %v3815 = vrot.slane %v3814, 2
    %v3816 = vmax.f32 %v3814, %v3815
    %v3817 = vrot.slane %v3816, 1
    %v3818 = vmax.f32 %v3816, %v3817
    %v3819 = vmax.f32 %v3078, %v3080
    %v3820 = vmax.f32 %v3819, %v3083
    %v3821 = vmax.f32 %v3820, %v3085
    %v3822 = vmax.f32 %v3821, %v3088
    %v3823 = vmax.f32 %v3822, %v3090
    %v3824 = vmax.f32 %v3823, %v3093
    %v3825 = vmax.f32 %v3824, %v3095
    %v3826 = vmax.f32 %v3825, %v3098
    %v3827 = vmax.f32 %v3826, %v3100
    %v3828 = vmax.f32 %v3827, %v3103
    %v3829 = vmax.f32 %v3828, %v3105
    %v3830 = vmax.f32 %v3829, %v3108
    %v3831 = vmax.f32 %v3830, %v3110
    %v3832 = vmax.f32 %v3831, %v3113
    %v3833 = vmax.f32 %v3832, %v3115
    %v3834 = vrot.slane %v3833, 4
    %v3835 = vmax.f32 %v3833, %v3834
    %v3836 = vrot.slane %v3835, 2
    %v3837 = vmax.f32 %v3835, %v3836
    %v3838 = vrot.slane %v3837, 1
    %v3839 = vmax.f32 %v3837, %v3838
    %v3840 = vmax.f32 %v3256, %v3258
    %v3841 = vmax.f32 %v3840, %v3261
    %v3842 = vmax.f32 %v3841, %v3263
    %v3843 = vmax.f32 %v3842, %v3266
    %v3844 = vmax.f32 %v3843, %v3268
    %v3845 = vmax.f32 %v3844, %v3271
    %v3846 = vmax.f32 %v3845, %v3273
    %v3847 = vmax.f32 %v3846, %v3276
    %v3848 = vmax.f32 %v3847, %v3278
    %v3849 = vmax.f32 %v3848, %v3281
    %v3850 = vmax.f32 %v3849, %v3283
    %v3851 = vmax.f32 %v3850, %v3286
    %v3852 = vmax.f32 %v3851, %v3288
    %v3853 = vmax.f32 %v3852, %v3291
    %v3854 = vmax.f32 %v3853, %v3293
    %v3855 = vrot.slane %v3854, 4
    %v3856 = vmax.f32 %v3854, %v3855
    %v3857 = vrot.slane %v3856, 2
    %v3858 = vmax.f32 %v3856, %v3857
    %v3859 = vrot.slane %v3858, 1
    %v3860 = vmax.f32 %v3858, %v3859
    %v3861 = vmax.f32 %v3434, %v3436
    %v3862 = vmax.f32 %v3861, %v3439
    %v3863 = vmax.f32 %v3862, %v3441
    %v3864 = vmax.f32 %v3863, %v3444
    %v3865 = vmax.f32 %v3864, %v3446
    %v3866 = vmax.f32 %v3865, %v3449
    %v3867 = vmax.f32 %v3866, %v3451
    %v3868 = vmax.f32 %v3867, %v3454
    %v3869 = vmax.f32 %v3868, %v3456
    %v3870 = vmax.f32 %v3869, %v3459
    %v3871 = vmax.f32 %v3870, %v3461
    %v3872 = vmax.f32 %v3871, %v3464
    %v3873 = vmax.f32 %v3872, %v3466
    %v3874 = vmax.f32 %v3873, %v3469
    %v3875 = vmax.f32 %v3874, %v3471
    %v3876 = vrot.slane %v3875, 4
    %v3877 = vmax.f32 %v3875, %v3876
    %v3878 = vrot.slane %v3877, 2
    %v3879 = vmax.f32 %v3877, %v3878
    %v3880 = vrot.slane %v3879, 1
    %v3881 = vmax.f32 %v3879, %v3880
    %v3882 = vmax.f32 %v3612, %v3614
    %v3883 = vmax.f32 %v3882, %v3617
    %v3884 = vmax.f32 %v3883, %v3619
    %v3885 = vmax.f32 %v3884, %v3622
    %v3886 = vmax.f32 %v3885, %v3624
    %v3887 = vmax.f32 %v3886, %v3627
    %v3888 = vmax.f32 %v3887, %v3629
    %v3889 = vmax.f32 %v3888, %v3632
    %v3890 = vmax.f32 %v3889, %v3634
    %v3891 = vmax.f32 %v3890, %v3637
    %v3892 = vmax.f32 %v3891, %v3639
    %v3893 = vmax.f32 %v3892, %v3642
    %v3894 = vmax.f32 %v3893, %v3644
    %v3895 = vmax.f32 %v3894, %v3647
    %v3896 = vmax.f32 %v3895, %v3649
    %v3897 = vrot.slane %v3896, 4
    %v3898 = vmax.f32 %v3896, %v3897
    %v3899 = vrot.slane %v3898, 2
    %v3900 = vmax.f32 %v3898, %v3899
    %v3901 = vrot.slane %v3900, 1
    %v3902 = vmax.f32 %v3900, %v3901
    %v3903 = vpack.c.bf16 %v3671, %v3671
    %v3904 = vpack.c.bf16 %v3692, %v3692
    %v3905 = vpack.c.bf16 %v3713, %v3713
    %v3906 = vpack.c.bf16 %v3734, %v3734
    %v3907 = vpack.c.bf16 %v3755, %v3755
    %v3908 = vpack.c.bf16 %v3776, %v3776
    %v3909 = vpack.c.bf16 %v3797, %v3797
    %v3910 = vpack.c.bf16 %v3818, %v3818
    %v3911 = vpack.c.bf16 %v3839, %v3839
    %v3912 = vpack.c.bf16 %v3860, %v3860
    %v3913 = vpack.c.bf16 %v3881, %v3881
    %v3914 = vpack.c.bf16 %v3902, %v3902
    %v3915 = vld [vmem:[%s8] sm:$0xff]
    %v3916 = vld [vmem:[%s8 + $0x8] sm:$0xff]
    %v3917 = vld [vmem:[%s8 + $0x10] sm:$0xff]
    %v3918 = vld [vmem:[%s8 + $0x18] sm:$0xff]
    %v3919 = vld [vmem:[%s8 + $0x20] sm:$0xff]
    %v3920 = vld [vmem:[%s8 + $0x28] sm:$0xff]
    %v3921 = vld [vmem:[%s8 + $0x30] sm:$0xff]
    %v3922 = vld [vmem:[%s8 + $0x38] sm:$0xff]
    %v3923 = vld [vmem:[%s8 + $0x40] sm:$0xff]
    %v3924 = vld [vmem:[%s8 + $0x48] sm:$0xff]
    %v3925 = vld [vmem:[%s8 + $0x50] sm:$0xff]
    %v3926 = vld [vmem:[%s8 + $0x58] sm:$0xff]
    %v3927 = vld [vmem:[%s8 + $0x60] sm:$0xff]
    %v3928 = vld [vmem:[%s8 + $0x68] sm:$0xff]
    %v3929 = vld [vmem:[%s8 + $0x70] sm:$0xff]
    %v3930 = vld [vmem:[%s8 + $0x78] sm:$0xff]
    %v3931 = vld [vmem:[%s8 + $0x80] sm:$0xff]
    %v3932 = vld [vmem:[%s8 + $0x88] sm:$0xff]
    %v3933 = vld [vmem:[%s8 + $0x90] sm:$0xff]
    %v3934 = vld [vmem:[%s8 + $0x98] sm:$0xff]
    %v3935 = vld [vmem:[%s8 + $0xa0] sm:$0xff]
    %v3936 = vld [vmem:[%s8 + $0xa8] sm:$0xff]
    %v3937 = vld [vmem:[%s8 + $0xb0] sm:$0xff]
    %v3938 = vld [vmem:[%s8 + $0xb8] sm:$0xff]
    %v3939 = vld [vmem:[%s8 + $0xc0] sm:$0xff]
    %v3940 = vld [vmem:[%s8 + $0xc8] sm:$0xff]
    %v3941 = vld [vmem:[%s8 + $0xd0] sm:$0xff]
    %v3942 = vld [vmem:[%s8 + $0xd8] sm:$0xff]
    %v3943 = vld [vmem:[%s8 + $0xe0] sm:$0xff]
    %v3944 = vld [vmem:[%s8 + $0xe8] sm:$0xff]
    %v3945 = vld [vmem:[%s8 + $0xf0] sm:$0xff]
    %v3946 = vld [vmem:[%s8 + $0xf8] sm:$0xff]
    %v3947 = vld [vmem:[%s8 + $0x100] sm:$0xff]
    %v3948 = vld [vmem:[%s8 + $0x108] sm:$0xff]
    %v3949 = vld [vmem:[%s8 + $0x110] sm:$0xff]
    %v3950 = vld [vmem:[%s8 + $0x118] sm:$0xff]
    %v3951 = vld [vmem:[%s8 + $0x120] sm:$0xff]
    %v3952 = vld [vmem:[%s8 + $0x128] sm:$0xff]
    %v3953 = vld [vmem:[%s8 + $0x130] sm:$0xff]
    %v3954 = vld [vmem:[%s8 + $0x138] sm:$0xff]
    %v3955 = vld [vmem:[%s8 + $0x140] sm:$0xff]
    %v3956 = vld [vmem:[%s8 + $0x148] sm:$0xff]
    %v3957 = vld [vmem:[%s8 + $0x150] sm:$0xff]
    %v3958 = vld [vmem:[%s8 + $0x158] sm:$0xff]
    %v3959 = vld [vmem:[%s8 + $0x160] sm:$0xff]
    %v3960 = vld [vmem:[%s8 + $0x168] sm:$0xff]
    %v3961 = vld [vmem:[%s8 + $0x170] sm:$0xff]
    %v3962 = vld [vmem:[%s8 + $0x178] sm:$0xff]
    %v3963 = vld [vmem:[%s8 + $0x180] sm:$0xff]
    %v3964 = vld [vmem:[%s8 + $0x188] sm:$0xff]
    %v3965 = vld [vmem:[%s8 + $0x190] sm:$0xff]
    %v3966 = vld [vmem:[%s8 + $0x198] sm:$0xff]
    %v3967 = vld [vmem:[%s8 + $0x1a0] sm:$0xff]
    %v3968 = vld [vmem:[%s8 + $0x1a8] sm:$0xff]
    %v3969 = vld [vmem:[%s8 + $0x1b0] sm:$0xff]
    %v3970 = vld [vmem:[%s8 + $0x1b8] sm:$0xff]
    %v3971 = vld [vmem:[%s8 + $0x1c0] sm:$0xff]
    %v3972 = vld [vmem:[%s8 + $0x1c8] sm:$0xff]
    %v3973 = vld [vmem:[%s8 + $0x1d0] sm:$0xff]
    %v3974 = vld [vmem:[%s8 + $0x1d8] sm:$0xff]
    %v3975 = vld [vmem:[%s8 + $0x1e0] sm:$0xff]
    %v3976 = vld [vmem:[%s8 + $0x1e8] sm:$0xff]
    %v3977 = vld [vmem:[%s8 + $0x1f0] sm:$0xff]
    %v3978 = vld [vmem:[%s8 + $0x1f8] sm:$0xff]
    %v3979 = vld [vmem:[%s8 + $0x200] sm:$0xff]
    %v3980 = vld [vmem:[%s8 + $0x208] sm:$0xff]
    %v3981 = vld [vmem:[%s8 + $0x210] sm:$0xff]
    %v3982 = vld [vmem:[%s8 + $0x218] sm:$0xff]
    %v3983 = vld [vmem:[%s8 + $0x220] sm:$0xff]
    %v3984 = vld [vmem:[%s8 + $0x228] sm:$0xff]
    %v3985 = vld [vmem:[%s8 + $0x230] sm:$0xff]
    %v3986 = vld [vmem:[%s8 + $0x238] sm:$0xff]
    %v3987 = vld [vmem:[%s8 + $0x240] sm:$0xff]
    %v3988 = vld [vmem:[%s8 + $0x248] sm:$0xff]
    %v3989 = vld [vmem:[%s8 + $0x250] sm:$0xff]
    %v3990 = vld [vmem:[%s8 + $0x258] sm:$0xff]
    %v3991 = vld [vmem:[%s8 + $0x260] sm:$0xff]
    %v3992 = vld [vmem:[%s8 + $0x268] sm:$0xff]
    %v3993 = vld [vmem:[%s8 + $0x270] sm:$0xff]
    %v3994 = vld [vmem:[%s8 + $0x278] sm:$0xff]
    %v3995 = vld [vmem:[%s8 + $0x280] sm:$0xff]
    %v3996 = vld [vmem:[%s8 + $0x288] sm:$0xff]
    %v3997 = vld [vmem:[%s8 + $0x290] sm:$0xff]
    %v3998 = vld [vmem:[%s8 + $0x298] sm:$0xff]
    %v3999 = vld [vmem:[%s8 + $0x2a0] sm:$0xff]
    %v4000 = vld [vmem:[%s8 + $0x2a8] sm:$0xff]
    %v4001 = vld [vmem:[%s8 + $0x2b0] sm:$0xff]
    %v4002 = vld [vmem:[%s8 + $0x2b8] sm:$0xff]
    %v4003 = vld [vmem:[%s8 + $0x2c0] sm:$0xff]
    %v4004 = vld [vmem:[%s8 + $0x2c8] sm:$0xff]
    %v4005 = vld [vmem:[%s8 + $0x2d0] sm:$0xff]
    %v4006 = vld [vmem:[%s8 + $0x2d8] sm:$0xff]
    %v4007 = vld [vmem:[%s8 + $0x2e0] sm:$0xff]
    %v4008 = vld [vmem:[%s8 + $0x2e8] sm:$0xff]
    %v4009 = vld [vmem:[%s8 + $0x2f0] sm:$0xff]
    %v4010 = vld [vmem:[%s8 + $0x2f8] sm:$0xff]
    %v4011 = vld [vmem:[%s8 + $0x300] sm:$0xff]
    %v4012 = vld [vmem:[%s8 + $0x308] sm:$0xff]
    %v4013 = vld [vmem:[%s8 + $0x310] sm:$0xff]
    %v4014 = vld [vmem:[%s8 + $0x318] sm:$0xff]
    %v4015 = vld [vmem:[%s8 + $0x320] sm:$0xff]
    %v4016 = vld [vmem:[%s8 + $0x328] sm:$0xff]
    %v4017 = vld [vmem:[%s8 + $0x330] sm:$0xff]
    %v4018 = vld [vmem:[%s8 + $0x338] sm:$0xff]
    %v4019 = vld [vmem:[%s8 + $0x340] sm:$0xff]
    %v4020 = vld [vmem:[%s8 + $0x348] sm:$0xff]
    %v4021 = vld [vmem:[%s8 + $0x350] sm:$0xff]
    %v4022 = vld [vmem:[%s8 + $0x358] sm:$0xff]
    %v4023 = vld [vmem:[%s8 + $0x360] sm:$0xff]
    %v4024 = vld [vmem:[%s8 + $0x368] sm:$0xff]
    %v4025 = vld [vmem:[%s8 + $0x370] sm:$0xff]
    %v4026 = vld [vmem:[%s8 + $0x378] sm:$0xff]
    %v4027 = vld [vmem:[%s8 + $0x380] sm:$0xff]
    %v4028 = vld [vmem:[%s8 + $0x388] sm:$0xff]
    %v4029 = vld [vmem:[%s8 + $0x390] sm:$0xff]
    %v4030 = vld [vmem:[%s8 + $0x398] sm:$0xff]
    %v4031 = vld [vmem:[%s8 + $0x3a0] sm:$0xff]
    %v4032 = vld [vmem:[%s8 + $0x3a8] sm:$0xff]
    %v4033 = vld [vmem:[%s8 + $0x3b0] sm:$0xff]
    %v4034 = vld [vmem:[%s8 + $0x3b8] sm:$0xff]
    %v4035 = vld [vmem:[%s8 + $0x3c0] sm:$0xff]
    %v4036 = vld [vmem:[%s8 + $0x3c8] sm:$0xff]
    %v4037 = vld [vmem:[%s8 + $0x3d0] sm:$0xff]
    %v4038 = vld [vmem:[%s8 + $0x3d8] sm:$0xff]
    %v4039 = vld [vmem:[%s8 + $0x3e0] sm:$0xff]
    %v4040 = vld [vmem:[%s8 + $0x3e8] sm:$0xff]
    %v4041 = vld [vmem:[%s8 + $0x3f0] sm:$0xff]
    %v4042 = vld [vmem:[%s8 + $0x3f8] sm:$0xff]
    %v4043 = vld [vmem:[%s8 + $0x400] sm:$0xff]
    %v4044 = vld [vmem:[%s8 + $0x408] sm:$0xff]
    %v4045 = vld [vmem:[%s8 + $0x410] sm:$0xff]
    %v4046 = vld [vmem:[%s8 + $0x418] sm:$0xff]
    %v4047 = vld [vmem:[%s8 + $0x420] sm:$0xff]
    %v4048 = vld [vmem:[%s8 + $0x428] sm:$0xff]
    %v4049 = vld [vmem:[%s8 + $0x430] sm:$0xff]
    %v4050 = vld [vmem:[%s8 + $0x438] sm:$0xff]
    %v4051 = vld [vmem:[%s8 + $0x440] sm:$0xff]
    %v4052 = vld [vmem:[%s8 + $0x448] sm:$0xff]
    %v4053 = vld [vmem:[%s8 + $0x450] sm:$0xff]
    %v4054 = vld [vmem:[%s8 + $0x458] sm:$0xff]
    %v4055 = vld [vmem:[%s8 + $0x460] sm:$0xff]
    %v4056 = vld [vmem:[%s8 + $0x468] sm:$0xff]
    %v4057 = vld [vmem:[%s8 + $0x470] sm:$0xff]
    %v4058 = vld [vmem:[%s8 + $0x478] sm:$0xff]
    %v4059 = vld [vmem:[%s8 + $0x480] sm:$0xff]
    %v4060 = vld [vmem:[%s8 + $0x488] sm:$0xff]
    %v4061 = vld [vmem:[%s8 + $0x490] sm:$0xff]
    %v4062 = vld [vmem:[%s8 + $0x498] sm:$0xff]
    %v4063 = vld [vmem:[%s8 + $0x4a0] sm:$0xff]
    %v4064 = vld [vmem:[%s8 + $0x4a8] sm:$0xff]
    %v4065 = vld [vmem:[%s8 + $0x4b0] sm:$0xff]
    %v4066 = vld [vmem:[%s8 + $0x4b8] sm:$0xff]
    %v4067 = vld [vmem:[%s8 + $0x4c0] sm:$0xff]
    %v4068 = vld [vmem:[%s8 + $0x4c8] sm:$0xff]
    %v4069 = vld [vmem:[%s8 + $0x4d0] sm:$0xff]
    %v4070 = vld [vmem:[%s8 + $0x4d8] sm:$0xff]
    %v4071 = vld [vmem:[%s8 + $0x4e0] sm:$0xff]
    %v4072 = vld [vmem:[%s8 + $0x4e8] sm:$0xff]
    %v4073 = vld [vmem:[%s8 + $0x4f0] sm:$0xff]
    %v4074 = vld [vmem:[%s8 + $0x4f8] sm:$0xff]
    %v4075 = vld [vmem:[%s8 + $0x500] sm:$0xff]
    %v4076 = vld [vmem:[%s8 + $0x508] sm:$0xff]
    %v4077 = vld [vmem:[%s8 + $0x510] sm:$0xff]
    %v4078 = vld [vmem:[%s8 + $0x518] sm:$0xff]
    %v4079 = vld [vmem:[%s8 + $0x520] sm:$0xff]
    %v4080 = vld [vmem:[%s8 + $0x528] sm:$0xff]
    %v4081 = vld [vmem:[%s8 + $0x530] sm:$0xff]
    %v4082 = vld [vmem:[%s8 + $0x538] sm:$0xff]
    %v4083 = vld [vmem:[%s8 + $0x540] sm:$0xff]
    %v4084 = vld [vmem:[%s8 + $0x548] sm:$0xff]
    %v4085 = vld [vmem:[%s8 + $0x550] sm:$0xff]
    %v4086 = vld [vmem:[%s8 + $0x558] sm:$0xff]
    %v4087 = vld [vmem:[%s8 + $0x560] sm:$0xff]
    %v4088 = vld [vmem:[%s8 + $0x568] sm:$0xff]
    %v4089 = vld [vmem:[%s8 + $0x570] sm:$0xff]
    %v4090 = vld [vmem:[%s8 + $0x578] sm:$0xff]
    %v4091 = vld [vmem:[%s8 + $0x580] sm:$0xff]
    %v4092 = vld [vmem:[%s8 + $0x588] sm:$0xff]
    %v4093 = vld [vmem:[%s8 + $0x590] sm:$0xff]
    %v4094 = vld [vmem:[%s8 + $0x598] sm:$0xff]
    %v4095 = vld [vmem:[%s8 + $0x5a0] sm:$0xff]
    %v4096 = vld [vmem:[%s8 + $0x5a8] sm:$0xff]
    %v4097 = vld [vmem:[%s8 + $0x5b0] sm:$0xff]
    %v4098 = vld [vmem:[%s8 + $0x5b8] sm:$0xff]
    %v4099 = vld [vmem:[%s8 + $0x5c0] sm:$0xff]
    %v4100 = vld [vmem:[%s8 + $0x5c8] sm:$0xff]
    %v4101 = vld [vmem:[%s8 + $0x5d0] sm:$0xff]
    %v4102 = vld [vmem:[%s8 + $0x5d8] sm:$0xff]
    %v4103 = vld [vmem:[%s8 + $0x5e0] sm:$0xff]
    %v4104 = vld [vmem:[%s8 + $0x5e8] sm:$0xff]
    %v4105 = vld [vmem:[%s8 + $0x5f0] sm:$0xff]
    %v4106 = vld [vmem:[%s8 + $0x5f8] sm:$0xff]
    %v4119 = vunpack.c.l.b16 %v3903
    %v4120 = vunpack.c.l.b16 %v3904
    %v4121 = vunpack.c.l.b16 %v3905
    %v4122 = vunpack.c.l.b16 %v3906
    %v4123 = vunpack.c.l.b16 %v3907
    %v4124 = vunpack.c.l.b16 %v3908
    %v4125 = vunpack.c.l.b16 %v3909
    %v4126 = vunpack.c.l.b16 %v3910
    %v4127 = vunpack.c.l.b16 %v3911
    %v4128 = vunpack.c.l.b16 %v3912
    %v4129 = vunpack.c.l.b16 %v3913
    %v4130 = vunpack.c.l.b16 %v3914
    %v4131 = vsel %vm207, %v4125, %v4119
    %v4132 = vsel %vm207, %v4126, %v4120
    %v4133 = vsel %vm207, %v4127, %v4121
    %v4134 = vsel %vm207, %v4128, %v4122
    %v4135 = vsel %vm207, %v4129, %v4123
    %v4136 = vsel %vm207, %v4130, %v4124
    %v4137 = vpack.c.b16 %v4131, %v4131
    %v4138 = vpack.c.b16 %v4132, %v4132
    %v4139 = vpack.c.b16 %v4133, %v4133
    %v4140 = vpack.c.b16 %v4134, %v4134
    %v4141 = vpack.c.b16 %v4135, %v4135
    %v4142 = vpack.c.b16 %v4136, %v4136
    %v4341 = vunpack.c.l.b16 %v3915
    %v4342 = vunpack.c.h.b16 %v3915
    %v4343 = vunpack.c.l.b16 %v3916
    %v4344 = vunpack.c.h.b16 %v3916
    %v4345 = vunpack.c.l.b16 %v3917
    %v4346 = vunpack.c.h.b16 %v3917
    %v4347 = vunpack.c.l.b16 %v3918
    %v4348 = vunpack.c.h.b16 %v3918
    %v4349 = vunpack.c.l.b16 %v3919
    %v4350 = vunpack.c.h.b16 %v3919
    %v4351 = vunpack.c.l.b16 %v3920
    %v4352 = vunpack.c.h.b16 %v3920
    %v4353 = vunpack.c.l.b16 %v3921
    %v4354 = vunpack.c.h.b16 %v3921
    %v4355 = vunpack.c.l.b16 %v3922
    %v4356 = vunpack.c.h.b16 %v3922
    %v4357 = vunpack.c.l.b16 %v3923
    %v4358 = vunpack.c.h.b16 %v3923
    %v4359 = vunpack.c.l.b16 %v3924
    %v4360 = vunpack.c.h.b16 %v3924
    %v4361 = vunpack.c.l.b16 %v3925
    %v4362 = vunpack.c.h.b16 %v3925
    %v4363 = vunpack.c.l.b16 %v3926
    %v4364 = vunpack.c.h.b16 %v3926
    %v4365 = vunpack.c.l.b16 %v3927
    %v4366 = vunpack.c.h.b16 %v3927
    %v4367 = vunpack.c.l.b16 %v3928
    %v4368 = vunpack.c.h.b16 %v3928
    %v4369 = vunpack.c.l.b16 %v3929
    %v4370 = vunpack.c.h.b16 %v3929
    %v4371 = vunpack.c.l.b16 %v3930
    %v4372 = vunpack.c.h.b16 %v3930
    %v4373 = vunpack.c.l.b16 %v3931
    %v4374 = vunpack.c.h.b16 %v3931
    %v4375 = vunpack.c.l.b16 %v3932
    %v4376 = vunpack.c.h.b16 %v3932
    %v4377 = vunpack.c.l.b16 %v3933
    %v4378 = vunpack.c.h.b16 %v3933
    %v4379 = vunpack.c.l.b16 %v3934
    %v4380 = vunpack.c.h.b16 %v3934
    %v4381 = vunpack.c.l.b16 %v3935
    %v4382 = vunpack.c.h.b16 %v3935
    %v4383 = vunpack.c.l.b16 %v3936
    %v4384 = vunpack.c.h.b16 %v3936
    %v4385 = vunpack.c.l.b16 %v3937
    %v4386 = vunpack.c.h.b16 %v3937
    %v4387 = vunpack.c.l.b16 %v3938
    %v4388 = vunpack.c.h.b16 %v3938
    %v4389 = vunpack.c.l.b16 %v3939
    %v4390 = vunpack.c.h.b16 %v3939
    %v4391 = vunpack.c.l.b16 %v3940
    %v4392 = vunpack.c.h.b16 %v3940
    %v4393 = vunpack.c.l.b16 %v3941
    %v4394 = vunpack.c.h.b16 %v3941
    %v4395 = vunpack.c.l.b16 %v3942
    %v4396 = vunpack.c.h.b16 %v3942
    %v4397 = vunpack.c.l.b16 %v3943
    %v4398 = vunpack.c.h.b16 %v3943
    %v4399 = vunpack.c.l.b16 %v3944
    %v4400 = vunpack.c.h.b16 %v3944
    %v4401 = vunpack.c.l.b16 %v3945
    %v4402 = vunpack.c.h.b16 %v3945
    %v4403 = vunpack.c.l.b16 %v3946
    %v4404 = vunpack.c.h.b16 %v3946
    %v4405 = vunpack.c.l.b16 %v3947
    %v4406 = vunpack.c.h.b16 %v3947
    %v4407 = vunpack.c.l.b16 %v3948
    %v4408 = vunpack.c.h.b16 %v3948
    %v4409 = vunpack.c.l.b16 %v3949
    %v4410 = vunpack.c.h.b16 %v3949
    %v4411 = vunpack.c.l.b16 %v3950
    %v4412 = vunpack.c.h.b16 %v3950
    %v4413 = vunpack.c.l.b16 %v3951
    %v4414 = vunpack.c.h.b16 %v3951
    %v4415 = vunpack.c.l.b16 %v3952
    %v4416 = vunpack.c.h.b16 %v3952
    %v4417 = vunpack.c.l.b16 %v3953
    %v4418 = vunpack.c.h.b16 %v3953
    %v4419 = vunpack.c.l.b16 %v3954
    %v4420 = vunpack.c.h.b16 %v3954
    %v4421 = vunpack.c.l.b16 %v3955
    %v4422 = vunpack.c.h.b16 %v3955
    %v4423 = vunpack.c.l.b16 %v3956
    %v4424 = vunpack.c.h.b16 %v3956
    %v4425 = vunpack.c.l.b16 %v3957
    %v4426 = vunpack.c.h.b16 %v3957
    %v4427 = vunpack.c.l.b16 %v3958
    %v4428 = vunpack.c.h.b16 %v3958
    %v4429 = vunpack.c.l.b16 %v3959
    %v4430 = vunpack.c.h.b16 %v3959
    %v4431 = vunpack.c.l.b16 %v3960
    %v4432 = vunpack.c.h.b16 %v3960
    %v4433 = vunpack.c.l.b16 %v3961
    %v4434 = vunpack.c.h.b16 %v3961
    %v4435 = vunpack.c.l.b16 %v3962
    %v4436 = vunpack.c.h.b16 %v3962
    %v4437 = vunpack.c.l.b16 %v3963
    %v4438 = vunpack.c.h.b16 %v3963
    %v4439 = vunpack.c.l.b16 %v3964
    %v4440 = vunpack.c.h.b16 %v3964
    %v4441 = vunpack.c.l.b16 %v3965
    %v4442 = vunpack.c.h.b16 %v3965
    %v4443 = vunpack.c.l.b16 %v3966
    %v4444 = vunpack.c.h.b16 %v3966
    %v4445 = vunpack.c.l.b16 %v3967
    %v4446 = vunpack.c.h.b16 %v3967
    %v4447 = vunpack.c.l.b16 %v3968
    %v4448 = vunpack.c.h.b16 %v3968
    %v4449 = vunpack.c.l.b16 %v3969
    %v4450 = vunpack.c.h.b16 %v3969
    %v4451 = vunpack.c.l.b16 %v3970
    %v4452 = vunpack.c.h.b16 %v3970
    %v4453 = vunpack.c.l.b16 %v3971
    %v4454 = vunpack.c.h.b16 %v3971
    %v4455 = vunpack.c.l.b16 %v3972
    %v4456 = vunpack.c.h.b16 %v3972
    %v4457 = vunpack.c.l.b16 %v3973
    %v4458 = vunpack.c.h.b16 %v3973
    %v4459 = vunpack.c.l.b16 %v3974
    %v4460 = vunpack.c.h.b16 %v3974
    %v4461 = vunpack.c.l.b16 %v3975
    %v4462 = vunpack.c.h.b16 %v3975
    %v4463 = vunpack.c.l.b16 %v3976
    %v4464 = vunpack.c.h.b16 %v3976
    %v4465 = vunpack.c.l.b16 %v3977
    %v4466 = vunpack.c.h.b16 %v3977
    %v4467 = vunpack.c.l.b16 %v3978
    %v4468 = vunpack.c.h.b16 %v3978
    %v4469 = vunpack.c.l.b16 %v3979
    %v4470 = vunpack.c.h.b16 %v3979
    %v4471 = vunpack.c.l.b16 %v3980
    %v4472 = vunpack.c.h.b16 %v3980
    %v4473 = vunpack.c.l.b16 %v3981
    %v4474 = vunpack.c.h.b16 %v3981
    %v4475 = vunpack.c.l.b16 %v3982
    %v4476 = vunpack.c.h.b16 %v3982
    %v4477 = vunpack.c.l.b16 %v3983
    %v4478 = vunpack.c.h.b16 %v3983
    %v4479 = vunpack.c.l.b16 %v3984
    %v4480 = vunpack.c.h.b16 %v3984
    %v4481 = vunpack.c.l.b16 %v3985
    %v4482 = vunpack.c.h.b16 %v3985
    %v4483 = vunpack.c.l.b16 %v3986
    %v4484 = vunpack.c.h.b16 %v3986
    %v4485 = vunpack.c.l.b16 %v3987
    %v4486 = vunpack.c.h.b16 %v3987
    %v4487 = vunpack.c.l.b16 %v3988
    %v4488 = vunpack.c.h.b16 %v3988
    %v4489 = vunpack.c.l.b16 %v3989
    %v4490 = vunpack.c.h.b16 %v3989
    %v4491 = vunpack.c.l.b16 %v3990
    %v4492 = vunpack.c.h.b16 %v3990
    %v4493 = vunpack.c.l.b16 %v3991
    %v4494 = vunpack.c.h.b16 %v3991
    %v4495 = vunpack.c.l.b16 %v3992
    %v4496 = vunpack.c.h.b16 %v3992
    %v4497 = vunpack.c.l.b16 %v3993
    %v4498 = vunpack.c.h.b16 %v3993
    %v4499 = vunpack.c.l.b16 %v3994
    %v4500 = vunpack.c.h.b16 %v3994
    %v4501 = vunpack.c.l.b16 %v3995
    %v4502 = vunpack.c.h.b16 %v3995
    %v4503 = vunpack.c.l.b16 %v3996
    %v4504 = vunpack.c.h.b16 %v3996
    %v4505 = vunpack.c.l.b16 %v3997
    %v4506 = vunpack.c.h.b16 %v3997
    %v4507 = vunpack.c.l.b16 %v3998
    %v4508 = vunpack.c.h.b16 %v3998
    %v4509 = vunpack.c.l.b16 %v3999
    %v4510 = vunpack.c.h.b16 %v3999
    %v4511 = vunpack.c.l.b16 %v4000
    %v4512 = vunpack.c.h.b16 %v4000
    %v4513 = vunpack.c.l.b16 %v4001
    %v4514 = vunpack.c.h.b16 %v4001
    %v4515 = vunpack.c.l.b16 %v4002
    %v4516 = vunpack.c.h.b16 %v4002
    %v4517 = vunpack.c.l.b16 %v4003
    %v4518 = vunpack.c.h.b16 %v4003
    %v4519 = vunpack.c.l.b16 %v4004
    %v4520 = vunpack.c.h.b16 %v4004
    %v4521 = vunpack.c.l.b16 %v4005
    %v4522 = vunpack.c.h.b16 %v4005
    %v4523 = vunpack.c.l.b16 %v4006
    %v4524 = vunpack.c.h.b16 %v4006
    %v4525 = vunpack.c.l.b16 %v4007
    %v4526 = vunpack.c.h.b16 %v4007
    %v4527 = vunpack.c.l.b16 %v4008
    %v4528 = vunpack.c.h.b16 %v4008
    %v4529 = vunpack.c.l.b16 %v4009
    %v4530 = vunpack.c.h.b16 %v4009
    %v4531 = vunpack.c.l.b16 %v4010
    %v4532 = vunpack.c.h.b16 %v4010
    %v4533 = vunpack.c.l.b16 %v4011
    %v4534 = vunpack.c.h.b16 %v4011
    %v4535 = vunpack.c.l.b16 %v4012
    %v4536 = vunpack.c.h.b16 %v4012
    %v4537 = vunpack.c.l.b16 %v4013
    %v4538 = vunpack.c.h.b16 %v4013
    %v4539 = vunpack.c.l.b16 %v4014
    %v4540 = vunpack.c.h.b16 %v4014
    %v4541 = vunpack.c.l.b16 %v4015
    %v4542 = vunpack.c.h.b16 %v4015
    %v4543 = vunpack.c.l.b16 %v4016
    %v4544 = vunpack.c.h.b16 %v4016
    %v4545 = vunpack.c.l.b16 %v4017
    %v4546 = vunpack.c.h.b16 %v4017
    %v4547 = vunpack.c.l.b16 %v4018
    %v4548 = vunpack.c.h.b16 %v4018
    %v4549 = vunpack.c.l.b16 %v4019
    %v4550 = vunpack.c.h.b16 %v4019
    %v4551 = vunpack.c.l.b16 %v4020
    %v4552 = vunpack.c.h.b16 %v4020
    %v4553 = vunpack.c.l.b16 %v4021
    %v4554 = vunpack.c.h.b16 %v4021
    %v4555 = vunpack.c.l.b16 %v4022
    %v4556 = vunpack.c.h.b16 %v4022
    %v4557 = vunpack.c.l.b16 %v4023
    %v4558 = vunpack.c.h.b16 %v4023
    %v4559 = vunpack.c.l.b16 %v4024
    %v4560 = vunpack.c.h.b16 %v4024
    %v4561 = vunpack.c.l.b16 %v4025
    %v4562 = vunpack.c.h.b16 %v4025
    %v4563 = vunpack.c.l.b16 %v4026
    %v4564 = vunpack.c.h.b16 %v4026
    %v4565 = vunpack.c.l.b16 %v4027
    %v4566 = vunpack.c.h.b16 %v4027
    %v4567 = vunpack.c.l.b16 %v4028
    %v4568 = vunpack.c.h.b16 %v4028
    %v4569 = vunpack.c.l.b16 %v4029
    %v4570 = vunpack.c.h.b16 %v4029
    %v4571 = vunpack.c.l.b16 %v4030
    %v4572 = vunpack.c.h.b16 %v4030
    %v4573 = vunpack.c.l.b16 %v4031
    %v4574 = vunpack.c.h.b16 %v4031
    %v4575 = vunpack.c.l.b16 %v4032
    %v4576 = vunpack.c.h.b16 %v4032
    %v4577 = vunpack.c.l.b16 %v4033
    %v4578 = vunpack.c.h.b16 %v4033
    %v4579 = vunpack.c.l.b16 %v4034
    %v4580 = vunpack.c.h.b16 %v4034
    %v4581 = vunpack.c.l.b16 %v4035
    %v4582 = vunpack.c.h.b16 %v4035
    %v4583 = vunpack.c.l.b16 %v4036
    %v4584 = vunpack.c.h.b16 %v4036
    %v4585 = vunpack.c.l.b16 %v4037
    %v4586 = vunpack.c.h.b16 %v4037
    %v4587 = vunpack.c.l.b16 %v4038
    %v4588 = vunpack.c.h.b16 %v4038
    %v4589 = vunpack.c.l.b16 %v4039
    %v4590 = vunpack.c.h.b16 %v4039
    %v4591 = vunpack.c.l.b16 %v4040
    %v4592 = vunpack.c.h.b16 %v4040
    %v4593 = vunpack.c.l.b16 %v4041
    %v4594 = vunpack.c.h.b16 %v4041
    %v4595 = vunpack.c.l.b16 %v4042
    %v4596 = vunpack.c.h.b16 %v4042
    %v4597 = vunpack.c.l.b16 %v4043
    %v4598 = vunpack.c.h.b16 %v4043
    %v4599 = vunpack.c.l.b16 %v4044
    %v4600 = vunpack.c.h.b16 %v4044
    %v4601 = vunpack.c.l.b16 %v4045
    %v4602 = vunpack.c.h.b16 %v4045
    %v4603 = vunpack.c.l.b16 %v4046
    %v4604 = vunpack.c.h.b16 %v4046
    %v4605 = vunpack.c.l.b16 %v4047
    %v4606 = vunpack.c.h.b16 %v4047
    %v4607 = vunpack.c.l.b16 %v4048
    %v4608 = vunpack.c.h.b16 %v4048
    %v4609 = vunpack.c.l.b16 %v4049
    %v4610 = vunpack.c.h.b16 %v4049
    %v4611 = vunpack.c.l.b16 %v4050
    %v4612 = vunpack.c.h.b16 %v4050
    %v4613 = vunpack.c.l.b16 %v4051
    %v4614 = vunpack.c.h.b16 %v4051
    %v4615 = vunpack.c.l.b16 %v4052
    %v4616 = vunpack.c.h.b16 %v4052
    %v4617 = vunpack.c.l.b16 %v4053
    %v4618 = vunpack.c.h.b16 %v4053
    %v4619 = vunpack.c.l.b16 %v4054
    %v4620 = vunpack.c.h.b16 %v4054
    %v4621 = vunpack.c.l.b16 %v4055
    %v4622 = vunpack.c.h.b16 %v4055
    %v4623 = vunpack.c.l.b16 %v4056
    %v4624 = vunpack.c.h.b16 %v4056
    %v4625 = vunpack.c.l.b16 %v4057
    %v4626 = vunpack.c.h.b16 %v4057
    %v4627 = vunpack.c.l.b16 %v4058
    %v4628 = vunpack.c.h.b16 %v4058
    %v4629 = vunpack.c.l.b16 %v4059
    %v4630 = vunpack.c.h.b16 %v4059
    %v4631 = vunpack.c.l.b16 %v4060
    %v4632 = vunpack.c.h.b16 %v4060
    %v4633 = vunpack.c.l.b16 %v4061
    %v4634 = vunpack.c.h.b16 %v4061
    %v4635 = vunpack.c.l.b16 %v4062
    %v4636 = vunpack.c.h.b16 %v4062
    %v4637 = vunpack.c.l.b16 %v4063
    %v4638 = vunpack.c.h.b16 %v4063
    %v4639 = vunpack.c.l.b16 %v4064
    %v4640 = vunpack.c.h.b16 %v4064
    %v4641 = vunpack.c.l.b16 %v4065
    %v4642 = vunpack.c.h.b16 %v4065
    %v4643 = vunpack.c.l.b16 %v4066
    %v4644 = vunpack.c.h.b16 %v4066
    %v4645 = vunpack.c.l.b16 %v4067
    %v4646 = vunpack.c.h.b16 %v4067
    %v4647 = vunpack.c.l.b16 %v4068
    %v4648 = vunpack.c.h.b16 %v4068
    %v4649 = vunpack.c.l.b16 %v4069
    %v4650 = vunpack.c.h.b16 %v4069
    %v4651 = vunpack.c.l.b16 %v4070
    %v4652 = vunpack.c.h.b16 %v4070
    %v4653 = vunpack.c.l.b16 %v4071
    %v4654 = vunpack.c.h.b16 %v4071
    %v4655 = vunpack.c.l.b16 %v4072
    %v4656 = vunpack.c.h.b16 %v4072
    %v4657 = vunpack.c.l.b16 %v4073
    %v4658 = vunpack.c.h.b16 %v4073
    %v4659 = vunpack.c.l.b16 %v4074
    %v4660 = vunpack.c.h.b16 %v4074
    %v4661 = vunpack.c.l.b16 %v4075
    %v4662 = vunpack.c.h.b16 %v4075
    %v4663 = vunpack.c.l.b16 %v4076
    %v4664 = vunpack.c.h.b16 %v4076
    %v4665 = vunpack.c.l.b16 %v4077
    %v4666 = vunpack.c.h.b16 %v4077
    %v4667 = vunpack.c.l.b16 %v4078
    %v4668 = vunpack.c.h.b16 %v4078
    %v4669 = vunpack.c.l.b16 %v4079
    %v4670 = vunpack.c.h.b16 %v4079
    %v4671 = vunpack.c.l.b16 %v4080
    %v4672 = vunpack.c.h.b16 %v4080
    %v4673 = vunpack.c.l.b16 %v4081
    %v4674 = vunpack.c.h.b16 %v4081
    %v4675 = vunpack.c.l.b16 %v4082
    %v4676 = vunpack.c.h.b16 %v4082
    %v4677 = vunpack.c.l.b16 %v4083
    %v4678 = vunpack.c.h.b16 %v4083
    %v4679 = vunpack.c.l.b16 %v4084
    %v4680 = vunpack.c.h.b16 %v4084
    %v4681 = vunpack.c.l.b16 %v4085
    %v4682 = vunpack.c.h.b16 %v4085
    %v4683 = vunpack.c.l.b16 %v4086
    %v4684 = vunpack.c.h.b16 %v4086
    %v4685 = vunpack.c.l.b16 %v4087
    %v4686 = vunpack.c.h.b16 %v4087
    %v4687 = vunpack.c.l.b16 %v4088
    %v4688 = vunpack.c.h.b16 %v4088
    %v4689 = vunpack.c.l.b16 %v4089
    %v4690 = vunpack.c.h.b16 %v4089
    %v4691 = vunpack.c.l.b16 %v4090
    %v4692 = vunpack.c.h.b16 %v4090
    %v4693 = vunpack.c.l.b16 %v4091
    %v4694 = vunpack.c.h.b16 %v4091
    %v4695 = vunpack.c.l.b16 %v4092
    %v4696 = vunpack.c.h.b16 %v4092
    %v4697 = vunpack.c.l.b16 %v4093
    %v4698 = vunpack.c.h.b16 %v4093
    %v4699 = vunpack.c.l.b16 %v4094
    %v4700 = vunpack.c.h.b16 %v4094
    %v4701 = vunpack.c.l.b16 %v4095
    %v4702 = vunpack.c.h.b16 %v4095
    %v4703 = vunpack.c.l.b16 %v4096
    %v4704 = vunpack.c.h.b16 %v4096
    %v4705 = vunpack.c.l.b16 %v4097
    %v4706 = vunpack.c.h.b16 %v4097
    %v4707 = vunpack.c.l.b16 %v4098
    %v4708 = vunpack.c.h.b16 %v4098
    %v4709 = vunpack.c.l.b16 %v4099
    %v4710 = vunpack.c.h.b16 %v4099
    %v4711 = vunpack.c.l.b16 %v4100
    %v4712 = vunpack.c.h.b16 %v4100
    %v4713 = vunpack.c.l.b16 %v4101
    %v4714 = vunpack.c.h.b16 %v4101
    %v4715 = vunpack.c.l.b16 %v4102
    %v4716 = vunpack.c.h.b16 %v4102
    %v4717 = vunpack.c.l.b16 %v4103
    %v4718 = vunpack.c.h.b16 %v4103
    %v4719 = vunpack.c.l.b16 %v4104
    %v4720 = vunpack.c.h.b16 %v4104
    %v4721 = vunpack.c.l.b16 %v4105
    %v4722 = vunpack.c.h.b16 %v4105
    %v4723 = vunpack.c.l.b16 %v4106
    %v4724 = vunpack.c.h.b16 %v4106
    %v4725 = vpack.c.b16 %v4345, %v4341
    %v4726 = vpack.c.b16 %v4346, %v4342
    %v4727 = vpack.c.b16 %v4347, %v4343
    %v4728 = vpack.c.b16 %v4348, %v4344
    %v4729 = vpack.c.b16 %v4353, %v4349
    %v4730 = vpack.c.b16 %v4354, %v4350
    %v4731 = vpack.c.b16 %v4355, %v4351
    %v4732 = vpack.c.b16 %v4356, %v4352
    %v4733 = vpack.c.b16 %v4361, %v4357
    %v4734 = vpack.c.b16 %v4362, %v4358
    %v4735 = vpack.c.b16 %v4363, %v4359
    %v4736 = vpack.c.b16 %v4364, %v4360
    %v4737 = vpack.c.b16 %v4369, %v4365
    %v4738 = vpack.c.b16 %v4370, %v4366
    %v4739 = vpack.c.b16 %v4371, %v4367
    %v4740 = vpack.c.b16 %v4372, %v4368
    %v4741 = vpack.c.b16 %v4377, %v4373
    %v4742 = vpack.c.b16 %v4378, %v4374
    %v4743 = vpack.c.b16 %v4379, %v4375
    %v4744 = vpack.c.b16 %v4380, %v4376
    %v4745 = vpack.c.b16 %v4385, %v4381
    %v4746 = vpack.c.b16 %v4386, %v4382
    %v4747 = vpack.c.b16 %v4387, %v4383
    %v4748 = vpack.c.b16 %v4388, %v4384
    %v4749 = vpack.c.b16 %v4393, %v4389
    %v4750 = vpack.c.b16 %v4394, %v4390
    %v4751 = vpack.c.b16 %v4395, %v4391
    %v4752 = vpack.c.b16 %v4396, %v4392
    %v4753 = vpack.c.b16 %v4401, %v4397
    %v4754 = vpack.c.b16 %v4402, %v4398
    %v4755 = vpack.c.b16 %v4403, %v4399
    %v4756 = vpack.c.b16 %v4404, %v4400
    %v4757 = vpack.c.b16 %v4409, %v4405
    %v4758 = vpack.c.b16 %v4410, %v4406
    %v4759 = vpack.c.b16 %v4411, %v4407
    %v4760 = vpack.c.b16 %v4412, %v4408
    %v4761 = vpack.c.b16 %v4417, %v4413
    %v4762 = vpack.c.b16 %v4418, %v4414
    %v4763 = vpack.c.b16 %v4419, %v4415
    %v4764 = vpack.c.b16 %v4420, %v4416
    %v4765 = vpack.c.b16 %v4425, %v4421
    %v4766 = vpack.c.b16 %v4426, %v4422
    %v4767 = vpack.c.b16 %v4427, %v4423
    %v4768 = vpack.c.b16 %v4428, %v4424
    %v4769 = vpack.c.b16 %v4433, %v4429
    %v4770 = vpack.c.b16 %v4434, %v4430
    %v4771 = vpack.c.b16 %v4435, %v4431
    %v4772 = vpack.c.b16 %v4436, %v4432
    %v4773 = vpack.c.b16 %v4441, %v4437
    %v4774 = vpack.c.b16 %v4442, %v4438
    %v4775 = vpack.c.b16 %v4443, %v4439
    %v4776 = vpack.c.b16 %v4444, %v4440
    %v4777 = vpack.c.b16 %v4449, %v4445
    %v4778 = vpack.c.b16 %v4450, %v4446
    %v4779 = vpack.c.b16 %v4451, %v4447
    %v4780 = vpack.c.b16 %v4452, %v4448
    %v4781 = vpack.c.b16 %v4457, %v4453
    %v4782 = vpack.c.b16 %v4458, %v4454
    %v4783 = vpack.c.b16 %v4459, %v4455
    %v4784 = vpack.c.b16 %v4460, %v4456
    %v4785 = vpack.c.b16 %v4465, %v4461
    %v4786 = vpack.c.b16 %v4466, %v4462
    %v4787 = vpack.c.b16 %v4467, %v4463
    %v4788 = vpack.c.b16 %v4468, %v4464
    %v4789 = vpack.c.b16 %v4473, %v4469
    %v4790 = vpack.c.b16 %v4474, %v4470
    %v4791 = vpack.c.b16 %v4475, %v4471
    %v4792 = vpack.c.b16 %v4476, %v4472
    %v4793 = vpack.c.b16 %v4481, %v4477
    %v4794 = vpack.c.b16 %v4482, %v4478
    %v4795 = vpack.c.b16 %v4483, %v4479
    %v4796 = vpack.c.b16 %v4484, %v4480
    %v4797 = vpack.c.b16 %v4489, %v4485
    %v4798 = vpack.c.b16 %v4490, %v4486
    %v4799 = vpack.c.b16 %v4491, %v4487
    %v4800 = vpack.c.b16 %v4492, %v4488
    %v4801 = vpack.c.b16 %v4497, %v4493
    %v4802 = vpack.c.b16 %v4498, %v4494
    %v4803 = vpack.c.b16 %v4499, %v4495
    %v4804 = vpack.c.b16 %v4500, %v4496
    %v4805 = vpack.c.b16 %v4505, %v4501
    %v4806 = vpack.c.b16 %v4506, %v4502
    %v4807 = vpack.c.b16 %v4507, %v4503
    %v4808 = vpack.c.b16 %v4508, %v4504
    %v4809 = vpack.c.b16 %v4513, %v4509
    %v4810 = vpack.c.b16 %v4514, %v4510
    %v4811 = vpack.c.b16 %v4515, %v4511
    %v4812 = vpack.c.b16 %v4516, %v4512
    %v4813 = vpack.c.b16 %v4521, %v4517
    %v4814 = vpack.c.b16 %v4522, %v4518
    %v4815 = vpack.c.b16 %v4523, %v4519
    %v4816 = vpack.c.b16 %v4524, %v4520
    %v4817 = vpack.c.b16 %v4529, %v4525
    %v4818 = vpack.c.b16 %v4530, %v4526
    %v4819 = vpack.c.b16 %v4531, %v4527
    %v4820 = vpack.c.b16 %v4532, %v4528
    %v4821 = vpack.c.b16 %v4537, %v4533
    %v4822 = vpack.c.b16 %v4538, %v4534
    %v4823 = vpack.c.b16 %v4539, %v4535
    %v4824 = vpack.c.b16 %v4540, %v4536
    %v4825 = vpack.c.b16 %v4545, %v4541
    %v4826 = vpack.c.b16 %v4546, %v4542
    %v4827 = vpack.c.b16 %v4547, %v4543
    %v4828 = vpack.c.b16 %v4548, %v4544
    %v4829 = vpack.c.b16 %v4553, %v4549
    %v4830 = vpack.c.b16 %v4554, %v4550
    %v4831 = vpack.c.b16 %v4555, %v4551
    %v4832 = vpack.c.b16 %v4556, %v4552
    %v4833 = vpack.c.b16 %v4561, %v4557
    %v4834 = vpack.c.b16 %v4562, %v4558
    %v4835 = vpack.c.b16 %v4563, %v4559
    %v4836 = vpack.c.b16 %v4564, %v4560
    %v4837 = vpack.c.b16 %v4569, %v4565
    %v4838 = vpack.c.b16 %v4570, %v4566
    %v4839 = vpack.c.b16 %v4571, %v4567
    %v4840 = vpack.c.b16 %v4572, %v4568
    %v4841 = vpack.c.b16 %v4577, %v4573
    %v4842 = vpack.c.b16 %v4578, %v4574
    %v4843 = vpack.c.b16 %v4579, %v4575
    %v4844 = vpack.c.b16 %v4580, %v4576
    %v4845 = vpack.c.b16 %v4585, %v4581
    %v4846 = vpack.c.b16 %v4586, %v4582
    %v4847 = vpack.c.b16 %v4587, %v4583
    %v4848 = vpack.c.b16 %v4588, %v4584
    %v4849 = vpack.c.b16 %v4593, %v4589
    %v4850 = vpack.c.b16 %v4594, %v4590
    %v4851 = vpack.c.b16 %v4595, %v4591
    %v4852 = vpack.c.b16 %v4596, %v4592
    %v4853 = vpack.c.b16 %v4601, %v4597
    %v4854 = vpack.c.b16 %v4602, %v4598
    %v4855 = vpack.c.b16 %v4603, %v4599
    %v4856 = vpack.c.b16 %v4604, %v4600
    %v4857 = vpack.c.b16 %v4609, %v4605
    %v4858 = vpack.c.b16 %v4610, %v4606
    %v4859 = vpack.c.b16 %v4611, %v4607
    %v4860 = vpack.c.b16 %v4612, %v4608
    %v4861 = vpack.c.b16 %v4617, %v4613
    %v4862 = vpack.c.b16 %v4618, %v4614
    %v4863 = vpack.c.b16 %v4619, %v4615
    %v4864 = vpack.c.b16 %v4620, %v4616
    %v4865 = vpack.c.b16 %v4625, %v4621
    %v4866 = vpack.c.b16 %v4626, %v4622
    %v4867 = vpack.c.b16 %v4627, %v4623
    %v4868 = vpack.c.b16 %v4628, %v4624
    %v4869 = vpack.c.b16 %v4633, %v4629
    %v4870 = vpack.c.b16 %v4634, %v4630
    %v4871 = vpack.c.b16 %v4635, %v4631
    %v4872 = vpack.c.b16 %v4636, %v4632
    %v4873 = vpack.c.b16 %v4641, %v4637
    %v4874 = vpack.c.b16 %v4642, %v4638
    %v4875 = vpack.c.b16 %v4643, %v4639
    %v4876 = vpack.c.b16 %v4644, %v4640
    %v4877 = vpack.c.b16 %v4649, %v4645
    %v4878 = vpack.c.b16 %v4650, %v4646
    %v4879 = vpack.c.b16 %v4651, %v4647
    %v4880 = vpack.c.b16 %v4652, %v4648
    %v4881 = vpack.c.b16 %v4657, %v4653
    %v4882 = vpack.c.b16 %v4658, %v4654
    %v4883 = vpack.c.b16 %v4659, %v4655
    %v4884 = vpack.c.b16 %v4660, %v4656
    %v4885 = vpack.c.b16 %v4665, %v4661
    %v4886 = vpack.c.b16 %v4666, %v4662
    %v4887 = vpack.c.b16 %v4667, %v4663
    %v4888 = vpack.c.b16 %v4668, %v4664
    %v4889 = vpack.c.b16 %v4673, %v4669
    %v4890 = vpack.c.b16 %v4674, %v4670
    %v4891 = vpack.c.b16 %v4675, %v4671
    %v4892 = vpack.c.b16 %v4676, %v4672
    %v4893 = vpack.c.b16 %v4681, %v4677
    %v4894 = vpack.c.b16 %v4682, %v4678
    %v4895 = vpack.c.b16 %v4683, %v4679
    %v4896 = vpack.c.b16 %v4684, %v4680
    %v4897 = vpack.c.b16 %v4689, %v4685
    %v4898 = vpack.c.b16 %v4690, %v4686
    %v4899 = vpack.c.b16 %v4691, %v4687
    %v4900 = vpack.c.b16 %v4692, %v4688
    %v4901 = vpack.c.b16 %v4697, %v4693
    %v4902 = vpack.c.b16 %v4698, %v4694
    %v4903 = vpack.c.b16 %v4699, %v4695
    %v4904 = vpack.c.b16 %v4700, %v4696
    %v4905 = vpack.c.b16 %v4705, %v4701
    %v4906 = vpack.c.b16 %v4706, %v4702
    %v4907 = vpack.c.b16 %v4707, %v4703
    %v4908 = vpack.c.b16 %v4708, %v4704
    %v4909 = vpack.c.b16 %v4713, %v4709
    %v4910 = vpack.c.b16 %v4714, %v4710
    %v4911 = vpack.c.b16 %v4715, %v4711
    %v4912 = vpack.c.b16 %v4716, %v4712
    %v4913 = vpack.c.b16 %v4721, %v4717
    %v4914 = vpack.c.b16 %v4722, %v4718
    %v4915 = vpack.c.b16 %v4723, %v4719
    %v4916 = vpack.c.b16 %v4724, %v4720
    %5109 = vmatpush.bf16.msra.mxu0 %v4753
    %5110 = vmatpush.bf16.msra.mxu0 %v4749
    %5111 = vmatpush.bf16.msra.mxu0 %v4745
    %5112 = vmatpush.bf16.msra.mxu0 %v4741
    %5113 = vmatpush.bf16.msra.mxu0 %v4737
    %5114 = vmatpush.bf16.msra.mxu0 %v4733
    %5115 = vmatpush.bf16.msra.mxu0 %v4729
    %5116 = vmatpush.bf16.msra.mxu0 %v4725
    %5117 = vmatmul.bf16.gmra.mxu0 %v4137
    %v5118 = vpop.f32.mrf.mxu0
    %v5119 = vadd.f32 0.0, %v5118
    %v5120 = vpop.f32.mrf.mxu0
    %5121 = vdwg.mxu0
    %5122 = vmatpush.bf16.msra.mxu0 %v4785
    %5123 = vmatpush.bf16.msra.mxu0 %v4781
    %5124 = vmatpush.bf16.msra.mxu0 %v4777
    %5125 = vmatpush.bf16.msra.mxu0 %v4773
    %5126 = vmatpush.bf16.msra.mxu0 %v4769
    %5127 = vmatpush.bf16.msra.mxu0 %v4765
    %5128 = vmatpush.bf16.msra.mxu0 %v4761
    %5129 = vmatpush.bf16.msra.mxu0 %v4757
    %5130 = vmatmul.bf16.gmra.mxu0 %v4138
    %v5131 = vpop.f32.mrf.mxu0
    %v5132 = vadd.f32 %v5119, %v5131
    %v5133 = vpop.f32.mrf.mxu0
    %5134 = vdwg.mxu0
    %5135 = vmatpush.bf16.msra.mxu0 %v4817
    %5136 = vmatpush.bf16.msra.mxu0 %v4813
    %5137 = vmatpush.bf16.msra.mxu0 %v4809
    %5138 = vmatpush.bf16.msra.mxu0 %v4805
    %5139 = vmatpush.bf16.msra.mxu0 %v4801
    %5140 = vmatpush.bf16.msra.mxu0 %v4797
    %5141 = vmatpush.bf16.msra.mxu0 %v4793
    %5142 = vmatpush.bf16.msra.mxu0 %v4789
    %5143 = vmatmul.bf16.gmra.mxu0 %v4139
    %v5144 = vpop.f32.mrf.mxu0
    %v5145 = vadd.f32 %v5132, %v5144
    %v5146 = vpop.f32.mrf.mxu0
    %5147 = vdwg.mxu0
    %5148 = vmatpush.bf16.msra.mxu0 %v4849
    %5149 = vmatpush.bf16.msra.mxu0 %v4845
    %5150 = vmatpush.bf16.msra.mxu0 %v4841
    %5151 = vmatpush.bf16.msra.mxu0 %v4837
    %5152 = vmatpush.bf16.msra.mxu0 %v4833
    %5153 = vmatpush.bf16.msra.mxu0 %v4829
    %5154 = vmatpush.bf16.msra.mxu0 %v4825
    %5155 = vmatpush.bf16.msra.mxu0 %v4821
    %5156 = vmatmul.bf16.gmra.mxu0 %v4140
    %v5157 = vpop.f32.mrf.mxu0
    %v5158 = vadd.f32 %v5145, %v5157
    %v5159 = vpop.f32.mrf.mxu0
    %5160 = vdwg.mxu0
    %5161 = vmatpush.bf16.msra.mxu0 %v4881
    %5162 = vmatpush.bf16.msra.mxu0 %v4877
    %5163 = vmatpush.bf16.msra.mxu0 %v4873
    %5164 = vmatpush.bf16.msra.mxu0 %v4869
    %5165 = vmatpush.bf16.msra.mxu0 %v4865
    %5166 = vmatpush.bf16.msra.mxu0 %v4861
    %5167 = vmatpush.bf16.msra.mxu0 %v4857
    %5168 = vmatpush.bf16.msra.mxu0 %v4853
    %5169 = vmatmul.bf16.gmra.mxu0 %v4141
    %v5170 = vpop.f32.mrf.mxu0
    %v5171 = vadd.f32 %v5158, %v5170
    %v5172 = vpop.f32.mrf.mxu0
    %5173 = vdwg.mxu0
    %5174 = vmatpush.bf16.msra.mxu0 %v4913
    %5175 = vmatpush.bf16.msra.mxu0 %v4909
    %5176 = vmatpush.bf16.msra.mxu0 %v4905
    %5177 = vmatpush.bf16.msra.mxu0 %v4901
    %5178 = vmatpush.bf16.msra.mxu0 %v4897
    %5179 = vmatpush.bf16.msra.mxu0 %v4893
    %5180 = vmatpush.bf16.msra.mxu0 %v4889
    %5181 = vmatpush.bf16.msra.mxu0 %v4885
    %5182 = vmatmul.bf16.gmra.mxu0 %v4142
    %v5183 = vpop.f32.mrf.mxu0
    %v5184 = vadd.f32 %v5171, %v5183
    %v5185 = vpop.f32.mrf.mxu0
    %5186 = vdwg.mxu0
    %5187 = vmatpush.bf16.msra.mxu0 %v4754
    %5188 = vmatpush.bf16.msra.mxu0 %v4750
    %5189 = vmatpush.bf16.msra.mxu0 %v4746
    %5190 = vmatpush.bf16.msra.mxu0 %v4742
    %5191 = vmatpush.bf16.msra.mxu0 %v4738
    %5192 = vmatpush.bf16.msra.mxu0 %v4734
    %5193 = vmatpush.bf16.msra.mxu0 %v4730
    %5194 = vmatpush.bf16.msra.mxu0 %v4726
    %5195 = vmatmul.bf16.gmra.mxu0 %v4137
    %v5196 = vpop.f32.mrf.mxu0
    %v5197 = vadd.f32 0.0, %v5196
    %v5198 = vpop.f32.mrf.mxu0
    %5199 = vdwg.mxu0
    %5200 = vmatpush.bf16.msra.mxu0 %v4786
    %5201 = vmatpush.bf16.msra.mxu0 %v4782
    %5202 = vmatpush.bf16.msra.mxu0 %v4778
    %5203 = vmatpush.bf16.msra.mxu0 %v4774
    %5204 = vmatpush.bf16.msra.mxu0 %v4770
    %5205 = vmatpush.bf16.msra.mxu0 %v4766
    %5206 = vmatpush.bf16.msra.mxu0 %v4762
    %5207 = vmatpush.bf16.msra.mxu0 %v4758
    %5208 = vmatmul.bf16.gmra.mxu0 %v4138
    %v5209 = vpop.f32.mrf.mxu0
    %v5210 = vadd.f32 %v5197, %v5209
    %v5211 = vpop.f32.mrf.mxu0
    %5212 = vdwg.mxu0
    %5213 = vmatpush.bf16.msra.mxu0 %v4818
    %5214 = vmatpush.bf16.msra.mxu0 %v4814
    %5215 = vmatpush.bf16.msra.mxu0 %v4810
    %5216 = vmatpush.bf16.msra.mxu0 %v4806
    %5217 = vmatpush.bf16.msra.mxu0 %v4802
    %5218 = vmatpush.bf16.msra.mxu0 %v4798
    %5219 = vmatpush.bf16.msra.mxu0 %v4794
    %5220 = vmatpush.bf16.msra.mxu0 %v4790
    %5221 = vmatmul.bf16.gmra.mxu0 %v4139
    %v5222 = vpop.f32.mrf.mxu0
    %v5223 = vadd.f32 %v5210, %v5222
    %v5224 = vpop.f32.mrf.mxu0
    %5225 = vdwg.mxu0
    %5226 = vmatpush.bf16.msra.mxu0 %v4850
    %5227 = vmatpush.bf16.msra.mxu0 %v4846
    %5228 = vmatpush.bf16.msra.mxu0 %v4842
    %5229 = vmatpush.bf16.msra.mxu0 %v4838
    %5230 = vmatpush.bf16.msra.mxu0 %v4834
    %5231 = vmatpush.bf16.msra.mxu0 %v4830
    %5232 = vmatpush.bf16.msra.mxu0 %v4826
    %5233 = vmatpush.bf16.msra.mxu0 %v4822
    %5234 = vmatmul.bf16.gmra.mxu0 %v4140
    %v5235 = vpop.f32.mrf.mxu0
    %v5236 = vadd.f32 %v5223, %v5235
    %v5237 = vpop.f32.mrf.mxu0
    %5238 = vdwg.mxu0
    %5239 = vmatpush.bf16.msra.mxu0 %v4882
    %5240 = vmatpush.bf16.msra.mxu0 %v4878
    %5241 = vmatpush.bf16.msra.mxu0 %v4874
    %5242 = vmatpush.bf16.msra.mxu0 %v4870
    %5243 = vmatpush.bf16.msra.mxu0 %v4866
    %5244 = vmatpush.bf16.msra.mxu0 %v4862
    %5245 = vmatpush.bf16.msra.mxu0 %v4858
    %5246 = vmatpush.bf16.msra.mxu0 %v4854
    %5247 = vmatmul.bf16.gmra.mxu0 %v4141
    %v5248 = vpop.f32.mrf.mxu0
    %v5249 = vadd.f32 %v5236, %v5248
    %v5250 = vpop.f32.mrf.mxu0
    %5251 = vdwg.mxu0
    %5252 = vmatpush.bf16.msra.mxu0 %v4914
    %5253 = vmatpush.bf16.msra.mxu0 %v4910
    %5254 = vmatpush.bf16.msra.mxu0 %v4906
    %5255 = vmatpush.bf16.msra.mxu0 %v4902
    %5256 = vmatpush.bf16.msra.mxu0 %v4898
    %5257 = vmatpush.bf16.msra.mxu0 %v4894
    %5258 = vmatpush.bf16.msra.mxu0 %v4890
    %5259 = vmatpush.bf16.msra.mxu0 %v4886
    %5260 = vmatmul.bf16.gmra.mxu0 %v4142
    %v5261 = vpop.f32.mrf.mxu0
    %v5262 = vadd.f32 %v5249, %v5261
    %v5263 = vpop.f32.mrf.mxu0
    %5264 = vdwg.mxu0
    %5265 = vmatpush.bf16.msra.mxu0 %v4755
    %5266 = vmatpush.bf16.msra.mxu0 %v4751
    %5267 = vmatpush.bf16.msra.mxu0 %v4747
    %5268 = vmatpush.bf16.msra.mxu0 %v4743
    %5269 = vmatpush.bf16.msra.mxu0 %v4739
    %5270 = vmatpush.bf16.msra.mxu0 %v4735
    %5271 = vmatpush.bf16.msra.mxu0 %v4731
    %5272 = vmatpush.bf16.msra.mxu0 %v4727
    %5273 = vmatmul.bf16.gmra.mxu0 %v4137
    %v5274 = vpop.f32.mrf.mxu0
    %v5275 = vadd.f32 0.0, %v5274
    %v5276 = vpop.f32.mrf.mxu0
    %5277 = vdwg.mxu0
    %5278 = vmatpush.bf16.msra.mxu0 %v4787
    %5279 = vmatpush.bf16.msra.mxu0 %v4783
    %5280 = vmatpush.bf16.msra.mxu0 %v4779
    %5281 = vmatpush.bf16.msra.mxu0 %v4775
    %5282 = vmatpush.bf16.msra.mxu0 %v4771
    %5283 = vmatpush.bf16.msra.mxu0 %v4767
    %5284 = vmatpush.bf16.msra.mxu0 %v4763
    %5285 = vmatpush.bf16.msra.mxu0 %v4759
    %5286 = vmatmul.bf16.gmra.mxu0 %v4138
    %v5287 = vpop.f32.mrf.mxu0
    %v5288 = vadd.f32 %v5275, %v5287
    %v5289 = vpop.f32.mrf.mxu0
    %5290 = vdwg.mxu0
    %5291 = vmatpush.bf16.msra.mxu0 %v4819
    %5292 = vmatpush.bf16.msra.mxu0 %v4815
    %5293 = vmatpush.bf16.msra.mxu0 %v4811
    %5294 = vmatpush.bf16.msra.mxu0 %v4807
    %5295 = vmatpush.bf16.msra.mxu0 %v4803
    %5296 = vmatpush.bf16.msra.mxu0 %v4799
    %5297 = vmatpush.bf16.msra.mxu0 %v4795
    %5298 = vmatpush.bf16.msra.mxu0 %v4791
    %5299 = vmatmul.bf16.gmra.mxu0 %v4139
    %v5300 = vpop.f32.mrf.mxu0
    %v5301 = vadd.f32 %v5288, %v5300
    %v5302 = vpop.f32.mrf.mxu0
    %5303 = vdwg.mxu0
    %5304 = vmatpush.bf16.msra.mxu0 %v4851
    %5305 = vmatpush.bf16.msra.mxu0 %v4847
    %5306 = vmatpush.bf16.msra.mxu0 %v4843
    %5307 = vmatpush.bf16.msra.mxu0 %v4839
    %5308 = vmatpush.bf16.msra.mxu0 %v4835
    %5309 = vmatpush.bf16.msra.mxu0 %v4831
    %5310 = vmatpush.bf16.msra.mxu0 %v4827
    %5311 = vmatpush.bf16.msra.mxu0 %v4823
    %5312 = vmatmul.bf16.gmra.mxu0 %v4140
    %v5313 = vpop.f32.mrf.mxu0
    %v5314 = vadd.f32 %v5301, %v5313
    %v5315 = vpop.f32.mrf.mxu0
    %5316 = vdwg.mxu0
    %5317 = vmatpush.bf16.msra.mxu0 %v4883
    %5318 = vmatpush.bf16.msra.mxu0 %v4879
    %5319 = vmatpush.bf16.msra.mxu0 %v4875
    %5320 = vmatpush.bf16.msra.mxu0 %v4871
    %5321 = vmatpush.bf16.msra.mxu0 %v4867
    %5322 = vmatpush.bf16.msra.mxu0 %v4863
    %5323 = vmatpush.bf16.msra.mxu0 %v4859
    %5324 = vmatpush.bf16.msra.mxu0 %v4855
    %5325 = vmatmul.bf16.gmra.mxu0 %v4141
    %v5326 = vpop.f32.mrf.mxu0
    %v5327 = vadd.f32 %v5314, %v5326
    %v5328 = vpop.f32.mrf.mxu0
    %5329 = vdwg.mxu0
    %5330 = vmatpush.bf16.msra.mxu0 %v4915
    %5331 = vmatpush.bf16.msra.mxu0 %v4911
    %5332 = vmatpush.bf16.msra.mxu0 %v4907
    %5333 = vmatpush.bf16.msra.mxu0 %v4903
    %5334 = vmatpush.bf16.msra.mxu0 %v4899
    %5335 = vmatpush.bf16.msra.mxu0 %v4895
    %5336 = vmatpush.bf16.msra.mxu0 %v4891
    %5337 = vmatpush.bf16.msra.mxu0 %v4887
    %5338 = vmatmul.bf16.gmra.mxu0 %v4142
    %v5339 = vpop.f32.mrf.mxu0
    %v5340 = vadd.f32 %v5327, %v5339
    %v5341 = vpop.f32.mrf.mxu0
    %5342 = vdwg.mxu0
    %5343 = vmatpush.bf16.msra.mxu0 %v4756
    %5344 = vmatpush.bf16.msra.mxu0 %v4752
    %5345 = vmatpush.bf16.msra.mxu0 %v4748
    %5346 = vmatpush.bf16.msra.mxu0 %v4744
    %5347 = vmatpush.bf16.msra.mxu0 %v4740
    %5348 = vmatpush.bf16.msra.mxu0 %v4736
    %5349 = vmatpush.bf16.msra.mxu0 %v4732
    %5350 = vmatpush.bf16.msra.mxu0 %v4728
    %5351 = vmatmul.bf16.gmra.mxu0 %v4137
    %v5352 = vpop.f32.mrf.mxu0
    %v5353 = vadd.f32 0.0, %v5352
    %v5354 = vpop.f32.mrf.mxu0
    %5355 = vdwg.mxu0
    %5356 = vmatpush.bf16.msra.mxu0 %v4788
    %5357 = vmatpush.bf16.msra.mxu0 %v4784
    %5358 = vmatpush.bf16.msra.mxu0 %v4780
    %5359 = vmatpush.bf16.msra.mxu0 %v4776
    %5360 = vmatpush.bf16.msra.mxu0 %v4772
    %5361 = vmatpush.bf16.msra.mxu0 %v4768
    %5362 = vmatpush.bf16.msra.mxu0 %v4764
    %5363 = vmatpush.bf16.msra.mxu0 %v4760
    %5364 = vmatmul.bf16.gmra.mxu0 %v4138
    %v5365 = vpop.f32.mrf.mxu0
    %v5366 = vadd.f32 %v5353, %v5365
    %v5367 = vpop.f32.mrf.mxu0
    %5368 = vdwg.mxu0
    %5369 = vmatpush.bf16.msra.mxu0 %v4820
    %5370 = vmatpush.bf16.msra.mxu0 %v4816
    %5371 = vmatpush.bf16.msra.mxu0 %v4812
    %5372 = vmatpush.bf16.msra.mxu0 %v4808
    %5373 = vmatpush.bf16.msra.mxu0 %v4804
    %5374 = vmatpush.bf16.msra.mxu0 %v4800
    %5375 = vmatpush.bf16.msra.mxu0 %v4796
    %5376 = vmatpush.bf16.msra.mxu0 %v4792
    %5377 = vmatmul.bf16.gmra.mxu0 %v4139
    %v5378 = vpop.f32.mrf.mxu0
    %v5379 = vadd.f32 %v5366, %v5378
    %v5380 = vpop.f32.mrf.mxu0
    %5381 = vdwg.mxu0
    %5382 = vmatpush.bf16.msra.mxu0 %v4852
    %5383 = vmatpush.bf16.msra.mxu0 %v4848
    %5384 = vmatpush.bf16.msra.mxu0 %v4844
    %5385 = vmatpush.bf16.msra.mxu0 %v4840
    %5386 = vmatpush.bf16.msra.mxu0 %v4836
    %5387 = vmatpush.bf16.msra.mxu0 %v4832
    %5388 = vmatpush.bf16.msra.mxu0 %v4828
    %5389 = vmatpush.bf16.msra.mxu0 %v4824
    %5390 = vmatmul.bf16.gmra.mxu0 %v4140
    %v5391 = vpop.f32.mrf.mxu0
    %v5392 = vadd.f32 %v5379, %v5391
    %v5393 = vpop.f32.mrf.mxu0
    %5394 = vdwg.mxu0
    %5395 = vmatpush.bf16.msra.mxu0 %v4884
    %5396 = vmatpush.bf16.msra.mxu0 %v4880
    %5397 = vmatpush.bf16.msra.mxu0 %v4876
    %5398 = vmatpush.bf16.msra.mxu0 %v4872
    %5399 = vmatpush.bf16.msra.mxu0 %v4868
    %5400 = vmatpush.bf16.msra.mxu0 %v4864
    %5401 = vmatpush.bf16.msra.mxu0 %v4860
    %5402 = vmatpush.bf16.msra.mxu0 %v4856
    %5403 = vmatmul.bf16.gmra.mxu0 %v4141
    %v5404 = vpop.f32.mrf.mxu0
    %v5405 = vadd.f32 %v5392, %v5404
    %v5406 = vpop.f32.mrf.mxu0
    %5407 = vdwg.mxu0
    %5408 = vmatpush.bf16.msra.mxu0 %v4916
    %5409 = vmatpush.bf16.msra.mxu0 %v4912
    %5410 = vmatpush.bf16.msra.mxu0 %v4908
    %5411 = vmatpush.bf16.msra.mxu0 %v4904
    %5412 = vmatpush.bf16.msra.mxu0 %v4900
    %5413 = vmatpush.bf16.msra.mxu0 %v4896
    %5414 = vmatpush.bf16.msra.mxu0 %v4892
    %5415 = vmatpush.bf16.msra.mxu0 %v4888
    %5416 = vmatmul.bf16.gmra.mxu0 %v4142
    %v5417 = vpop.f32.mrf.mxu0
    %v5418 = vadd.f32 %v5405, %v5417
    %v5419 = vpop.f32.mrf.mxu0
    %5420 = vdwg.mxu0
    %v5425 = vrot.slane %v5262, 6
    %v5426 = vrot.slane %v5340, 4
    %v5427 = vrot.slane %v5418, 2
    %v5428 = vsel %vm976, %v5184, %v5425
    %v5429 = vsel %vm1024, %v5426, %v5427
    %v5430 = vsel %vm851, %v5428, %v5429
    %5432 = vst [vmem:[#allocation4] sm:$0xff] %v5430
    // Predicated region
    $region38: #{ulip2_forward.1} parent=1 // pred_check
      _
    $region39: #{ulip2_forward.1} parent=1 // pred_check_branch
      %5434 = sbr.rel (0) target = $region41
    $region40: #{ulip2_forward.1} parent=1 // pred_region
      %5436 = vsyncadd [#allocation3], 0
      %s5438 = sshll.u32 [#allocation2], 4
      %s5439 = int_to_ptr.vmem [resolvable:$true] %s5438
      %s5440 = sshll.u32 %s9, 4
      %s5441 = int_to_ptr.hbm [resolvable:$true] %s5440
      %5443 = dma.vmem_to_hbm [thread:$0]  %s5439, 128, %s5441, [#allocation3]
    $region41: #{ulip2_forward.1} parent=1 // pred_fallthru
      _
    // Predicated region
    $region42: #{ulip2_forward.1} parent=1 // pred_check
      _
    $region43: #{ulip2_forward.1} parent=1 // pred_check_branch
      %5445 = sbr.rel (0) target = $region45
    $region44: #{ulip2_forward.1} parent=1 // pred_region
      %5447 = vsyncadd [#allocation5], 0
      %s5449 = sshll.u32 [#allocation4], 4
      %s5450 = int_to_ptr.vmem [resolvable:$true] %s5449
      %s5451 = sshll.u32 %s10, 4
      %s5452 = int_to_ptr.hbm [resolvable:$true] %s5451
      %5454 = dma.vmem_to_hbm [thread:$0]  %s5450, 128, %s5452, [#allocation5]
    $region45: #{ulip2_forward.1} parent=1 // pred_fallthru
      _
    // Predicated region
    $region46: #{ulip2_forward.1} parent=1 // pred_check
      _
    $region47: #{ulip2_forward.1} parent=1 // pred_check_branch
      %5456 = sbr.rel (0) target = $region49
    $region48: #{ulip2_forward.1} parent=1 // pred_region
      %5458 = dma.done [#allocation3], 128
    $region49: #{ulip2_forward.1} parent=1 // pred_fallthru
      _
    // Predicated region
    $region50: #{ulip2_forward.1} parent=1 // pred_check
      _
    $region51: #{ulip2_forward.1} parent=1 // pred_check_branch
      %5460 = sbr.rel (0) target = $region53
    $region52: #{ulip2_forward.1} parent=1 // pred_region
      %5462 = dma.done [#allocation5], 128
    $region53: #{ulip2_forward.1} parent=1 // pred_fallthru
      _
    %5463 = vsyncpa [#allocation3], 1
    %5464 = vsyncpa [#allocation5], 1

</llo_original>
